<compile_context>
chip_gen: v6e
topology: v6e:2x2x1
jax: 0.10.0
libtpu: 0.0.40
codegen_flags: <defaults>
</compile_context>

<pallas_src>
import jax
import jax.numpy as jnp
from jax import lax
from jax.experimental import pallas as pl
from jax.experimental.pallas import tpu as pltpu


def embed_kernel(ids_ref, emb_ref, out_ref, acc_ref):
    """ids_ref: VMEM (tbp, P)   int32 token ids for this token tile
       emb_ref: VMEM (Vc, D)    one vocab chunk of the embedding table
       out_ref: VMEM (tbp, P*D) lane-dense packed output tile
       acc_ref: VMEM (tbp, P*D) f32 accumulator, resident across the vocab axis"""
    k = pl.program_id(1)
    nk = pl.num_programs(1)
    tbp, P = ids_ref.shape
    Vc, D = emb_ref.shape

    @pl.when(k == 0)
    def _init():
        acc_ref[...] = jnp.zeros_like(acc_ref)

    emb = emb_ref[...]                                    # (Vc, D)
    ids = ids_ref[...] - k * Vc                           # chunk-local ids
    col = lax.broadcasted_iota(jnp.int32, (tbp, Vc), 1)   # hoisted, reused by all P slots

    parts = []
    for p in range(P):                                    # P is small & static
        onehot = (col == ids[:, p:p + 1]).astype(emb.dtype)       # (tbp, Vc)
        parts.append(
            jnp.dot(onehot, emb,
                    preferred_element_type=jnp.float32,
                    precision=lax.Precision.HIGHEST))             # (tbp, D)
    update = parts[0] if P == 1 else jnp.concatenate(parts, axis=-1)
    acc_ref[...] += update

    @pl.when(k == nk - 1)
    def _finalize():
        out_ref[...] = acc_ref[...].astype(out_ref.dtype)


def _vmem_budget_bytes():
    """Per-generation VMEM budget: capacity minus ~16 MiB headroom."""
    try:
        info = pltpu.get_tpu_info()
        cap = getattr(info, "vmem_capacity_bytes", None)
        if cap is None:
            cap = getattr(info, "vmem_size_bytes", None)
        if cap:
            budget = int(cap) - (16 << 20)
            return int(max(32 << 20, min(budget, 112 << 20)))
    except Exception:
        pass
    return 48 << 20   # conservative fallback (v7x-sized)


def token_embedding(ids, emb_table, *, tb=None, vc=None):
    """ids: (B, S) int token ids; emb_table: (V, D) -> (B, S, D)."""
    B, S = ids.shape
    V, D = emb_table.shape
    N = B * S
    itemsize = jnp.dtype(emb_table.dtype).itemsize

    # Lane packing: P consecutive tokens per 128-lane output row when D < 128.
    P = (128 // D) if (D < 128 and 128 % D == 0) else 1
    row_tokens = 8 * P                    # tokens per (8 sublane, 128 lane) output tile

    budget = _vmem_budget_bytes()
    n_rounded = pl.cdiv(N, row_tokens) * row_tokens

    tb_target = 2048 if tb is None else max(row_tokens, int(tb))
    vc_target = 1024 if vc is None else max(8, int(vc))

    def plan(tb_t, vc_t):
        # Token tile: big (amortize per-step overhead), whole output tiles, and
        # keep the parallel grid axis >= 2 steps when possible (v7x megacore).
        if n_rounded >= 2 * row_tokens:
            cap = max(row_tokens, (n_rounded // 2) // row_tokens * row_tokens)
        else:
            cap = n_rounded
        tb_ = max(row_tokens, min((tb_t // row_tokens) * row_tokens, cap))
        n_pad_ = pl.cdiv(n_rounded, tb_) * tb_
        # Vocab chunk: full table if it is small, else multiples of 8 rows.
        if V <= vc_t:
            vc_, v_pad_ = V, V
        else:
            vc_ = max(8, (vc_t // 8) * 8)
            v_pad_ = pl.cdiv(V, vc_) * vc_
        tbp_ = tb_ // P
        # Conservative VMEM accounting (2x-buffered table even if we request a
        # single buffer, one-hot + iota temporaries, accumulator scratch).
        need = (2 * vc_ * D * itemsize          # table chunk (double buffer)
                + 2 * tbp_ * P * D * itemsize   # double-buffered out tile
                + tbp_ * P * D * 4              # f32 accumulator scratch
                + 2 * tbp_ * P * 4              # double-buffered id tile
                + 3 * tbp_ * vc_ * 4)           # iota / mask / one-hot temporaries
        return tb_, n_pad_, vc_, v_pad_, tbp_, need

    tb_t, vc_t = tb_target, vc_target
    tb_, n_pad, vc_, v_pad, tbp, need = plan(tb_t, vc_t)
    while need + (4 << 20) > budget and (vc_t > 256 or tb_t > row_tokens):
        if vc_t > 256:
            vc_t //= 2
        else:
            tb_t = max(row_tokens, tb_t // 2)
        tb_, n_pad, vc_, v_pad, tbp, need = plan(tb_t, vc_t)
    assert need + (4 << 20) <= budget, (
        "embedding tile plan does not fit the per-generation VMEM budget")

    nk = v_pad // vc_

    # Pad tokens to a whole number of tiles (pad ids are 0; rows sliced off below).
    flat_ids = ids.reshape(N).astype(jnp.int32)
    if n_pad != N:
        flat_ids = jnp.zeros((n_pad,), jnp.int32).at[:N].set(flat_ids)
    ids2 = flat_ids.reshape(n_pad // P, P)            # P tokens per packed row

    # Pad the vocab to a whole number of chunks (zero rows; never matched by valid ids).
    table_p = emb_table
    if v_pad != V:
        table_p = jnp.zeros((v_pad, D), emb_table.dtype).at[:V, :].set(emb_table)

    def build(single_buffer_table):
        if single_buffer_table:
            table_spec = pl.BlockSpec((vc_, D), lambda i, k: (k, 0),
                                      pipeline_mode=pl.Buffered(1))
        else:
            table_spec = pl.BlockSpec((vc_, D), lambda i, k: (k, 0))
        return pl.pallas_call(
            embed_kernel,
            out_shape=jax.ShapeDtypeStruct((n_pad // P, P * D), emb_table.dtype),
            grid_spec=pltpu.PrefetchScalarGridSpec(
                num_scalar_prefetch=0,
                grid=(n_pad // tb_, nk),
                in_specs=[
                    pl.BlockSpec((tbp, P), lambda i, k: (i, 0)),   # token ids (tile-resident over k)
                    table_spec,                                    # streamed vocab chunk
                ],
                out_specs=pl.BlockSpec((tbp, P * D), lambda i, k: (i, 0)),
                scratch_shapes=[pltpu.VMEM((tbp, P * D), jnp.float32)],
            ),
            compiler_params=pltpu.CompilerParams(
                dimension_semantics=("parallel", "arbitrary"),
                vmem_limit_bytes=int(budget),
            ),
        )

    try:
        # Single-buffer the table when its block index is constant across the grid.
        out_packed = build(single_buffer_table=(nk == 1))(ids2, table_p)
    except Exception:
        if nk != 1:
            raise
        # Fallback: this jax version rejected pl.Buffered(1); use default pipelining.
        out_packed = build(single_buffer_table=False)(ids2, table_p)

    # Free row-major unpack: (n_pad/P, P*D) -> (n_pad, D) -> (B, S, D).
    return out_packed.reshape(n_pad, D)[:N].reshape(B, S, D)


if __name__ == "__main__":
    vocab_size = 64
    d_model = 32
    batch, seq = 2, 8

    key = jax.random.PRNGKey(0)
    k_emb, k_ids = jax.random.split(key)

    # Deterministic init (nn.Embedding weight ~ N(0, 1) by default).
    emb_table = jax.random.normal(k_emb, (vocab_size, d_model), dtype=jnp.float32)
    x = jax.random.randint(k_ids, (batch, seq), 0, vocab_size, dtype=jnp.int32)

    out = jax.block_until_ready(token_embedding(x, emb_table))

    # Reference: plain JAX gather (== torch nn.Embedding forward).
    ref = jnp.take(emb_table, x, axis=0)
    assert out.shape == (batch, seq, d_model)
    assert jnp.allclose(out, ref, rtol=1e-4, atol=1e-4), \
        "mismatch vs reference embedding lookup"

    print("KERNEL_OK")
</pallas_src>

<mosaic_0001>
module attributes {stable_mosaic.version = 11 : i64} {
  func.func @embed_kernel(%arg0: i32, %arg1: i32, %arg2: memref<8x4xi32, #tpu.memory_space<vmem>>, %arg3: memref<64x32xf32, #tpu.memory_space<vmem>>, %arg4: memref<8x128xf32, #tpu.memory_space<vmem>>, %arg5: memref<8x128xf32, #tpu.memory_space<vmem>>) attributes {dimension_semantics = [#tpu.dimension_semantics<parallel>, #tpu.dimension_semantics<arbitrary>], iteration_bounds = array<i64: 1, 1>, scalar_prefetch = 0 : i64, scratch_operands = 1 : i64, tpu.core_type = #tpu.core_type<tc>, window_params = [{transform_indices = @transform_0, window_bounds = array<i64: 8, 4>}, {pipeline_mode = #tpu.pipeline_mode<synchronous>, transform_indices = @transform_1, window_bounds = array<i64: 64, 32>}, {transform_indices = @transform_2, window_bounds = array<i64: 8, 128>}]} {
    %c0_i32 = arith.constant 0 : i32
    %0 = arith.cmpi eq, %arg1, %c0_i32 : i32
    %1 = arith.extui %0 : i1 to i32
    %c0_i32_0 = arith.constant 0 : i32
    %2 = arith.cmpi ne, %1, %c0_i32_0 : i32
    scf.if %2 {
      %cst_13 = arith.constant 0.000000e+00 : f32
      %40 = vector.broadcast %cst_13 : f32 to vector<8x128xf32>
      %c0_14 = arith.constant 0 : index
      %c0_15 = arith.constant 0 : index
      %41 = vector.load %arg5[%c0_14, %c0_15] : memref<8x128xf32, #tpu.memory_space<vmem>>, vector<8x128xf32>
      tpu.vector_store %arg5[%c0_14, %c0_15], %40 {strides = array<i32>} : memref<8x128xf32, #tpu.memory_space<vmem>>, vector<8x128xf32>,
    } else {
    }
    %c0 = arith.constant 0 : index
    %c0_1 = arith.constant 0 : index
    %3 = vector.load %arg3[%c0, %c0_1] : memref<64x32xf32, #tpu.memory_space<vmem>>, vector<64x32xf32>
    %c0_2 = arith.constant 0 : index
    %c0_3 = arith.constant 0 : index
    %4 = vector.load %arg2[%c0_2, %c0_3] : memref<8x4xi32, #tpu.memory_space<vmem>>, vector<8x4xi32>
    %c64_i32 = arith.constant 64 : i32
    %5 = arith.muli %arg1, %c64_i32 : i32
    %6 = vector.broadcast %5 : i32 to vector<8x4xi32>
    %7 = arith.subi %4, %6 : vector<8x4xi32>
    %8 = tpu.iota {dimensions = array<i32: 1>} : vector<8x64xi32>
    %9 = vector.extract_strided_slice %7 {offsets = [0, 0], sizes = [8, 1], strides = [1, 1]} : vector<8x4xi32> to vector<8x1xi32>
    %10 = vector.broadcast %9 : vector<8x1xi32> to vector<8x64xi32>
    %11 = arith.cmpi eq, %8, %10 : vector<8x64xi32>
    %12 = arith.extui %11 : vector<8x64xi1> to vector<8x64xi32>
    %13 = arith.sitofp %12 : vector<8x64xi32> to vector<8x64xf32>
    %cst = arith.constant dense<0.000000e+00> : vector<8x32xf32>
    %14 = tpu.matmul %13, %3, %cst {dimension_numbers = #tpu.dot_dimension_numbers<[1], [0], [0], [1], [0, 0, 1, 1], [], []>, precision = #tpu.contract_precision<fp32>} : vector<8x64xf32>, vector<64x32xf32>, vector<8x32xf32> -> vector<8x32xf32>
    %15 = vector.extract_strided_slice %7 {offsets = [0, 1], sizes = [8, 1], strides = [1, 1]} : vector<8x4xi32> to vector<8x1xi32>
    %16 = vector.broadcast %15 : vector<8x1xi32> to vector<8x64xi32>
    %17 = arith.cmpi eq, %8, %16 : vector<8x64xi32>
    %18 = arith.extui %17 : vector<8x64xi1> to vector<8x64xi32>
    %19 = arith.sitofp %18 : vector<8x64xi32> to vector<8x64xf32>
    %cst_4 = arith.constant dense<0.000000e+00> : vector<8x32xf32>
    %20 = tpu.matmul %19, %3, %cst_4 {dimension_numbers = #tpu.dot_dimension_numbers<[1], [0], [0], [1], [0, 0, 1, 1], [], []>, precision = #tpu.contract_precision<fp32>} : vector<8x64xf32>, vector<64x32xf32>, vector<8x32xf32> -> vector<8x32xf32>
    %21 = vector.extract_strided_slice %7 {offsets = [0, 2], sizes = [8, 1], strides = [1, 1]} : vector<8x4xi32> to vector<8x1xi32>
    %22 = vector.broadcast %21 : vector<8x1xi32> to vector<8x64xi32>
    %23 = arith.cmpi eq, %8, %22 : vector<8x64xi32>
    %24 = arith.extui %23 : vector<8x64xi1> to vector<8x64xi32>
    %25 = arith.sitofp %24 : vector<8x64xi32> to vector<8x64xf32>
    %cst_5 = arith.constant dense<0.000000e+00> : vector<8x32xf32>
    %26 = tpu.matmul %25, %3, %cst_5 {dimension_numbers = #tpu.dot_dimension_numbers<[1], [0], [0], [1], [0, 0, 1, 1], [], []>, precision = #tpu.contract_precision<fp32>} : vector<8x64xf32>, vector<64x32xf32>, vector<8x32xf32> -> vector<8x32xf32>
    %27 = vector.extract_strided_slice %7 {offsets = [0, 3], sizes = [8, 1], strides = [1, 1]} : vector<8x4xi32> to vector<8x1xi32>
    %28 = vector.broadcast %27 : vector<8x1xi32> to vector<8x64xi32>
    %29 = arith.cmpi eq, %8, %28 : vector<8x64xi32>
    %30 = arith.extui %29 : vector<8x64xi1> to vector<8x64xi32>
    %31 = arith.sitofp %30 : vector<8x64xi32> to vector<8x64xf32>
    %cst_6 = arith.constant dense<0.000000e+00> : vector<8x32xf32>
    %32 = tpu.matmul %31, %3, %cst_6 {dimension_numbers = #tpu.dot_dimension_numbers<[1], [0], [0], [1], [0, 0, 1, 1], [], []>, precision = #tpu.contract_precision<fp32>} : vector<8x64xf32>, vector<64x32xf32>, vector<8x32xf32> -> vector<8x32xf32>
    %33 = tpu.concatenate %14, %20, %26, %32 in 1 : vector<8x32xf32>, vector<8x32xf32>, vector<8x32xf32>, vector<8x32xf32> -> vector<8x128xf32>
    %c0_7 = arith.constant 0 : index
    %c0_8 = arith.constant 0 : index
    %34 = vector.load %arg5[%c0_7, %c0_8] : memref<8x128xf32, #tpu.memory_space<vmem>>, vector<8x128xf32>
    %35 = arith.addf %34, %33 : vector<8x128xf32>
    %c0_9 = arith.constant 0 : index
    %c0_10 = arith.constant 0 : index
    %36 = vector.load %arg5[%c0_9, %c0_10] : memref<8x128xf32, #tpu.memory_space<vmem>>, vector<8x128xf32>
    tpu.vector_store %arg5[%c0_9, %c0_10], %35 {strides = array<i32>} : memref<8x128xf32, #tpu.memory_space<vmem>>, vector<8x128xf32>,
    %c0_i32_11 = arith.constant 0 : i32
    %37 = arith.cmpi eq, %arg1, %c0_i32_11 : i32
    %38 = arith.extui %37 : i1 to i32
    %c0_i32_12 = arith.constant 0 : i32
    %39 = arith.cmpi ne, %38, %c0_i32_12 : i32
    scf.if %39 {
      %c0_13 = arith.constant 0 : index
      %c0_14 = arith.constant 0 : index
      %40 = vector.load %arg5[%c0_13, %c0_14] : memref<8x128xf32, #tpu.memory_space<vmem>>, vector<8x128xf32>
      %c0_15 = arith.constant 0 : index
      %c0_16 = arith.constant 0 : index
      %41 = vector.load %arg4[%c0_15, %c0_16] : memref<8x128xf32, #tpu.memory_space<vmem>>, vector<8x128xf32>
      tpu.vector_store %arg4[%c0_15, %c0_16], %40 {strides = array<i32>} : memref<8x128xf32, #tpu.memory_space<vmem>>, vector<8x128xf32>,
    } else {
    }
    return
  }
  func.func @transform_0(%arg0: i32, %arg1: i32) -> (i32, i32) {
    %c0_i32 = arith.constant 0 : i32
    %c0_i32_0 = arith.constant 0 : i32
    return %arg0, %c0_i32 : i32, i32
  }
  func.func @transform_1(%arg0: i32, %arg1: i32) -> (i32, i32) {
    %c0_i32 = arith.constant 0 : i32
    %c0_i32_0 = arith.constant 0 : i32
    return %arg1, %c0_i32 : i32, i32
  }
  func.func @transform_2(%arg0: i32, %arg1: i32) -> (i32, i32) {
    %c0_i32 = arith.constant 0 : i32
    %c0_i32_0 = arith.constant 0 : i32
    return %arg0, %c0_i32 : i32, i32
  }
}

module attributes {stable_mosaic.version = 11 : i64} {
  func.func @embed_kernel(%arg0: i32, %arg1: i32, %arg2: memref<8x4xi32, #tpu.memory_space<vmem>>, %arg3: memref<64x32xf32, #tpu.memory_space<vmem>>, %arg4: memref<8x128xf32, #tpu.memory_space<vmem>>, %arg5: memref<8x128xf32, #tpu.memory_space<vmem>>) attributes {dimension_semantics = [#tpu.dimension_semantics<parallel>, #tpu.dimension_semantics<arbitrary>], iteration_bounds = array<i64: 1, 1>, scalar_prefetch = 0 : i64, scratch_operands = 1 : i64, tpu.core_type = #tpu.core_type<tc>, window_params = [{transform_indices = @transform_0, window_bounds = array<i64: 8, 4>}, {transform_indices = @transform_1, window_bounds = array<i64: 64, 32>}, {transform_indices = @transform_2, window_bounds = array<i64: 8, 128>}]} {
    %c0_i32 = arith.constant 0 : i32
    %0 = arith.cmpi eq, %arg1, %c0_i32 : i32
    %1 = arith.extui %0 : i1 to i32
    %c0_i32_0 = arith.constant 0 : i32
    %2 = arith.cmpi ne, %1, %c0_i32_0 : i32
    scf.if %2 {
      %cst_13 = arith.constant 0.000000e+00 : f32
      %40 = vector.broadcast %cst_13 : f32 to vector<8x128xf32>
      %c0_14 = arith.constant 0 : index
      %c0_15 = arith.constant 0 : index
      %41 = vector.load %arg5[%c0_14, %c0_15] : memref<8x128xf32, #tpu.memory_space<vmem>>, vector<8x128xf32>
      tpu.vector_store %arg5[%c0_14, %c0_15], %40 {strides = array<i32>} : memref<8x128xf32, #tpu.memory_space<vmem>>, vector<8x128xf32>,
    } else {
    }
    %c0 = arith.constant 0 : index
    %c0_1 = arith.constant 0 : index
    %3 = vector.load %arg3[%c0, %c0_1] : memref<64x32xf32, #tpu.memory_space<vmem>>, vector<64x32xf32>
    %c0_2 = arith.constant 0 : index
    %c0_3 = arith.constant 0 : index
    %4 = vector.load %arg2[%c0_2, %c0_3] : memref<8x4xi32, #tpu.memory_space<vmem>>, vector<8x4xi32>
    %c64_i32 = arith.constant 64 : i32
    %5 = arith.muli %arg1, %c64_i32 : i32
    %6 = vector.broadcast %5 : i32 to vector<8x4xi32>
    %7 = arith.subi %4, %6 : vector<8x4xi32>
    %8 = tpu.iota {dimensions = array<i32: 1>} : vector<8x64xi32>
    %9 = vector.extract_strided_slice %7 {offsets = [0, 0], sizes = [8, 1], strides = [1, 1]} : vector<8x4xi32> to vector<8x1xi32>
    %10 = vector.broadcast %9 : vector<8x1xi32> to vector<8x64xi32>
    %11 = arith.cmpi eq, %8, %10 : vector<8x64xi32>
    %12 = arith.extui %11 : vector<8x64xi1> to vector<8x64xi32>
    %13 = arith.sitofp %12 : vector<8x64xi32> to vector<8x64xf32>
    %cst = arith.constant dense<0.000000e+00> : vector<8x32xf32>
    %14 = tpu.matmul %13, %3, %cst {dimension_numbers = #tpu.dot_dimension_numbers<[1], [0], [0], [1], [0, 0, 1, 1], [], []>, precision = #tpu.contract_precision<fp32>} : vector<8x64xf32>, vector<64x32xf32>, vector<8x32xf32> -> vector<8x32xf32>
    %15 = vector.extract_strided_slice %7 {offsets = [0, 1], sizes = [8, 1], strides = [1, 1]} : vector<8x4xi32> to vector<8x1xi32>
    %16 = vector.broadcast %15 : vector<8x1xi32> to vector<8x64xi32>
    %17 = arith.cmpi eq, %8, %16 : vector<8x64xi32>
    %18 = arith.extui %17 : vector<8x64xi1> to vector<8x64xi32>
    %19 = arith.sitofp %18 : vector<8x64xi32> to vector<8x64xf32>
    %cst_4 = arith.constant dense<0.000000e+00> : vector<8x32xf32>
    %20 = tpu.matmul %19, %3, %cst_4 {dimension_numbers = #tpu.dot_dimension_numbers<[1], [0], [0], [1], [0, 0, 1, 1], [], []>, precision = #tpu.contract_precision<fp32>} : vector<8x64xf32>, vector<64x32xf32>, vector<8x32xf32> -> vector<8x32xf32>
    %21 = vector.extract_strided_slice %7 {offsets = [0, 2], sizes = [8, 1], strides = [1, 1]} : vector<8x4xi32> to vector<8x1xi32>
    %22 = vector.broadcast %21 : vector<8x1xi32> to vector<8x64xi32>
    %23 = arith.cmpi eq, %8, %22 : vector<8x64xi32>
    %24 = arith.extui %23 : vector<8x64xi1> to vector<8x64xi32>
    %25 = arith.sitofp %24 : vector<8x64xi32> to vector<8x64xf32>
    %cst_5 = arith.constant dense<0.000000e+00> : vector<8x32xf32>
    %26 = tpu.matmul %25, %3, %cst_5 {dimension_numbers = #tpu.dot_dimension_numbers<[1], [0], [0], [1], [0, 0, 1, 1], [], []>, precision = #tpu.contract_precision<fp32>} : vector<8x64xf32>, vector<64x32xf32>, vector<8x32xf32> -> vector<8x32xf32>
    %27 = vector.extract_strided_slice %7 {offsets = [0, 3], sizes = [8, 1], strides = [1, 1]} : vector<8x4xi32> to vector<8x1xi32>
    %28 = vector.broadcast %27 : vector<8x1xi32> to vector<8x64xi32>
    %29 = arith.cmpi eq, %8, %28 : vector<8x64xi32>
    %30 = arith.extui %29 : vector<8x64xi1> to vector<8x64xi32>
    %31 = arith.sitofp %30 : vector<8x64xi32> to vector<8x64xf32>
    %cst_6 = arith.constant dense<0.000000e+00> : vector<8x32xf32>
    %32 = tpu.matmul %31, %3, %cst_6 {dimension_numbers = #tpu.dot_dimension_numbers<[1], [0], [0], [1], [0, 0, 1, 1], [], []>, precision = #tpu.contract_precision<fp32>} : vector<8x64xf32>, vector<64x32xf32>, vector<8x32xf32> -> vector<8x32xf32>
    %33 = tpu.concatenate %14, %20, %26, %32 in 1 : vector<8x32xf32>, vector<8x32xf32>, vector<8x32xf32>, vector<8x32xf32> -> vector<8x128xf32>
    %c0_7 = arith.constant 0 : index
    %c0_8 = arith.constant 0 : index
    %34 = vector.load %arg5[%c0_7, %c0_8] : memref<8x128xf32, #tpu.memory_space<vmem>>, vector<8x128xf32>
    %35 = arith.addf %34, %33 : vector<8x128xf32>
    %c0_9 = arith.constant 0 : index
    %c0_10 = arith.constant 0 : index
    %36 = vector.load %arg5[%c0_9, %c0_10] : memref<8x128xf32, #tpu.memory_space<vmem>>, vector<8x128xf32>
    tpu.vector_store %arg5[%c0_9, %c0_10], %35 {strides = array<i32>} : memref<8x128xf32, #tpu.memory_space<vmem>>, vector<8x128xf32>,
    %c0_i32_11 = arith.constant 0 : i32
    %37 = arith.cmpi eq, %arg1, %c0_i32_11 : i32
    %38 = arith.extui %37 : i1 to i32
    %c0_i32_12 = arith.constant 0 : i32
    %39 = arith.cmpi ne, %38, %c0_i32_12 : i32
    scf.if %39 {
      %c0_13 = arith.constant 0 : index
      %c0_14 = arith.constant 0 : index
      %40 = vector.load %arg5[%c0_13, %c0_14] : memref<8x128xf32, #tpu.memory_space<vmem>>, vector<8x128xf32>
      %c0_15 = arith.constant 0 : index
      %c0_16 = arith.constant 0 : index
      %41 = vector.load %arg4[%c0_15, %c0_16] : memref<8x128xf32, #tpu.memory_space<vmem>>, vector<8x128xf32>
      tpu.vector_store %arg4[%c0_15, %c0_16], %40 {strides = array<i32>} : memref<8x128xf32, #tpu.memory_space<vmem>>, vector<8x128xf32>,
    } else {
    }
    return
  }
  func.func @transform_0(%arg0: i32, %arg1: i32) -> (i32, i32) {
    %c0_i32 = arith.constant 0 : i32
    %c0_i32_0 = arith.constant 0 : i32
    return %arg0, %c0_i32 : i32, i32
  }
  func.func @transform_1(%arg0: i32, %arg1: i32) -> (i32, i32) {
    %c0_i32 = arith.constant 0 : i32
    %c0_i32_0 = arith.constant 0 : i32
    return %arg1, %c0_i32 : i32, i32
  }
  func.func @transform_2(%arg0: i32, %arg1: i32) -> (i32, i32) {
    %c0_i32 = arith.constant 0 : i32
    %c0_i32_0 = arith.constant 0 : i32
    return %arg0, %c0_i32 : i32, i32
  }
}

</mosaic_0001>

<llo_original>
// kernel: tpu_custom_call.1
$region0: #{tpu_custom_call.1}
  #allocation0 [shape = 'u32[]', space=smem, size = 0x4, offset = 0x4, fixed_abs, tag = 'smem constant byte address 0x4 - core index']
  #allocation1 [shape = 'u32[144,128]{1,0:T(1,128)}', space=vmem, size = 0x12000, scoped, tag = 'internal scratch']
  #allocation2 [shape = 'f32[8,128]{1,0:T(8,128)}', space=vmem, size = 0x1000, scoped, tag = 'scratch operand']
  %s0 = inlined_call_operand.vmem [shape: s32[8,4], index: 0, kind: input, shape index: {}]
  %s1 = inlined_call_operand.vmem [shape: f32[64,32], index: 1, kind: input, shape index: {}]
  %s2 = inlined_call_operand.hbm [shape: f32[8,128], index: 2, kind: output, shape index: {}]
  %s3 = sld [smem:[#allocation0]]
  $region26: #{tpu_custom_call.1} parent=0
    _
  %s5 = ssub.s32 1, %s3
  %s6 = scalar_select 0, %s5, %s3
  $region1: #{tpu_custom_call.1} parent=0
    #allocation3 [shape = 'u8[4096]{0}', space=vmem, size = 0x1000, scoped, tag = 'output window, operand 0, single buffered']
    #allocation4 [shape = 's32[1]{0}', space=sflag, size = 0x4, scoped, tag = 'scoped memory for tpu_custom_call.1']
    %7 = vsyncpa [#allocation4], 0
    // Predicated region
    $region2: #{tpu_custom_call.1} parent=1 // pred_check
      _
    $region3: #{tpu_custom_call.1} parent=1 // pred_check_branch
      %9 = sbr.rel (0) target = $region5
    $region4: #{tpu_custom_call.1} parent=1 // pred_region
      _
    $region5: #{tpu_custom_call.1} parent=1 // pred_fallthru
      _
    // Predicated region
    $region6: #{tpu_custom_call.1} parent=1 // pred_check
      _
    $region7: #{tpu_custom_call.1} parent=1 // pred_check_branch
      %11 = sbr.rel (0) target = $region9
    $region8: #{tpu_custom_call.1} parent=1 // pred_region
      _
    $region9: #{tpu_custom_call.1} parent=1 // pred_fallthru
      _
    %p12 = scmp.eq.s32.totalorder 0, 0
    // Predicated region
    $region10: #{tpu_custom_call.1} parent=1 // pred_check
      %p13 = pneg %p12
    $region11: #{tpu_custom_call.1} parent=1 // pred_check_branch
      %15 = sbr.rel (%p13) target = $region13
    $region12: #{tpu_custom_call.1} parent=1 // pred_region
      %16 = vst [vmem:[#allocation2] sm:$0xff] 0.0
    $region13: #{tpu_custom_call.1} parent=1 // pred_fallthru
      _
    %v17 = vld [vmem:[%s1] sm:$0xff]
    %v18 = vld [vmem:[%s1 + $0x8] sm:$0xff]
    %v19 = vld [vmem:[%s1 + $0x10] sm:$0xff]
    %v20 = vld [vmem:[%s1 + $0x18] sm:$0xff]
    %v21 = vld [vmem:[%s1 + $0x20] sm:$0xff]
    %v22 = vld [vmem:[%s1 + $0x28] sm:$0xff]
    %v23 = vld [vmem:[%s1 + $0x30] sm:$0xff]
    %v24 = vld [vmem:[%s1 + $0x38] sm:$0xff]
    %v25 = vld [vmem:[%s0] sm:$0xff]
    %s26 = smul.u32 0, 64
    %v27 = vstv %s26
    %v28 = vsub.s32 %v25, %v27
    %v29 = vlaneseq
    %v30 = vand.u32 %v29, 127
    %31 = vset.pattern.permute.xlu0 0
    %32 = vperm.xlu0 %31, %v28
    %v33 = vpop.permute.xlu0 %32
    %vm34 = vcmp.eq.s32.totalorder %v30, %v33
    %v35 = vsel %vm34, 1, 0
    %v36 = vcvt.s32.f32 %v35
    %vm37 = vcmask 523264
    %v39 = vsel %vm37, %v36, 0
    %41 = vmatprep.subr.mxu0 0.0
    %42 = vmatpush1.msra.mxu0 0.0
    %43 = vmatprep.subr.mxu0 0.0
    %44 = vmatpush1.msra.mxu0 0.0
    %45 = vmatprep.subr.mxu0 0.0
    %46 = vmatpush1.msra.mxu0 0.0
    %47 = vmatprep.subr.mxu0 0.0
    %48 = vmatpush1.msra.mxu0 0.0
    %49 = vmatprep.subr.mxu0 0.0
    %50 = vmatpush1.msra.mxu0 0.0
    %51 = vmatprep.subr.mxu0 0.0
    %52 = vmatpush1.msra.mxu0 0.0
    %53 = vmatprep.subr.mxu0 0.0
    %54 = vmatpush1.msra.mxu0 0.0
    %55 = vmatprep.subr.mxu0 0.0
    %56 = vmatpush1.msra.mxu0 0.0
    %57 = vmatprep.subr.mxu0 0.0
    %v58 = vand.u32 %v24, 4294901760
    %59 = vmatpush1.msra.mxu0 %v58
    %60 = vmatprep.subr.mxu0 0.0
    %v61 = vand.u32 %v23, 4294901760
    %62 = vmatpush1.msra.mxu0 %v61
    %63 = vmatprep.subr.mxu0 0.0
    %v64 = vand.u32 %v22, 4294901760
    %65 = vmatpush1.msra.mxu0 %v64
    %66 = vmatprep.subr.mxu0 0.0
    %v67 = vand.u32 %v21, 4294901760
    %68 = vmatpush1.msra.mxu0 %v67
    %69 = vmatprep.subr.mxu0 0.0
    %v70 = vand.u32 %v20, 4294901760
    %71 = vmatpush1.msra.mxu0 %v70
    %72 = vmatprep.subr.mxu0 0.0
    %v73 = vand.u32 %v19, 4294901760
    %74 = vmatpush1.msra.mxu0 %v73
    %75 = vmatprep.subr.mxu0 0.0
    %v76 = vand.u32 %v18, 4294901760
    %77 = vmatpush1.msra.mxu0 %v76
    %78 = vmatprep.subr.mxu0 0.0
    %v79 = vand.u32 %v17, 4294901760
    %80 = vmatpush1.msra.mxu0 %v79
    %81 = vmatprep.subr.mxu0 0.0
    %82 = vmatpush2.msra.mxu0 0.0
    %83 = vmatprep.subr.mxu0 0.0
    %84 = vmatpush2.msra.mxu0 0.0
    %85 = vmatprep.subr.mxu0 0.0
    %86 = vmatpush2.msra.mxu0 0.0
    %87 = vmatprep.subr.mxu0 0.0
    %88 = vmatpush2.msra.mxu0 0.0
    %89 = vmatprep.subr.mxu0 0.0
    %90 = vmatpush2.msra.mxu0 0.0
    %91 = vmatprep.subr.mxu0 0.0
    %92 = vmatpush2.msra.mxu0 0.0
    %93 = vmatprep.subr.mxu0 0.0
    %94 = vmatpush2.msra.mxu0 0.0
    %95 = vmatprep.subr.mxu0 0.0
    %96 = vmatpush2.msra.mxu0 0.0
    %97 = vmatprep.subr.mxu0 0.0
    %98 = vmatpush2.msra.mxu0 0.0
    %99 = vmatprep.subr.mxu0 0.0
    %100 = vmatpush2.msra.mxu0 0.0
    %101 = vmatprep.subr.mxu0 0.0
    %102 = vmatpush2.msra.mxu0 0.0
    %103 = vmatprep.subr.mxu0 0.0
    %104 = vmatpush2.msra.mxu0 0.0
    %105 = vmatprep.subr.mxu0 0.0
    %106 = vmatpush2.msra.mxu0 0.0
    %107 = vmatprep.subr.mxu0 0.0
    %108 = vmatpush2.msra.mxu0 0.0
    %109 = vmatprep.subr.mxu0 0.0
    %110 = vmatpush2.msra.mxu0 0.0
    %111 = vmatprep.subr.mxu0 0.0
    %112 = vmatpush2.msra.mxu0 0.0
    %113 = vmatprep.mubr.f32.mxu0 0.0
    %v114 = vand.u32 %v39, 4294901760
    %v115 = vsub.f32 %v39, %v114
    %v116 = vand.u32 %v115, 4294901760
    %v117 = vsub.f32 %v115, %v116
    %v118 = vand.u32 %v117, 4294901760
    %119 = vmatmul.mubr.f32.gmra.mxu0 %v118
    %v120 = vpop.f32.mrf.mxu0
    %v121 = vadd.f32 0.0, %v120
    %v122 = vpop.f32.mrf.mxu0
    %123 = vdwg.mxu0
    %124 = vmatprep.subr.mxu0 0.0
    %125 = vmatpush1.msra.mxu0 0.0
    %126 = vmatprep.subr.mxu0 0.0
    %127 = vmatpush1.msra.mxu0 0.0
    %128 = vmatprep.subr.mxu0 0.0
    %129 = vmatpush1.msra.mxu0 0.0
    %130 = vmatprep.subr.mxu0 0.0
    %131 = vmatpush1.msra.mxu0 0.0
    %132 = vmatprep.subr.mxu0 0.0
    %133 = vmatpush1.msra.mxu0 0.0
    %134 = vmatprep.subr.mxu0 0.0
    %135 = vmatpush1.msra.mxu0 0.0
    %136 = vmatprep.subr.mxu0 0.0
    %137 = vmatpush1.msra.mxu0 0.0
    %138 = vmatprep.subr.mxu0 0.0
    %139 = vmatpush1.msra.mxu0 0.0
    %140 = vmatprep.subr.mxu0 0.0
    %v141 = vand.u32 %v24, 4294901760
    %v142 = vsub.f32 %v24, %v141
    %v143 = vand.u32 %v142, 4294901760
    %v144 = vsub.f32 %v142, %v143
    %v145 = vand.u32 %v144, 4294901760
    %146 = vmatpush1.msra.mxu0 %v145
    %147 = vmatprep.subr.mxu0 0.0
    %v148 = vand.u32 %v23, 4294901760
    %v149 = vsub.f32 %v23, %v148
    %v150 = vand.u32 %v149, 4294901760
    %v151 = vsub.f32 %v149, %v150
    %v152 = vand.u32 %v151, 4294901760
    %153 = vmatpush1.msra.mxu0 %v152
    %154 = vmatprep.subr.mxu0 0.0
    %v155 = vand.u32 %v22, 4294901760
    %v156 = vsub.f32 %v22, %v155
    %v157 = vand.u32 %v156, 4294901760
    %v158 = vsub.f32 %v156, %v157
    %v159 = vand.u32 %v158, 4294901760
    %160 = vmatpush1.msra.mxu0 %v159
    %161 = vmatprep.subr.mxu0 0.0
    %v162 = vand.u32 %v21, 4294901760
    %v163 = vsub.f32 %v21, %v162
    %v164 = vand.u32 %v163, 4294901760
    %v165 = vsub.f32 %v163, %v164
    %v166 = vand.u32 %v165, 4294901760
    %167 = vmatpush1.msra.mxu0 %v166
    %168 = vmatprep.subr.mxu0 0.0
    %v169 = vand.u32 %v20, 4294901760
    %v170 = vsub.f32 %v20, %v169
    %v171 = vand.u32 %v170, 4294901760
    %v172 = vsub.f32 %v170, %v171
    %v173 = vand.u32 %v172, 4294901760
    %174 = vmatpush1.msra.mxu0 %v173
    %175 = vmatprep.subr.mxu0 0.0
    %v176 = vand.u32 %v19, 4294901760
    %v177 = vsub.f32 %v19, %v176
    %v178 = vand.u32 %v177, 4294901760
    %v179 = vsub.f32 %v177, %v178
    %v180 = vand.u32 %v179, 4294901760
    %181 = vmatpush1.msra.mxu0 %v180
    %182 = vmatprep.subr.mxu0 0.0
    %v183 = vand.u32 %v18, 4294901760
    %v184 = vsub.f32 %v18, %v183
    %v185 = vand.u32 %v184, 4294901760
    %v186 = vsub.f32 %v184, %v185
    %v187 = vand.u32 %v186, 4294901760
    %188 = vmatpush1.msra.mxu0 %v187
    %189 = vmatprep.subr.mxu0 0.0
    %v190 = vand.u32 %v17, 4294901760
    %v191 = vsub.f32 %v17, %v190
    %v192 = vand.u32 %v191, 4294901760
    %v193 = vsub.f32 %v191, %v192
    %v194 = vand.u32 %v193, 4294901760
    %195 = vmatpush1.msra.mxu0 %v194
    %196 = vmatprep.subr.mxu0 0.0
    %197 = vmatpush2.msra.mxu0 0.0
    %198 = vmatprep.subr.mxu0 0.0
    %199 = vmatpush2.msra.mxu0 0.0
    %200 = vmatprep.subr.mxu0 0.0
    %201 = vmatpush2.msra.mxu0 0.0
    %202 = vmatprep.subr.mxu0 0.0
    %203 = vmatpush2.msra.mxu0 0.0
    %204 = vmatprep.subr.mxu0 0.0
    %205 = vmatpush2.msra.mxu0 0.0
    %206 = vmatprep.subr.mxu0 0.0
    %207 = vmatpush2.msra.mxu0 0.0
    %208 = vmatprep.subr.mxu0 0.0
    %209 = vmatpush2.msra.mxu0 0.0
    %210 = vmatprep.subr.mxu0 0.0
    %211 = vmatpush2.msra.mxu0 0.0
    %212 = vmatprep.subr.mxu0 0.0
    %213 = vmatpush2.msra.mxu0 0.0
    %214 = vmatprep.subr.mxu0 0.0
    %215 = vmatpush2.msra.mxu0 0.0
    %216 = vmatprep.subr.mxu0 0.0
    %217 = vmatpush2.msra.mxu0 0.0
    %218 = vmatprep.subr.mxu0 0.0
    %219 = vmatpush2.msra.mxu0 0.0
    %220 = vmatprep.subr.mxu0 0.0
    %221 = vmatpush2.msra.mxu0 0.0
    %222 = vmatprep.subr.mxu0 0.0
    %223 = vmatpush2.msra.mxu0 0.0
    %224 = vmatprep.subr.mxu0 0.0
    %225 = vmatpush2.msra.mxu0 0.0
    %226 = vmatprep.subr.mxu0 0.0
    %227 = vmatpush2.msra.mxu0 0.0
    %228 = vmatprep.mubr.f32.mxu0 0.0
    %v229 = vand.u32 %v39, 4294901760
    %230 = vmatmul.mubr.f32.gmra.mxu0 %v229
    %v231 = vpop.f32.mrf.mxu0
    %v232 = vadd.f32 %v121, %v231
    %v233 = vpop.f32.mrf.mxu0
    %234 = vdwg.mxu0
    %235 = vmatprep.subr.mxu0 0.0
    %236 = vmatpush1.msra.mxu0 0.0
    %237 = vmatprep.subr.mxu0 0.0
    %238 = vmatpush1.msra.mxu0 0.0
    %239 = vmatprep.subr.mxu0 0.0
    %240 = vmatpush1.msra.mxu0 0.0
    %241 = vmatprep.subr.mxu0 0.0
    %242 = vmatpush1.msra.mxu0 0.0
    %243 = vmatprep.subr.mxu0 0.0
    %244 = vmatpush1.msra.mxu0 0.0
    %245 = vmatprep.subr.mxu0 0.0
    %246 = vmatpush1.msra.mxu0 0.0
    %247 = vmatprep.subr.mxu0 0.0
    %248 = vmatpush1.msra.mxu0 0.0
    %249 = vmatprep.subr.mxu0 0.0
    %250 = vmatpush1.msra.mxu0 0.0
    %251 = vmatprep.subr.mxu0 0.0
    %v252 = vand.u32 %v24, 4294901760
    %v253 = vsub.f32 %v24, %v252
    %254 = vmatpush1.msra.mxu0 %v253
    %255 = vmatprep.subr.mxu0 0.0
    %v256 = vand.u32 %v23, 4294901760
    %v257 = vsub.f32 %v23, %v256
    %258 = vmatpush1.msra.mxu0 %v257
    %259 = vmatprep.subr.mxu0 0.0
    %v260 = vand.u32 %v22, 4294901760
    %v261 = vsub.f32 %v22, %v260
    %262 = vmatpush1.msra.mxu0 %v261
    %263 = vmatprep.subr.mxu0 0.0
    %v264 = vand.u32 %v21, 4294901760
    %v265 = vsub.f32 %v21, %v264
    %266 = vmatpush1.msra.mxu0 %v265
    %267 = vmatprep.subr.mxu0 0.0
    %v268 = vand.u32 %v20, 4294901760
    %v269 = vsub.f32 %v20, %v268
    %270 = vmatpush1.msra.mxu0 %v269
    %271 = vmatprep.subr.mxu0 0.0
    %v272 = vand.u32 %v19, 4294901760
    %v273 = vsub.f32 %v19, %v272
    %274 = vmatpush1.msra.mxu0 %v273
    %275 = vmatprep.subr.mxu0 0.0
    %v276 = vand.u32 %v18, 4294901760
    %v277 = vsub.f32 %v18, %v276
    %278 = vmatpush1.msra.mxu0 %v277
    %279 = vmatprep.subr.mxu0 0.0
    %v280 = vand.u32 %v17, 4294901760
    %v281 = vsub.f32 %v17, %v280
    %282 = vmatpush1.msra.mxu0 %v281
    %283 = vmatprep.subr.mxu0 0.0
    %284 = vmatpush2.msra.mxu0 0.0
    %285 = vmatprep.subr.mxu0 0.0
    %286 = vmatpush2.msra.mxu0 0.0
    %287 = vmatprep.subr.mxu0 0.0
    %288 = vmatpush2.msra.mxu0 0.0
    %289 = vmatprep.subr.mxu0 0.0
    %290 = vmatpush2.msra.mxu0 0.0
    %291 = vmatprep.subr.mxu0 0.0
    %292 = vmatpush2.msra.mxu0 0.0
    %293 = vmatprep.subr.mxu0 0.0
    %294 = vmatpush2.msra.mxu0 0.0
    %295 = vmatprep.subr.mxu0 0.0
    %296 = vmatpush2.msra.mxu0 0.0
    %297 = vmatprep.subr.mxu0 0.0
    %298 = vmatpush2.msra.mxu0 0.0
    %299 = vmatprep.subr.mxu0 0.0
    %300 = vmatpush2.msra.mxu0 0.0
    %301 = vmatprep.subr.mxu0 0.0
    %302 = vmatpush2.msra.mxu0 0.0
    %303 = vmatprep.subr.mxu0 0.0
    %304 = vmatpush2.msra.mxu0 0.0
    %305 = vmatprep.subr.mxu0 0.0
    %306 = vmatpush2.msra.mxu0 0.0
    %307 = vmatprep.subr.mxu0 0.0
    %308 = vmatpush2.msra.mxu0 0.0
    %309 = vmatprep.subr.mxu0 0.0
    %310 = vmatpush2.msra.mxu0 0.0
    %311 = vmatprep.subr.mxu0 0.0
    %312 = vmatpush2.msra.mxu0 0.0
    %313 = vmatprep.subr.mxu0 0.0
    %314 = vmatpush2.msra.mxu0 0.0
    %315 = vmatprep.mubr.f32.mxu0 0.0
    %v316 = vand.u32 %v39, 4294901760
    %v317 = vsub.f32 %v39, %v316
    %318 = vmatmul.mubr.f32.gmra.mxu0 %v317
    %v319 = vpop.f32.mrf.mxu0
    %v320 = vadd.f32 %v232, %v319
    %v321 = vpop.f32.mrf.mxu0
    %322 = vdwg.mxu0
    %323 = vmatprep.subr.mxu0 0.0
    %324 = vmatpush1.msra.mxu0 0.0
    %325 = vmatprep.subr.mxu0 0.0
    %326 = vmatpush1.msra.mxu0 0.0
    %327 = vmatprep.subr.mxu0 0.0
    %328 = vmatpush1.msra.mxu0 0.0
    %329 = vmatprep.subr.mxu0 0.0
    %330 = vmatpush1.msra.mxu0 0.0
    %331 = vmatprep.subr.mxu0 0.0
    %332 = vmatpush1.msra.mxu0 0.0
    %333 = vmatprep.subr.mxu0 0.0
    %334 = vmatpush1.msra.mxu0 0.0
    %335 = vmatprep.subr.mxu0 0.0
    %336 = vmatpush1.msra.mxu0 0.0
    %337 = vmatprep.subr.mxu0 0.0
    %338 = vmatpush1.msra.mxu0 0.0
    %339 = vmatprep.subr.mxu0 0.0
    %v340 = vand.u32 %v24, 4294901760
    %341 = vmatpush1.msra.mxu0 %v340
    %342 = vmatprep.subr.mxu0 0.0
    %v343 = vand.u32 %v23, 4294901760
    %344 = vmatpush1.msra.mxu0 %v343
    %345 = vmatprep.subr.mxu0 0.0
    %v346 = vand.u32 %v22, 4294901760
    %347 = vmatpush1.msra.mxu0 %v346
    %348 = vmatprep.subr.mxu0 0.0
    %v349 = vand.u32 %v21, 4294901760
    %350 = vmatpush1.msra.mxu0 %v349
    %351 = vmatprep.subr.mxu0 0.0
    %v352 = vand.u32 %v20, 4294901760
    %353 = vmatpush1.msra.mxu0 %v352
    %354 = vmatprep.subr.mxu0 0.0
    %v355 = vand.u32 %v19, 4294901760
    %356 = vmatpush1.msra.mxu0 %v355
    %357 = vmatprep.subr.mxu0 0.0
    %v358 = vand.u32 %v18, 4294901760
    %359 = vmatpush1.msra.mxu0 %v358
    %360 = vmatprep.subr.mxu0 0.0
    %v361 = vand.u32 %v17, 4294901760
    %362 = vmatpush1.msra.mxu0 %v361
    %363 = vmatprep.subr.mxu0 0.0
    %364 = vmatpush2.msra.mxu0 0.0
    %365 = vmatprep.subr.mxu0 0.0
    %366 = vmatpush2.msra.mxu0 0.0
    %367 = vmatprep.subr.mxu0 0.0
    %368 = vmatpush2.msra.mxu0 0.0
    %369 = vmatprep.subr.mxu0 0.0
    %370 = vmatpush2.msra.mxu0 0.0
    %371 = vmatprep.subr.mxu0 0.0
    %372 = vmatpush2.msra.mxu0 0.0
    %373 = vmatprep.subr.mxu0 0.0
    %374 = vmatpush2.msra.mxu0 0.0
    %375 = vmatprep.subr.mxu0 0.0
    %376 = vmatpush2.msra.mxu0 0.0
    %377 = vmatprep.subr.mxu0 0.0
    %378 = vmatpush2.msra.mxu0 0.0
    %379 = vmatprep.subr.mxu0 0.0
    %380 = vmatpush2.msra.mxu0 0.0
    %381 = vmatprep.subr.mxu0 0.0
    %382 = vmatpush2.msra.mxu0 0.0
    %383 = vmatprep.subr.mxu0 0.0
    %384 = vmatpush2.msra.mxu0 0.0
    %385 = vmatprep.subr.mxu0 0.0
    %386 = vmatpush2.msra.mxu0 0.0
    %387 = vmatprep.subr.mxu0 0.0
    %388 = vmatpush2.msra.mxu0 0.0
    %389 = vmatprep.subr.mxu0 0.0
    %390 = vmatpush2.msra.mxu0 0.0
    %391 = vmatprep.subr.mxu0 0.0
    %392 = vmatpush2.msra.mxu0 0.0
    %393 = vmatprep.subr.mxu0 0.0
    %394 = vmatpush2.msra.mxu0 0.0
    %395 = vmatprep.mubr.f32.mxu0 0.0
    %v396 = vand.u32 %v39, 4294901760
    %v397 = vsub.f32 %v39, %v396
    %v398 = vand.u32 %v397, 4294901760
    %399 = vmatmul.mubr.f32.gmra.mxu0 %v398
    %v400 = vpop.f32.mrf.mxu0
    %v401 = vadd.f32 %v320, %v400
    %v402 = vpop.f32.mrf.mxu0
    %403 = vdwg.mxu0
    %404 = vmatprep.subr.mxu0 0.0
    %405 = vmatpush1.msra.mxu0 0.0
    %406 = vmatprep.subr.mxu0 0.0
    %407 = vmatpush1.msra.mxu0 0.0
    %408 = vmatprep.subr.mxu0 0.0
    %409 = vmatpush1.msra.mxu0 0.0
    %410 = vmatprep.subr.mxu0 0.0
    %411 = vmatpush1.msra.mxu0 0.0
    %412 = vmatprep.subr.mxu0 0.0
    %413 = vmatpush1.msra.mxu0 0.0
    %414 = vmatprep.subr.mxu0 0.0
    %415 = vmatpush1.msra.mxu0 0.0
    %416 = vmatprep.subr.mxu0 0.0
    %417 = vmatpush1.msra.mxu0 0.0
    %418 = vmatprep.subr.mxu0 0.0
    %419 = vmatpush1.msra.mxu0 0.0
    %420 = vmatprep.subr.mxu0 0.0
    %v421 = vand.u32 %v24, 4294901760
    %v422 = vsub.f32 %v24, %v421
    %v423 = vand.u32 %v422, 4294901760
    %424 = vmatpush1.msra.mxu0 %v423
    %425 = vmatprep.subr.mxu0 0.0
    %v426 = vand.u32 %v23, 4294901760
    %v427 = vsub.f32 %v23, %v426
    %v428 = vand.u32 %v427, 4294901760
    %429 = vmatpush1.msra.mxu0 %v428
    %430 = vmatprep.subr.mxu0 0.0
    %v431 = vand.u32 %v22, 4294901760
    %v432 = vsub.f32 %v22, %v431
    %v433 = vand.u32 %v432, 4294901760
    %434 = vmatpush1.msra.mxu0 %v433
    %435 = vmatprep.subr.mxu0 0.0
    %v436 = vand.u32 %v21, 4294901760
    %v437 = vsub.f32 %v21, %v436
    %v438 = vand.u32 %v437, 4294901760
    %439 = vmatpush1.msra.mxu0 %v438
    %440 = vmatprep.subr.mxu0 0.0
    %v441 = vand.u32 %v20, 4294901760
    %v442 = vsub.f32 %v20, %v441
    %v443 = vand.u32 %v442, 4294901760
    %444 = vmatpush1.msra.mxu0 %v443
    %445 = vmatprep.subr.mxu0 0.0
    %v446 = vand.u32 %v19, 4294901760
    %v447 = vsub.f32 %v19, %v446
    %v448 = vand.u32 %v447, 4294901760
    %449 = vmatpush1.msra.mxu0 %v448
    %450 = vmatprep.subr.mxu0 0.0
    %v451 = vand.u32 %v18, 4294901760
    %v452 = vsub.f32 %v18, %v451
    %v453 = vand.u32 %v452, 4294901760
    %454 = vmatpush1.msra.mxu0 %v453
    %455 = vmatprep.subr.mxu0 0.0
    %v456 = vand.u32 %v17, 4294901760
    %v457 = vsub.f32 %v17, %v456
    %v458 = vand.u32 %v457, 4294901760
    %459 = vmatpush1.msra.mxu0 %v458
    %460 = vmatprep.subr.mxu0 0.0
    %461 = vmatpush2.msra.mxu0 0.0
    %462 = vmatprep.subr.mxu0 0.0
    %463 = vmatpush2.msra.mxu0 0.0
    %464 = vmatprep.subr.mxu0 0.0
    %465 = vmatpush2.msra.mxu0 0.0
    %466 = vmatprep.subr.mxu0 0.0
    %467 = vmatpush2.msra.mxu0 0.0
    %468 = vmatprep.subr.mxu0 0.0
    %469 = vmatpush2.msra.mxu0 0.0
    %470 = vmatprep.subr.mxu0 0.0
    %471 = vmatpush2.msra.mxu0 0.0
    %472 = vmatprep.subr.mxu0 0.0
    %473 = vmatpush2.msra.mxu0 0.0
    %474 = vmatprep.subr.mxu0 0.0
    %475 = vmatpush2.msra.mxu0 0.0
    %476 = vmatprep.subr.mxu0 0.0
    %477 = vmatpush2.msra.mxu0 0.0
    %478 = vmatprep.subr.mxu0 0.0
    %479 = vmatpush2.msra.mxu0 0.0
    %480 = vmatprep.subr.mxu0 0.0
    %481 = vmatpush2.msra.mxu0 0.0
    %482 = vmatprep.subr.mxu0 0.0
    %483 = vmatpush2.msra.mxu0 0.0
    %484 = vmatprep.subr.mxu0 0.0
    %485 = vmatpush2.msra.mxu0 0.0
    %486 = vmatprep.subr.mxu0 0.0
    %487 = vmatpush2.msra.mxu0 0.0
    %488 = vmatprep.subr.mxu0 0.0
    %489 = vmatpush2.msra.mxu0 0.0
    %490 = vmatprep.subr.mxu0 0.0
    %491 = vmatpush2.msra.mxu0 0.0
    %492 = vmatprep.mubr.f32.mxu0 0.0
    %v493 = vand.u32 %v39, 4294901760
    %494 = vmatmul.mubr.f32.gmra.mxu0 %v493
    %v495 = vpop.f32.mrf.mxu0
    %v496 = vadd.f32 %v401, %v495
    %v497 = vpop.f32.mrf.mxu0
    %498 = vdwg.mxu0
    %499 = vmatprep.subr.mxu0 0.0
    %500 = vmatpush1.msra.mxu0 0.0
    %501 = vmatprep.subr.mxu0 0.0
    %502 = vmatpush1.msra.mxu0 0.0
    %503 = vmatprep.subr.mxu0 0.0
    %504 = vmatpush1.msra.mxu0 0.0
    %505 = vmatprep.subr.mxu0 0.0
    %506 = vmatpush1.msra.mxu0 0.0
    %507 = vmatprep.subr.mxu0 0.0
    %508 = vmatpush1.msra.mxu0 0.0
    %509 = vmatprep.subr.mxu0 0.0
    %510 = vmatpush1.msra.mxu0 0.0
    %511 = vmatprep.subr.mxu0 0.0
    %512 = vmatpush1.msra.mxu0 0.0
    %513 = vmatprep.subr.mxu0 0.0
    %514 = vmatpush1.msra.mxu0 0.0
    %515 = vmatprep.subr.mxu0 0.0
    %v516 = vand.u32 %v24, 4294901760
    %517 = vmatpush1.msra.mxu0 %v516
    %518 = vmatprep.subr.mxu0 0.0
    %v519 = vand.u32 %v23, 4294901760
    %520 = vmatpush1.msra.mxu0 %v519
    %521 = vmatprep.subr.mxu0 0.0
    %v522 = vand.u32 %v22, 4294901760
    %523 = vmatpush1.msra.mxu0 %v522
    %524 = vmatprep.subr.mxu0 0.0
    %v525 = vand.u32 %v21, 4294901760
    %526 = vmatpush1.msra.mxu0 %v525
    %527 = vmatprep.subr.mxu0 0.0
    %v528 = vand.u32 %v20, 4294901760
    %529 = vmatpush1.msra.mxu0 %v528
    %530 = vmatprep.subr.mxu0 0.0
    %v531 = vand.u32 %v19, 4294901760
    %532 = vmatpush1.msra.mxu0 %v531
    %533 = vmatprep.subr.mxu0 0.0
    %v534 = vand.u32 %v18, 4294901760
    %535 = vmatpush1.msra.mxu0 %v534
    %536 = vmatprep.subr.mxu0 0.0
    %v537 = vand.u32 %v17, 4294901760
    %538 = vmatpush1.msra.mxu0 %v537
    %539 = vmatprep.subr.mxu0 0.0
    %540 = vmatpush2.msra.mxu0 0.0
    %541 = vmatprep.subr.mxu0 0.0
    %542 = vmatpush2.msra.mxu0 0.0
    %543 = vmatprep.subr.mxu0 0.0
    %544 = vmatpush2.msra.mxu0 0.0
    %545 = vmatprep.subr.mxu0 0.0
    %546 = vmatpush2.msra.mxu0 0.0
    %547 = vmatprep.subr.mxu0 0.0
    %548 = vmatpush2.msra.mxu0 0.0
    %549 = vmatprep.subr.mxu0 0.0
    %550 = vmatpush2.msra.mxu0 0.0
    %551 = vmatprep.subr.mxu0 0.0
    %552 = vmatpush2.msra.mxu0 0.0
    %553 = vmatprep.subr.mxu0 0.0
    %554 = vmatpush2.msra.mxu0 0.0
    %555 = vmatprep.subr.mxu0 0.0
    %556 = vmatpush2.msra.mxu0 0.0
    %557 = vmatprep.subr.mxu0 0.0
    %558 = vmatpush2.msra.mxu0 0.0
    %559 = vmatprep.subr.mxu0 0.0
    %560 = vmatpush2.msra.mxu0 0.0
    %561 = vmatprep.subr.mxu0 0.0
    %562 = vmatpush2.msra.mxu0 0.0
    %563 = vmatprep.subr.mxu0 0.0
    %564 = vmatpush2.msra.mxu0 0.0
    %565 = vmatprep.subr.mxu0 0.0
    %566 = vmatpush2.msra.mxu0 0.0
    %567 = vmatprep.subr.mxu0 0.0
    %568 = vmatpush2.msra.mxu0 0.0
    %569 = vmatprep.subr.mxu0 0.0
    %570 = vmatpush2.msra.mxu0 0.0
    %571 = vmatprep.mubr.f32.mxu0 0.0
    %v572 = vand.u32 %v39, 4294901760
    %573 = vmatmul.mubr.f32.gmra.mxu0 %v572
    %v574 = vpop.f32.mrf.mxu0
    %v575 = vadd.f32 %v496, %v574
    %v576 = vpop.f32.mrf.mxu0
    %577 = vdwg.mxu0
    %578 = vset.pattern.permute.xlu0 1
    %579 = vperm.xlu0 %578, %v28
    %v580 = vpop.permute.xlu0 %579
    %vm581 = vcmp.eq.s32.totalorder %v30, %v580
    %v582 = vsel %vm581, 1, 0
    %v583 = vcvt.s32.f32 %v582
    %v585 = vsel %vm37, %v583, 0
    %587 = vmatprep.subr.mxu0 0.0
    %588 = vmatpush1.msra.mxu0 0.0
    %589 = vmatprep.subr.mxu0 0.0
    %590 = vmatpush1.msra.mxu0 0.0
    %591 = vmatprep.subr.mxu0 0.0
    %592 = vmatpush1.msra.mxu0 0.0
    %593 = vmatprep.subr.mxu0 0.0
    %594 = vmatpush1.msra.mxu0 0.0
    %595 = vmatprep.subr.mxu0 0.0
    %596 = vmatpush1.msra.mxu0 0.0
    %597 = vmatprep.subr.mxu0 0.0
    %598 = vmatpush1.msra.mxu0 0.0
    %599 = vmatprep.subr.mxu0 0.0
    %600 = vmatpush1.msra.mxu0 0.0
    %601 = vmatprep.subr.mxu0 0.0
    %602 = vmatpush1.msra.mxu0 0.0
    %603 = vmatprep.subr.mxu0 0.0
    %v604 = vand.u32 %v24, 4294901760
    %605 = vmatpush1.msra.mxu0 %v604
    %606 = vmatprep.subr.mxu0 0.0
    %v607 = vand.u32 %v23, 4294901760
    %608 = vmatpush1.msra.mxu0 %v607
    %609 = vmatprep.subr.mxu0 0.0
    %v610 = vand.u32 %v22, 4294901760
    %611 = vmatpush1.msra.mxu0 %v610
    %612 = vmatprep.subr.mxu0 0.0
    %v613 = vand.u32 %v21, 4294901760
    %614 = vmatpush1.msra.mxu0 %v613
    %615 = vmatprep.subr.mxu0 0.0
    %v616 = vand.u32 %v20, 4294901760
    %617 = vmatpush1.msra.mxu0 %v616
    %618 = vmatprep.subr.mxu0 0.0
    %v619 = vand.u32 %v19, 4294901760
    %620 = vmatpush1.msra.mxu0 %v619
    %621 = vmatprep.subr.mxu0 0.0
    %v622 = vand.u32 %v18, 4294901760
    %623 = vmatpush1.msra.mxu0 %v622
    %624 = vmatprep.subr.mxu0 0.0
    %v625 = vand.u32 %v17, 4294901760
    %626 = vmatpush1.msra.mxu0 %v625
    %627 = vmatprep.subr.mxu0 0.0
    %628 = vmatpush2.msra.mxu0 0.0
    %629 = vmatprep.subr.mxu0 0.0
    %630 = vmatpush2.msra.mxu0 0.0
    %631 = vmatprep.subr.mxu0 0.0
    %632 = vmatpush2.msra.mxu0 0.0
    %633 = vmatprep.subr.mxu0 0.0
    %634 = vmatpush2.msra.mxu0 0.0
    %635 = vmatprep.subr.mxu0 0.0
    %636 = vmatpush2.msra.mxu0 0.0
    %637 = vmatprep.subr.mxu0 0.0
    %638 = vmatpush2.msra.mxu0 0.0
    %639 = vmatprep.subr.mxu0 0.0
    %640 = vmatpush2.msra.mxu0 0.0
    %641 = vmatprep.subr.mxu0 0.0
    %642 = vmatpush2.msra.mxu0 0.0
    %643 = vmatprep.subr.mxu0 0.0
    %644 = vmatpush2.msra.mxu0 0.0
    %645 = vmatprep.subr.mxu0 0.0
    %646 = vmatpush2.msra.mxu0 0.0
    %647 = vmatprep.subr.mxu0 0.0
    %648 = vmatpush2.msra.mxu0 0.0
    %649 = vmatprep.subr.mxu0 0.0
    %650 = vmatpush2.msra.mxu0 0.0
    %651 = vmatprep.subr.mxu0 0.0
    %652 = vmatpush2.msra.mxu0 0.0
    %653 = vmatprep.subr.mxu0 0.0
    %654 = vmatpush2.msra.mxu0 0.0
    %655 = vmatprep.subr.mxu0 0.0
    %656 = vmatpush2.msra.mxu0 0.0
    %657 = vmatprep.subr.mxu0 0.0
    %658 = vmatpush2.msra.mxu0 0.0
    %659 = vmatprep.mubr.f32.mxu0 0.0
    %v660 = vand.u32 %v585, 4294901760
    %v661 = vsub.f32 %v585, %v660
    %v662 = vand.u32 %v661, 4294901760
    %v663 = vsub.f32 %v661, %v662
    %v664 = vand.u32 %v663, 4294901760
    %665 = vmatmul.mubr.f32.gmra.mxu0 %v664
    %v666 = vpop.f32.mrf.mxu0
    %v667 = vadd.f32 0.0, %v666
    %v668 = vpop.f32.mrf.mxu0
    %669 = vdwg.mxu0
    %670 = vmatprep.subr.mxu0 0.0
    %671 = vmatpush1.msra.mxu0 0.0
    %672 = vmatprep.subr.mxu0 0.0
    %673 = vmatpush1.msra.mxu0 0.0
    %674 = vmatprep.subr.mxu0 0.0
    %675 = vmatpush1.msra.mxu0 0.0
    %676 = vmatprep.subr.mxu0 0.0
    %677 = vmatpush1.msra.mxu0 0.0
    %678 = vmatprep.subr.mxu0 0.0
    %679 = vmatpush1.msra.mxu0 0.0
    %680 = vmatprep.subr.mxu0 0.0
    %681 = vmatpush1.msra.mxu0 0.0
    %682 = vmatprep.subr.mxu0 0.0
    %683 = vmatpush1.msra.mxu0 0.0
    %684 = vmatprep.subr.mxu0 0.0
    %685 = vmatpush1.msra.mxu0 0.0
    %686 = vmatprep.subr.mxu0 0.0
    %v687 = vand.u32 %v24, 4294901760
    %v688 = vsub.f32 %v24, %v687
    %v689 = vand.u32 %v688, 4294901760
    %v690 = vsub.f32 %v688, %v689
    %v691 = vand.u32 %v690, 4294901760
    %692 = vmatpush1.msra.mxu0 %v691
    %693 = vmatprep.subr.mxu0 0.0
    %v694 = vand.u32 %v23, 4294901760
    %v695 = vsub.f32 %v23, %v694
    %v696 = vand.u32 %v695, 4294901760
    %v697 = vsub.f32 %v695, %v696
    %v698 = vand.u32 %v697, 4294901760
    %699 = vmatpush1.msra.mxu0 %v698
    %700 = vmatprep.subr.mxu0 0.0
    %v701 = vand.u32 %v22, 4294901760
    %v702 = vsub.f32 %v22, %v701
    %v703 = vand.u32 %v702, 4294901760
    %v704 = vsub.f32 %v702, %v703
    %v705 = vand.u32 %v704, 4294901760
    %706 = vmatpush1.msra.mxu0 %v705
    %707 = vmatprep.subr.mxu0 0.0
    %v708 = vand.u32 %v21, 4294901760
    %v709 = vsub.f32 %v21, %v708
    %v710 = vand.u32 %v709, 4294901760
    %v711 = vsub.f32 %v709, %v710
    %v712 = vand.u32 %v711, 4294901760
    %713 = vmatpush1.msra.mxu0 %v712
    %714 = vmatprep.subr.mxu0 0.0
    %v715 = vand.u32 %v20, 4294901760
    %v716 = vsub.f32 %v20, %v715
    %v717 = vand.u32 %v716, 4294901760
    %v718 = vsub.f32 %v716, %v717
    %v719 = vand.u32 %v718, 4294901760
    %720 = vmatpush1.msra.mxu0 %v719
    %721 = vmatprep.subr.mxu0 0.0
    %v722 = vand.u32 %v19, 4294901760
    %v723 = vsub.f32 %v19, %v722
    %v724 = vand.u32 %v723, 4294901760
    %v725 = vsub.f32 %v723, %v724
    %v726 = vand.u32 %v725, 4294901760
    %727 = vmatpush1.msra.mxu0 %v726
    %728 = vmatprep.subr.mxu0 0.0
    %v729 = vand.u32 %v18, 4294901760
    %v730 = vsub.f32 %v18, %v729
    %v731 = vand.u32 %v730, 4294901760
    %v732 = vsub.f32 %v730, %v731
    %v733 = vand.u32 %v732, 4294901760
    %734 = vmatpush1.msra.mxu0 %v733
    %735 = vmatprep.subr.mxu0 0.0
    %v736 = vand.u32 %v17, 4294901760
    %v737 = vsub.f32 %v17, %v736
    %v738 = vand.u32 %v737, 4294901760
    %v739 = vsub.f32 %v737, %v738
    %v740 = vand.u32 %v739, 4294901760
    %741 = vmatpush1.msra.mxu0 %v740
    %742 = vmatprep.subr.mxu0 0.0
    %743 = vmatpush2.msra.mxu0 0.0
    %744 = vmatprep.subr.mxu0 0.0
    %745 = vmatpush2.msra.mxu0 0.0
    %746 = vmatprep.subr.mxu0 0.0
    %747 = vmatpush2.msra.mxu0 0.0
    %748 = vmatprep.subr.mxu0 0.0
    %749 = vmatpush2.msra.mxu0 0.0
    %750 = vmatprep.subr.mxu0 0.0
    %751 = vmatpush2.msra.mxu0 0.0
    %752 = vmatprep.subr.mxu0 0.0
    %753 = vmatpush2.msra.mxu0 0.0
    %754 = vmatprep.subr.mxu0 0.0
    %755 = vmatpush2.msra.mxu0 0.0
    %756 = vmatprep.subr.mxu0 0.0
    %757 = vmatpush2.msra.mxu0 0.0
    %758 = vmatprep.subr.mxu0 0.0
    %759 = vmatpush2.msra.mxu0 0.0
    %760 = vmatprep.subr.mxu0 0.0
    %761 = vmatpush2.msra.mxu0 0.0
    %762 = vmatprep.subr.mxu0 0.0
    %763 = vmatpush2.msra.mxu0 0.0
    %764 = vmatprep.subr.mxu0 0.0
    %765 = vmatpush2.msra.mxu0 0.0
    %766 = vmatprep.subr.mxu0 0.0
    %767 = vmatpush2.msra.mxu0 0.0
    %768 = vmatprep.subr.mxu0 0.0
    %769 = vmatpush2.msra.mxu0 0.0
    %770 = vmatprep.subr.mxu0 0.0
    %771 = vmatpush2.msra.mxu0 0.0
    %772 = vmatprep.subr.mxu0 0.0
    %773 = vmatpush2.msra.mxu0 0.0
    %774 = vmatprep.mubr.f32.mxu0 0.0
    %v775 = vand.u32 %v585, 4294901760
    %776 = vmatmul.mubr.f32.gmra.mxu0 %v775
    %v777 = vpop.f32.mrf.mxu0
    %v778 = vadd.f32 %v667, %v777
    %v779 = vpop.f32.mrf.mxu0
    %780 = vdwg.mxu0
    %781 = vmatprep.subr.mxu0 0.0
    %782 = vmatpush1.msra.mxu0 0.0
    %783 = vmatprep.subr.mxu0 0.0
    %784 = vmatpush1.msra.mxu0 0.0
    %785 = vmatprep.subr.mxu0 0.0
    %786 = vmatpush1.msra.mxu0 0.0
    %787 = vmatprep.subr.mxu0 0.0
    %788 = vmatpush1.msra.mxu0 0.0
    %789 = vmatprep.subr.mxu0 0.0
    %790 = vmatpush1.msra.mxu0 0.0
    %791 = vmatprep.subr.mxu0 0.0
    %792 = vmatpush1.msra.mxu0 0.0
    %793 = vmatprep.subr.mxu0 0.0
    %794 = vmatpush1.msra.mxu0 0.0
    %795 = vmatprep.subr.mxu0 0.0
    %796 = vmatpush1.msra.mxu0 0.0
    %797 = vmatprep.subr.mxu0 0.0
    %v798 = vand.u32 %v24, 4294901760
    %v799 = vsub.f32 %v24, %v798
    %800 = vmatpush1.msra.mxu0 %v799
    %801 = vmatprep.subr.mxu0 0.0
    %v802 = vand.u32 %v23, 4294901760
    %v803 = vsub.f32 %v23, %v802
    %804 = vmatpush1.msra.mxu0 %v803
    %805 = vmatprep.subr.mxu0 0.0
    %v806 = vand.u32 %v22, 4294901760
    %v807 = vsub.f32 %v22, %v806
    %808 = vmatpush1.msra.mxu0 %v807
    %809 = vmatprep.subr.mxu0 0.0
    %v810 = vand.u32 %v21, 4294901760
    %v811 = vsub.f32 %v21, %v810
    %812 = vmatpush1.msra.mxu0 %v811
    %813 = vmatprep.subr.mxu0 0.0
    %v814 = vand.u32 %v20, 4294901760
    %v815 = vsub.f32 %v20, %v814
    %816 = vmatpush1.msra.mxu0 %v815
    %817 = vmatprep.subr.mxu0 0.0
    %v818 = vand.u32 %v19, 4294901760
    %v819 = vsub.f32 %v19, %v818
    %820 = vmatpush1.msra.mxu0 %v819
    %821 = vmatprep.subr.mxu0 0.0
    %v822 = vand.u32 %v18, 4294901760
    %v823 = vsub.f32 %v18, %v822
    %824 = vmatpush1.msra.mxu0 %v823
    %825 = vmatprep.subr.mxu0 0.0
    %v826 = vand.u32 %v17, 4294901760
    %v827 = vsub.f32 %v17, %v826
    %828 = vmatpush1.msra.mxu0 %v827
    %829 = vmatprep.subr.mxu0 0.0
    %830 = vmatpush2.msra.mxu0 0.0
    %831 = vmatprep.subr.mxu0 0.0
    %832 = vmatpush2.msra.mxu0 0.0
    %833 = vmatprep.subr.mxu0 0.0
    %834 = vmatpush2.msra.mxu0 0.0
    %835 = vmatprep.subr.mxu0 0.0
    %836 = vmatpush2.msra.mxu0 0.0
    %837 = vmatprep.subr.mxu0 0.0
    %838 = vmatpush2.msra.mxu0 0.0
    %839 = vmatprep.subr.mxu0 0.0
    %840 = vmatpush2.msra.mxu0 0.0
    %841 = vmatprep.subr.mxu0 0.0
    %842 = vmatpush2.msra.mxu0 0.0
    %843 = vmatprep.subr.mxu0 0.0
    %844 = vmatpush2.msra.mxu0 0.0
    %845 = vmatprep.subr.mxu0 0.0
    %846 = vmatpush2.msra.mxu0 0.0
    %847 = vmatprep.subr.mxu0 0.0
    %848 = vmatpush2.msra.mxu0 0.0
    %849 = vmatprep.subr.mxu0 0.0
    %850 = vmatpush2.msra.mxu0 0.0
    %851 = vmatprep.subr.mxu0 0.0
    %852 = vmatpush2.msra.mxu0 0.0
    %853 = vmatprep.subr.mxu0 0.0
    %854 = vmatpush2.msra.mxu0 0.0
    %855 = vmatprep.subr.mxu0 0.0
    %856 = vmatpush2.msra.mxu0 0.0
    %857 = vmatprep.subr.mxu0 0.0
    %858 = vmatpush2.msra.mxu0 0.0
    %859 = vmatprep.subr.mxu0 0.0
    %860 = vmatpush2.msra.mxu0 0.0
    %861 = vmatprep.mubr.f32.mxu0 0.0
    %v862 = vand.u32 %v585, 4294901760
    %v863 = vsub.f32 %v585, %v862
    %864 = vmatmul.mubr.f32.gmra.mxu0 %v863
    %v865 = vpop.f32.mrf.mxu0
    %v866 = vadd.f32 %v778, %v865
    %v867 = vpop.f32.mrf.mxu0
    %868 = vdwg.mxu0
    %869 = vmatprep.subr.mxu0 0.0
    %870 = vmatpush1.msra.mxu0 0.0
    %871 = vmatprep.subr.mxu0 0.0
    %872 = vmatpush1.msra.mxu0 0.0
    %873 = vmatprep.subr.mxu0 0.0
    %874 = vmatpush1.msra.mxu0 0.0
    %875 = vmatprep.subr.mxu0 0.0
    %876 = vmatpush1.msra.mxu0 0.0
    %877 = vmatprep.subr.mxu0 0.0
    %878 = vmatpush1.msra.mxu0 0.0
    %879 = vmatprep.subr.mxu0 0.0
    %880 = vmatpush1.msra.mxu0 0.0
    %881 = vmatprep.subr.mxu0 0.0
    %882 = vmatpush1.msra.mxu0 0.0
    %883 = vmatprep.subr.mxu0 0.0
    %884 = vmatpush1.msra.mxu0 0.0
    %885 = vmatprep.subr.mxu0 0.0
    %v886 = vand.u32 %v24, 4294901760
    %887 = vmatpush1.msra.mxu0 %v886
    %888 = vmatprep.subr.mxu0 0.0
    %v889 = vand.u32 %v23, 4294901760
    %890 = vmatpush1.msra.mxu0 %v889
    %891 = vmatprep.subr.mxu0 0.0
    %v892 = vand.u32 %v22, 4294901760
    %893 = vmatpush1.msra.mxu0 %v892
    %894 = vmatprep.subr.mxu0 0.0
    %v895 = vand.u32 %v21, 4294901760
    %896 = vmatpush1.msra.mxu0 %v895
    %897 = vmatprep.subr.mxu0 0.0
    %v898 = vand.u32 %v20, 4294901760
    %899 = vmatpush1.msra.mxu0 %v898
    %900 = vmatprep.subr.mxu0 0.0
    %v901 = vand.u32 %v19, 4294901760
    %902 = vmatpush1.msra.mxu0 %v901
    %903 = vmatprep.subr.mxu0 0.0
    %v904 = vand.u32 %v18, 4294901760
    %905 = vmatpush1.msra.mxu0 %v904
    %906 = vmatprep.subr.mxu0 0.0
    %v907 = vand.u32 %v17, 4294901760
    %908 = vmatpush1.msra.mxu0 %v907
    %909 = vmatprep.subr.mxu0 0.0
    %910 = vmatpush2.msra.mxu0 0.0
    %911 = vmatprep.subr.mxu0 0.0
    %912 = vmatpush2.msra.mxu0 0.0
    %913 = vmatprep.subr.mxu0 0.0
    %914 = vmatpush2.msra.mxu0 0.0
    %915 = vmatprep.subr.mxu0 0.0
    %916 = vmatpush2.msra.mxu0 0.0
    %917 = vmatprep.subr.mxu0 0.0
    %918 = vmatpush2.msra.mxu0 0.0
    %919 = vmatprep.subr.mxu0 0.0
    %920 = vmatpush2.msra.mxu0 0.0
    %921 = vmatprep.subr.mxu0 0.0
    %922 = vmatpush2.msra.mxu0 0.0
    %923 = vmatprep.subr.mxu0 0.0
    %924 = vmatpush2.msra.mxu0 0.0
    %925 = vmatprep.subr.mxu0 0.0
    %926 = vmatpush2.msra.mxu0 0.0
    %927 = vmatprep.subr.mxu0 0.0
    %928 = vmatpush2.msra.mxu0 0.0
    %929 = vmatprep.subr.mxu0 0.0
    %930 = vmatpush2.msra.mxu0 0.0
    %931 = vmatprep.subr.mxu0 0.0
    %932 = vmatpush2.msra.mxu0 0.0
    %933 = vmatprep.subr.mxu0 0.0
    %934 = vmatpush2.msra.mxu0 0.0
    %935 = vmatprep.subr.mxu0 0.0
    %936 = vmatpush2.msra.mxu0 0.0
    %937 = vmatprep.subr.mxu0 0.0
    %938 = vmatpush2.msra.mxu0 0.0
    %939 = vmatprep.subr.mxu0 0.0
    %940 = vmatpush2.msra.mxu0 0.0
    %941 = vmatprep.mubr.f32.mxu0 0.0
    %v942 = vand.u32 %v585, 4294901760
    %v943 = vsub.f32 %v585, %v942
    %v944 = vand.u32 %v943, 4294901760
    %945 = vmatmul.mubr.f32.gmra.mxu0 %v944
    %v946 = vpop.f32.mrf.mxu0
    %v947 = vadd.f32 %v866, %v946
    %v948 = vpop.f32.mrf.mxu0
    %949 = vdwg.mxu0
    %950 = vmatprep.subr.mxu0 0.0
    %951 = vmatpush1.msra.mxu0 0.0
    %952 = vmatprep.subr.mxu0 0.0
    %953 = vmatpush1.msra.mxu0 0.0
    %954 = vmatprep.subr.mxu0 0.0
    %955 = vmatpush1.msra.mxu0 0.0
    %956 = vmatprep.subr.mxu0 0.0
    %957 = vmatpush1.msra.mxu0 0.0
    %958 = vmatprep.subr.mxu0 0.0
    %959 = vmatpush1.msra.mxu0 0.0
    %960 = vmatprep.subr.mxu0 0.0
    %961 = vmatpush1.msra.mxu0 0.0
    %962 = vmatprep.subr.mxu0 0.0
    %963 = vmatpush1.msra.mxu0 0.0
    %964 = vmatprep.subr.mxu0 0.0
    %965 = vmatpush1.msra.mxu0 0.0
    %966 = vmatprep.subr.mxu0 0.0
    %v967 = vand.u32 %v24, 4294901760
    %v968 = vsub.f32 %v24, %v967
    %v969 = vand.u32 %v968, 4294901760
    %970 = vmatpush1.msra.mxu0 %v969
    %971 = vmatprep.subr.mxu0 0.0
    %v972 = vand.u32 %v23, 4294901760
    %v973 = vsub.f32 %v23, %v972
    %v974 = vand.u32 %v973, 4294901760
    %975 = vmatpush1.msra.mxu0 %v974
    %976 = vmatprep.subr.mxu0 0.0
    %v977 = vand.u32 %v22, 4294901760
    %v978 = vsub.f32 %v22, %v977
    %v979 = vand.u32 %v978, 4294901760
    %980 = vmatpush1.msra.mxu0 %v979
    %981 = vmatprep.subr.mxu0 0.0
    %v982 = vand.u32 %v21, 4294901760
    %v983 = vsub.f32 %v21, %v982
    %v984 = vand.u32 %v983, 4294901760
    %985 = vmatpush1.msra.mxu0 %v984
    %986 = vmatprep.subr.mxu0 0.0
    %v987 = vand.u32 %v20, 4294901760
    %v988 = vsub.f32 %v20, %v987
    %v989 = vand.u32 %v988, 4294901760
    %990 = vmatpush1.msra.mxu0 %v989
    %991 = vmatprep.subr.mxu0 0.0
    %v992 = vand.u32 %v19, 4294901760
    %v993 = vsub.f32 %v19, %v992
    %v994 = vand.u32 %v993, 4294901760
    %995 = vmatpush1.msra.mxu0 %v994
    %996 = vmatprep.subr.mxu0 0.0
    %v997 = vand.u32 %v18, 4294901760
    %v998 = vsub.f32 %v18, %v997
    %v999 = vand.u32 %v998, 4294901760
    %1000 = vmatpush1.msra.mxu0 %v999
    %1001 = vmatprep.subr.mxu0 0.0
    %v1002 = vand.u32 %v17, 4294901760
    %v1003 = vsub.f32 %v17, %v1002
    %v1004 = vand.u32 %v1003, 4294901760
    %1005 = vmatpush1.msra.mxu0 %v1004
    %1006 = vmatprep.subr.mxu0 0.0
    %1007 = vmatpush2.msra.mxu0 0.0
    %1008 = vmatprep.subr.mxu0 0.0
    %1009 = vmatpush2.msra.mxu0 0.0
    %1010 = vmatprep.subr.mxu0 0.0
    %1011 = vmatpush2.msra.mxu0 0.0
    %1012 = vmatprep.subr.mxu0 0.0
    %1013 = vmatpush2.msra.mxu0 0.0
    %1014 = vmatprep.subr.mxu0 0.0
    %1015 = vmatpush2.msra.mxu0 0.0
    %1016 = vmatprep.subr.mxu0 0.0
    %1017 = vmatpush2.msra.mxu0 0.0
    %1018 = vmatprep.subr.mxu0 0.0
    %1019 = vmatpush2.msra.mxu0 0.0
    %1020 = vmatprep.subr.mxu0 0.0
    %1021 = vmatpush2.msra.mxu0 0.0
    %1022 = vmatprep.subr.mxu0 0.0
    %1023 = vmatpush2.msra.mxu0 0.0
    %1024 = vmatprep.subr.mxu0 0.0
    %1025 = vmatpush2.msra.mxu0 0.0
    %1026 = vmatprep.subr.mxu0 0.0
    %1027 = vmatpush2.msra.mxu0 0.0
    %1028 = vmatprep.subr.mxu0 0.0
    %1029 = vmatpush2.msra.mxu0 0.0
    %1030 = vmatprep.subr.mxu0 0.0
    %1031 = vmatpush2.msra.mxu0 0.0
    %1032 = vmatprep.subr.mxu0 0.0
    %1033 = vmatpush2.msra.mxu0 0.0
    %1034 = vmatprep.subr.mxu0 0.0
    %1035 = vmatpush2.msra.mxu0 0.0
    %1036 = vmatprep.subr.mxu0 0.0
    %1037 = vmatpush2.msra.mxu0 0.0
    %1038 = vmatprep.mubr.f32.mxu0 0.0
    %v1039 = vand.u32 %v585, 4294901760
    %1040 = vmatmul.mubr.f32.gmra.mxu0 %v1039
    %v1041 = vpop.f32.mrf.mxu0
    %v1042 = vadd.f32 %v947, %v1041
    %v1043 = vpop.f32.mrf.mxu0
    %1044 = vdwg.mxu0
    %1045 = vmatprep.subr.mxu0 0.0
    %1046 = vmatpush1.msra.mxu0 0.0
    %1047 = vmatprep.subr.mxu0 0.0
    %1048 = vmatpush1.msra.mxu0 0.0
    %1049 = vmatprep.subr.mxu0 0.0
    %1050 = vmatpush1.msra.mxu0 0.0
    %1051 = vmatprep.subr.mxu0 0.0
    %1052 = vmatpush1.msra.mxu0 0.0
    %1053 = vmatprep.subr.mxu0 0.0
    %1054 = vmatpush1.msra.mxu0 0.0
    %1055 = vmatprep.subr.mxu0 0.0
    %1056 = vmatpush1.msra.mxu0 0.0
    %1057 = vmatprep.subr.mxu0 0.0
    %1058 = vmatpush1.msra.mxu0 0.0
    %1059 = vmatprep.subr.mxu0 0.0
    %1060 = vmatpush1.msra.mxu0 0.0
    %1061 = vmatprep.subr.mxu0 0.0
    %v1062 = vand.u32 %v24, 4294901760
    %1063 = vmatpush1.msra.mxu0 %v1062
    %1064 = vmatprep.subr.mxu0 0.0
    %v1065 = vand.u32 %v23, 4294901760
    %1066 = vmatpush1.msra.mxu0 %v1065
    %1067 = vmatprep.subr.mxu0 0.0
    %v1068 = vand.u32 %v22, 4294901760
    %1069 = vmatpush1.msra.mxu0 %v1068
    %1070 = vmatprep.subr.mxu0 0.0
    %v1071 = vand.u32 %v21, 4294901760
    %1072 = vmatpush1.msra.mxu0 %v1071
    %1073 = vmatprep.subr.mxu0 0.0
    %v1074 = vand.u32 %v20, 4294901760
    %1075 = vmatpush1.msra.mxu0 %v1074
    %1076 = vmatprep.subr.mxu0 0.0
    %v1077 = vand.u32 %v19, 4294901760
    %1078 = vmatpush1.msra.mxu0 %v1077
    %1079 = vmatprep.subr.mxu0 0.0
    %v1080 = vand.u32 %v18, 4294901760
    %1081 = vmatpush1.msra.mxu0 %v1080
    %1082 = vmatprep.subr.mxu0 0.0
    %v1083 = vand.u32 %v17, 4294901760
    %1084 = vmatpush1.msra.mxu0 %v1083
    %1085 = vmatprep.subr.mxu0 0.0
    %1086 = vmatpush2.msra.mxu0 0.0
    %1087 = vmatprep.subr.mxu0 0.0
    %1088 = vmatpush2.msra.mxu0 0.0
    %1089 = vmatprep.subr.mxu0 0.0
    %1090 = vmatpush2.msra.mxu0 0.0
    %1091 = vmatprep.subr.mxu0 0.0
    %1092 = vmatpush2.msra.mxu0 0.0
    %1093 = vmatprep.subr.mxu0 0.0
    %1094 = vmatpush2.msra.mxu0 0.0
    %1095 = vmatprep.subr.mxu0 0.0
    %1096 = vmatpush2.msra.mxu0 0.0
    %1097 = vmatprep.subr.mxu0 0.0
    %1098 = vmatpush2.msra.mxu0 0.0
    %1099 = vmatprep.subr.mxu0 0.0
    %1100 = vmatpush2.msra.mxu0 0.0
    %1101 = vmatprep.subr.mxu0 0.0
    %1102 = vmatpush2.msra.mxu0 0.0
    %1103 = vmatprep.subr.mxu0 0.0
    %1104 = vmatpush2.msra.mxu0 0.0
    %1105 = vmatprep.subr.mxu0 0.0
    %1106 = vmatpush2.msra.mxu0 0.0
    %1107 = vmatprep.subr.mxu0 0.0
    %1108 = vmatpush2.msra.mxu0 0.0
    %1109 = vmatprep.subr.mxu0 0.0
    %1110 = vmatpush2.msra.mxu0 0.0
    %1111 = vmatprep.subr.mxu0 0.0
    %1112 = vmatpush2.msra.mxu0 0.0
    %1113 = vmatprep.subr.mxu0 0.0
    %1114 = vmatpush2.msra.mxu0 0.0
    %1115 = vmatprep.subr.mxu0 0.0
    %1116 = vmatpush2.msra.mxu0 0.0
    %1117 = vmatprep.mubr.f32.mxu0 0.0
    %v1118 = vand.u32 %v585, 4294901760
    %1119 = vmatmul.mubr.f32.gmra.mxu0 %v1118
    %v1120 = vpop.f32.mrf.mxu0
    %v1121 = vadd.f32 %v1042, %v1120
    %v1122 = vpop.f32.mrf.mxu0
    %1123 = vdwg.mxu0
    %1124 = vset.pattern.permute.xlu0 2
    %1125 = vperm.xlu0 %1124, %v28
    %v1126 = vpop.permute.xlu0 %1125
    %vm1127 = vcmp.eq.s32.totalorder %v30, %v1126
    %v1128 = vsel %vm1127, 1, 0
    %v1129 = vcvt.s32.f32 %v1128
    %v1131 = vsel %vm37, %v1129, 0
    %1133 = vmatprep.subr.mxu0 0.0
    %1134 = vmatpush1.msra.mxu0 0.0
    %1135 = vmatprep.subr.mxu0 0.0
    %1136 = vmatpush1.msra.mxu0 0.0
    %1137 = vmatprep.subr.mxu0 0.0
    %1138 = vmatpush1.msra.mxu0 0.0
    %1139 = vmatprep.subr.mxu0 0.0
    %1140 = vmatpush1.msra.mxu0 0.0
    %1141 = vmatprep.subr.mxu0 0.0
    %1142 = vmatpush1.msra.mxu0 0.0
    %1143 = vmatprep.subr.mxu0 0.0
    %1144 = vmatpush1.msra.mxu0 0.0
    %1145 = vmatprep.subr.mxu0 0.0
    %1146 = vmatpush1.msra.mxu0 0.0
    %1147 = vmatprep.subr.mxu0 0.0
    %1148 = vmatpush1.msra.mxu0 0.0
    %1149 = vmatprep.subr.mxu0 0.0
    %v1150 = vand.u32 %v24, 4294901760
    %1151 = vmatpush1.msra.mxu0 %v1150
    %1152 = vmatprep.subr.mxu0 0.0
    %v1153 = vand.u32 %v23, 4294901760
    %1154 = vmatpush1.msra.mxu0 %v1153
    %1155 = vmatprep.subr.mxu0 0.0
    %v1156 = vand.u32 %v22, 4294901760
    %1157 = vmatpush1.msra.mxu0 %v1156
    %1158 = vmatprep.subr.mxu0 0.0
    %v1159 = vand.u32 %v21, 4294901760
    %1160 = vmatpush1.msra.mxu0 %v1159
    %1161 = vmatprep.subr.mxu0 0.0
    %v1162 = vand.u32 %v20, 4294901760
    %1163 = vmatpush1.msra.mxu0 %v1162
    %1164 = vmatprep.subr.mxu0 0.0
    %v1165 = vand.u32 %v19, 4294901760
    %1166 = vmatpush1.msra.mxu0 %v1165
    %1167 = vmatprep.subr.mxu0 0.0
    %v1168 = vand.u32 %v18, 4294901760
    %1169 = vmatpush1.msra.mxu0 %v1168
    %1170 = vmatprep.subr.mxu0 0.0
    %v1171 = vand.u32 %v17, 4294901760
    %1172 = vmatpush1.msra.mxu0 %v1171
    %1173 = vmatprep.subr.mxu0 0.0
    %1174 = vmatpush2.msra.mxu0 0.0
    %1175 = vmatprep.subr.mxu0 0.0
    %1176 = vmatpush2.msra.mxu0 0.0
    %1177 = vmatprep.subr.mxu0 0.0
    %1178 = vmatpush2.msra.mxu0 0.0
    %1179 = vmatprep.subr.mxu0 0.0
    %1180 = vmatpush2.msra.mxu0 0.0
    %1181 = vmatprep.subr.mxu0 0.0
    %1182 = vmatpush2.msra.mxu0 0.0
    %1183 = vmatprep.subr.mxu0 0.0
    %1184 = vmatpush2.msra.mxu0 0.0
    %1185 = vmatprep.subr.mxu0 0.0
    %1186 = vmatpush2.msra.mxu0 0.0
    %1187 = vmatprep.subr.mxu0 0.0
    %1188 = vmatpush2.msra.mxu0 0.0
    %1189 = vmatprep.subr.mxu0 0.0
    %1190 = vmatpush2.msra.mxu0 0.0
    %1191 = vmatprep.subr.mxu0 0.0
    %1192 = vmatpush2.msra.mxu0 0.0
    %1193 = vmatprep.subr.mxu0 0.0
    %1194 = vmatpush2.msra.mxu0 0.0
    %1195 = vmatprep.subr.mxu0 0.0
    %1196 = vmatpush2.msra.mxu0 0.0
    %1197 = vmatprep.subr.mxu0 0.0
    %1198 = vmatpush2.msra.mxu0 0.0
    %1199 = vmatprep.subr.mxu0 0.0
    %1200 = vmatpush2.msra.mxu0 0.0
    %1201 = vmatprep.subr.mxu0 0.0
    %1202 = vmatpush2.msra.mxu0 0.0
    %1203 = vmatprep.subr.mxu0 0.0
    %1204 = vmatpush2.msra.mxu0 0.0
    %1205 = vmatprep.mubr.f32.mxu0 0.0
    %v1206 = vand.u32 %v1131, 4294901760
    %v1207 = vsub.f32 %v1131, %v1206
    %v1208 = vand.u32 %v1207, 4294901760
    %v1209 = vsub.f32 %v1207, %v1208
    %v1210 = vand.u32 %v1209, 4294901760
    %1211 = vmatmul.mubr.f32.gmra.mxu0 %v1210
    %v1212 = vpop.f32.mrf.mxu0
    %v1213 = vadd.f32 0.0, %v1212
    %v1214 = vpop.f32.mrf.mxu0
    %1215 = vdwg.mxu0
    %1216 = vmatprep.subr.mxu0 0.0
    %1217 = vmatpush1.msra.mxu0 0.0
    %1218 = vmatprep.subr.mxu0 0.0
    %1219 = vmatpush1.msra.mxu0 0.0
    %1220 = vmatprep.subr.mxu0 0.0
    %1221 = vmatpush1.msra.mxu0 0.0
    %1222 = vmatprep.subr.mxu0 0.0
    %1223 = vmatpush1.msra.mxu0 0.0
    %1224 = vmatprep.subr.mxu0 0.0
    %1225 = vmatpush1.msra.mxu0 0.0
    %1226 = vmatprep.subr.mxu0 0.0
    %1227 = vmatpush1.msra.mxu0 0.0
    %1228 = vmatprep.subr.mxu0 0.0
    %1229 = vmatpush1.msra.mxu0 0.0
    %1230 = vmatprep.subr.mxu0 0.0
    %1231 = vmatpush1.msra.mxu0 0.0
    %1232 = vmatprep.subr.mxu0 0.0
    %v1233 = vand.u32 %v24, 4294901760
    %v1234 = vsub.f32 %v24, %v1233
    %v1235 = vand.u32 %v1234, 4294901760
    %v1236 = vsub.f32 %v1234, %v1235
    %v1237 = vand.u32 %v1236, 4294901760
    %1238 = vmatpush1.msra.mxu0 %v1237
    %1239 = vmatprep.subr.mxu0 0.0
    %v1240 = vand.u32 %v23, 4294901760
    %v1241 = vsub.f32 %v23, %v1240
    %v1242 = vand.u32 %v1241, 4294901760
    %v1243 = vsub.f32 %v1241, %v1242
    %v1244 = vand.u32 %v1243, 4294901760
    %1245 = vmatpush1.msra.mxu0 %v1244
    %1246 = vmatprep.subr.mxu0 0.0
    %v1247 = vand.u32 %v22, 4294901760
    %v1248 = vsub.f32 %v22, %v1247
    %v1249 = vand.u32 %v1248, 4294901760
    %v1250 = vsub.f32 %v1248, %v1249
    %v1251 = vand.u32 %v1250, 4294901760
    %1252 = vmatpush1.msra.mxu0 %v1251
    %1253 = vmatprep.subr.mxu0 0.0
    %v1254 = vand.u32 %v21, 4294901760
    %v1255 = vsub.f32 %v21, %v1254
    %v1256 = vand.u32 %v1255, 4294901760
    %v1257 = vsub.f32 %v1255, %v1256
    %v1258 = vand.u32 %v1257, 4294901760
    %1259 = vmatpush1.msra.mxu0 %v1258
    %1260 = vmatprep.subr.mxu0 0.0
    %v1261 = vand.u32 %v20, 4294901760
    %v1262 = vsub.f32 %v20, %v1261
    %v1263 = vand.u32 %v1262, 4294901760
    %v1264 = vsub.f32 %v1262, %v1263
    %v1265 = vand.u32 %v1264, 4294901760
    %1266 = vmatpush1.msra.mxu0 %v1265
    %1267 = vmatprep.subr.mxu0 0.0
    %v1268 = vand.u32 %v19, 4294901760
    %v1269 = vsub.f32 %v19, %v1268
    %v1270 = vand.u32 %v1269, 4294901760
    %v1271 = vsub.f32 %v1269, %v1270
    %v1272 = vand.u32 %v1271, 4294901760
    %1273 = vmatpush1.msra.mxu0 %v1272
    %1274 = vmatprep.subr.mxu0 0.0
    %v1275 = vand.u32 %v18, 4294901760
    %v1276 = vsub.f32 %v18, %v1275
    %v1277 = vand.u32 %v1276, 4294901760
    %v1278 = vsub.f32 %v1276, %v1277
    %v1279 = vand.u32 %v1278, 4294901760
    %1280 = vmatpush1.msra.mxu0 %v1279
    %1281 = vmatprep.subr.mxu0 0.0
    %v1282 = vand.u32 %v17, 4294901760
    %v1283 = vsub.f32 %v17, %v1282
    %v1284 = vand.u32 %v1283, 4294901760
    %v1285 = vsub.f32 %v1283, %v1284
    %v1286 = vand.u32 %v1285, 4294901760
    %1287 = vmatpush1.msra.mxu0 %v1286
    %1288 = vmatprep.subr.mxu0 0.0
    %1289 = vmatpush2.msra.mxu0 0.0
    %1290 = vmatprep.subr.mxu0 0.0
    %1291 = vmatpush2.msra.mxu0 0.0
    %1292 = vmatprep.subr.mxu0 0.0
    %1293 = vmatpush2.msra.mxu0 0.0
    %1294 = vmatprep.subr.mxu0 0.0
    %1295 = vmatpush2.msra.mxu0 0.0
    %1296 = vmatprep.subr.mxu0 0.0
    %1297 = vmatpush2.msra.mxu0 0.0
    %1298 = vmatprep.subr.mxu0 0.0
    %1299 = vmatpush2.msra.mxu0 0.0
    %1300 = vmatprep.subr.mxu0 0.0
    %1301 = vmatpush2.msra.mxu0 0.0
    %1302 = vmatprep.subr.mxu0 0.0
    %1303 = vmatpush2.msra.mxu0 0.0
    %1304 = vmatprep.subr.mxu0 0.0
    %1305 = vmatpush2.msra.mxu0 0.0
    %1306 = vmatprep.subr.mxu0 0.0
    %1307 = vmatpush2.msra.mxu0 0.0
    %1308 = vmatprep.subr.mxu0 0.0
    %1309 = vmatpush2.msra.mxu0 0.0
    %1310 = vmatprep.subr.mxu0 0.0
    %1311 = vmatpush2.msra.mxu0 0.0
    %1312 = vmatprep.subr.mxu0 0.0
    %1313 = vmatpush2.msra.mxu0 0.0
    %1314 = vmatprep.subr.mxu0 0.0
    %1315 = vmatpush2.msra.mxu0 0.0
    %1316 = vmatprep.subr.mxu0 0.0
    %1317 = vmatpush2.msra.mxu0 0.0
    %1318 = vmatprep.subr.mxu0 0.0
    %1319 = vmatpush2.msra.mxu0 0.0
    %1320 = vmatprep.mubr.f32.mxu0 0.0
    %v1321 = vand.u32 %v1131, 4294901760
    %1322 = vmatmul.mubr.f32.gmra.mxu0 %v1321
    %v1323 = vpop.f32.mrf.mxu0
    %v1324 = vadd.f32 %v1213, %v1323
    %v1325 = vpop.f32.mrf.mxu0
    %1326 = vdwg.mxu0
    %1327 = vmatprep.subr.mxu0 0.0
    %1328 = vmatpush1.msra.mxu0 0.0
    %1329 = vmatprep.subr.mxu0 0.0
    %1330 = vmatpush1.msra.mxu0 0.0
    %1331 = vmatprep.subr.mxu0 0.0
    %1332 = vmatpush1.msra.mxu0 0.0
    %1333 = vmatprep.subr.mxu0 0.0
    %1334 = vmatpush1.msra.mxu0 0.0
    %1335 = vmatprep.subr.mxu0 0.0
    %1336 = vmatpush1.msra.mxu0 0.0
    %1337 = vmatprep.subr.mxu0 0.0
    %1338 = vmatpush1.msra.mxu0 0.0
    %1339 = vmatprep.subr.mxu0 0.0
    %1340 = vmatpush1.msra.mxu0 0.0
    %1341 = vmatprep.subr.mxu0 0.0
    %1342 = vmatpush1.msra.mxu0 0.0
    %1343 = vmatprep.subr.mxu0 0.0
    %v1344 = vand.u32 %v24, 4294901760
    %v1345 = vsub.f32 %v24, %v1344
    %1346 = vmatpush1.msra.mxu0 %v1345
    %1347 = vmatprep.subr.mxu0 0.0
    %v1348 = vand.u32 %v23, 4294901760
    %v1349 = vsub.f32 %v23, %v1348
    %1350 = vmatpush1.msra.mxu0 %v1349
    %1351 = vmatprep.subr.mxu0 0.0
    %v1352 = vand.u32 %v22, 4294901760
    %v1353 = vsub.f32 %v22, %v1352
    %1354 = vmatpush1.msra.mxu0 %v1353
    %1355 = vmatprep.subr.mxu0 0.0
    %v1356 = vand.u32 %v21, 4294901760
    %v1357 = vsub.f32 %v21, %v1356
    %1358 = vmatpush1.msra.mxu0 %v1357
    %1359 = vmatprep.subr.mxu0 0.0
    %v1360 = vand.u32 %v20, 4294901760
    %v1361 = vsub.f32 %v20, %v1360
    %1362 = vmatpush1.msra.mxu0 %v1361
    %1363 = vmatprep.subr.mxu0 0.0
    %v1364 = vand.u32 %v19, 4294901760
    %v1365 = vsub.f32 %v19, %v1364
    %1366 = vmatpush1.msra.mxu0 %v1365
    %1367 = vmatprep.subr.mxu0 0.0
    %v1368 = vand.u32 %v18, 4294901760
    %v1369 = vsub.f32 %v18, %v1368
    %1370 = vmatpush1.msra.mxu0 %v1369
    %1371 = vmatprep.subr.mxu0 0.0
    %v1372 = vand.u32 %v17, 4294901760
    %v1373 = vsub.f32 %v17, %v1372
    %1374 = vmatpush1.msra.mxu0 %v1373
    %1375 = vmatprep.subr.mxu0 0.0
    %1376 = vmatpush2.msra.mxu0 0.0
    %1377 = vmatprep.subr.mxu0 0.0
    %1378 = vmatpush2.msra.mxu0 0.0
    %1379 = vmatprep.subr.mxu0 0.0
    %1380 = vmatpush2.msra.mxu0 0.0
    %1381 = vmatprep.subr.mxu0 0.0
    %1382 = vmatpush2.msra.mxu0 0.0
    %1383 = vmatprep.subr.mxu0 0.0
    %1384 = vmatpush2.msra.mxu0 0.0
    %1385 = vmatprep.subr.mxu0 0.0
    %1386 = vmatpush2.msra.mxu0 0.0
    %1387 = vmatprep.subr.mxu0 0.0
    %1388 = vmatpush2.msra.mxu0 0.0
    %1389 = vmatprep.subr.mxu0 0.0
    %1390 = vmatpush2.msra.mxu0 0.0
    %1391 = vmatprep.subr.mxu0 0.0
    %1392 = vmatpush2.msra.mxu0 0.0
    %1393 = vmatprep.subr.mxu0 0.0
    %1394 = vmatpush2.msra.mxu0 0.0
    %1395 = vmatprep.subr.mxu0 0.0
    %1396 = vmatpush2.msra.mxu0 0.0
    %1397 = vmatprep.subr.mxu0 0.0
    %1398 = vmatpush2.msra.mxu0 0.0
    %1399 = vmatprep.subr.mxu0 0.0
    %1400 = vmatpush2.msra.mxu0 0.0
    %1401 = vmatprep.subr.mxu0 0.0
    %1402 = vmatpush2.msra.mxu0 0.0
    %1403 = vmatprep.subr.mxu0 0.0
    %1404 = vmatpush2.msra.mxu0 0.0
    %1405 = vmatprep.subr.mxu0 0.0
    %1406 = vmatpush2.msra.mxu0 0.0
    %1407 = vmatprep.mubr.f32.mxu0 0.0
    %v1408 = vand.u32 %v1131, 4294901760
    %v1409 = vsub.f32 %v1131, %v1408
    %1410 = vmatmul.mubr.f32.gmra.mxu0 %v1409
    %v1411 = vpop.f32.mrf.mxu0
    %v1412 = vadd.f32 %v1324, %v1411
    %v1413 = vpop.f32.mrf.mxu0
    %1414 = vdwg.mxu0
    %1415 = vmatprep.subr.mxu0 0.0
    %1416 = vmatpush1.msra.mxu0 0.0
    %1417 = vmatprep.subr.mxu0 0.0
    %1418 = vmatpush1.msra.mxu0 0.0
    %1419 = vmatprep.subr.mxu0 0.0
    %1420 = vmatpush1.msra.mxu0 0.0
    %1421 = vmatprep.subr.mxu0 0.0
    %1422 = vmatpush1.msra.mxu0 0.0
    %1423 = vmatprep.subr.mxu0 0.0
    %1424 = vmatpush1.msra.mxu0 0.0
    %1425 = vmatprep.subr.mxu0 0.0
    %1426 = vmatpush1.msra.mxu0 0.0
    %1427 = vmatprep.subr.mxu0 0.0
    %1428 = vmatpush1.msra.mxu0 0.0
    %1429 = vmatprep.subr.mxu0 0.0
    %1430 = vmatpush1.msra.mxu0 0.0
    %1431 = vmatprep.subr.mxu0 0.0
    %v1432 = vand.u32 %v24, 4294901760
    %1433 = vmatpush1.msra.mxu0 %v1432
    %1434 = vmatprep.subr.mxu0 0.0
    %v1435 = vand.u32 %v23, 4294901760
    %1436 = vmatpush1.msra.mxu0 %v1435
    %1437 = vmatprep.subr.mxu0 0.0
    %v1438 = vand.u32 %v22, 4294901760
    %1439 = vmatpush1.msra.mxu0 %v1438
    %1440 = vmatprep.subr.mxu0 0.0
    %v1441 = vand.u32 %v21, 4294901760
    %1442 = vmatpush1.msra.mxu0 %v1441
    %1443 = vmatprep.subr.mxu0 0.0
    %v1444 = vand.u32 %v20, 4294901760
    %1445 = vmatpush1.msra.mxu0 %v1444
    %1446 = vmatprep.subr.mxu0 0.0
    %v1447 = vand.u32 %v19, 4294901760
    %1448 = vmatpush1.msra.mxu0 %v1447
    %1449 = vmatprep.subr.mxu0 0.0
    %v1450 = vand.u32 %v18, 4294901760
    %1451 = vmatpush1.msra.mxu0 %v1450
    %1452 = vmatprep.subr.mxu0 0.0
    %v1453 = vand.u32 %v17, 4294901760
    %1454 = vmatpush1.msra.mxu0 %v1453
    %1455 = vmatprep.subr.mxu0 0.0
    %1456 = vmatpush2.msra.mxu0 0.0
    %1457 = vmatprep.subr.mxu0 0.0
    %1458 = vmatpush2.msra.mxu0 0.0
    %1459 = vmatprep.subr.mxu0 0.0
    %1460 = vmatpush2.msra.mxu0 0.0
    %1461 = vmatprep.subr.mxu0 0.0
    %1462 = vmatpush2.msra.mxu0 0.0
    %1463 = vmatprep.subr.mxu0 0.0
    %1464 = vmatpush2.msra.mxu0 0.0
    %1465 = vmatprep.subr.mxu0 0.0
    %1466 = vmatpush2.msra.mxu0 0.0
    %1467 = vmatprep.subr.mxu0 0.0
    %1468 = vmatpush2.msra.mxu0 0.0
    %1469 = vmatprep.subr.mxu0 0.0
    %1470 = vmatpush2.msra.mxu0 0.0
    %1471 = vmatprep.subr.mxu0 0.0
    %1472 = vmatpush2.msra.mxu0 0.0
    %1473 = vmatprep.subr.mxu0 0.0
    %1474 = vmatpush2.msra.mxu0 0.0
    %1475 = vmatprep.subr.mxu0 0.0
    %1476 = vmatpush2.msra.mxu0 0.0
    %1477 = vmatprep.subr.mxu0 0.0
    %1478 = vmatpush2.msra.mxu0 0.0
    %1479 = vmatprep.subr.mxu0 0.0
    %1480 = vmatpush2.msra.mxu0 0.0
    %1481 = vmatprep.subr.mxu0 0.0
    %1482 = vmatpush2.msra.mxu0 0.0
    %1483 = vmatprep.subr.mxu0 0.0
    %1484 = vmatpush2.msra.mxu0 0.0
    %1485 = vmatprep.subr.mxu0 0.0
    %1486 = vmatpush2.msra.mxu0 0.0
    %1487 = vmatprep.mubr.f32.mxu0 0.0
    %v1488 = vand.u32 %v1131, 4294901760
    %v1489 = vsub.f32 %v1131, %v1488
    %v1490 = vand.u32 %v1489, 4294901760
    %1491 = vmatmul.mubr.f32.gmra.mxu0 %v1490
    %v1492 = vpop.f32.mrf.mxu0
    %v1493 = vadd.f32 %v1412, %v1492
    %v1494 = vpop.f32.mrf.mxu0
    %1495 = vdwg.mxu0
    %1496 = vmatprep.subr.mxu0 0.0
    %1497 = vmatpush1.msra.mxu0 0.0
    %1498 = vmatprep.subr.mxu0 0.0
    %1499 = vmatpush1.msra.mxu0 0.0
    %1500 = vmatprep.subr.mxu0 0.0
    %1501 = vmatpush1.msra.mxu0 0.0
    %1502 = vmatprep.subr.mxu0 0.0
    %1503 = vmatpush1.msra.mxu0 0.0
    %1504 = vmatprep.subr.mxu0 0.0
    %1505 = vmatpush1.msra.mxu0 0.0
    %1506 = vmatprep.subr.mxu0 0.0
    %1507 = vmatpush1.msra.mxu0 0.0
    %1508 = vmatprep.subr.mxu0 0.0
    %1509 = vmatpush1.msra.mxu0 0.0
    %1510 = vmatprep.subr.mxu0 0.0
    %1511 = vmatpush1.msra.mxu0 0.0
    %1512 = vmatprep.subr.mxu0 0.0
    %v1513 = vand.u32 %v24, 4294901760
    %v1514 = vsub.f32 %v24, %v1513
    %v1515 = vand.u32 %v1514, 4294901760
    %1516 = vmatpush1.msra.mxu0 %v1515
    %1517 = vmatprep.subr.mxu0 0.0
    %v1518 = vand.u32 %v23, 4294901760
    %v1519 = vsub.f32 %v23, %v1518
    %v1520 = vand.u32 %v1519, 4294901760
    %1521 = vmatpush1.msra.mxu0 %v1520
    %1522 = vmatprep.subr.mxu0 0.0
    %v1523 = vand.u32 %v22, 4294901760
    %v1524 = vsub.f32 %v22, %v1523
    %v1525 = vand.u32 %v1524, 4294901760
    %1526 = vmatpush1.msra.mxu0 %v1525
    %1527 = vmatprep.subr.mxu0 0.0
    %v1528 = vand.u32 %v21, 4294901760
    %v1529 = vsub.f32 %v21, %v1528
    %v1530 = vand.u32 %v1529, 4294901760
    %1531 = vmatpush1.msra.mxu0 %v1530
    %1532 = vmatprep.subr.mxu0 0.0
    %v1533 = vand.u32 %v20, 4294901760
    %v1534 = vsub.f32 %v20, %v1533
    %v1535 = vand.u32 %v1534, 4294901760
    %1536 = vmatpush1.msra.mxu0 %v1535
    %1537 = vmatprep.subr.mxu0 0.0
    %v1538 = vand.u32 %v19, 4294901760
    %v1539 = vsub.f32 %v19, %v1538
    %v1540 = vand.u32 %v1539, 4294901760
    %1541 = vmatpush1.msra.mxu0 %v1540
    %1542 = vmatprep.subr.mxu0 0.0
    %v1543 = vand.u32 %v18, 4294901760
    %v1544 = vsub.f32 %v18, %v1543
    %v1545 = vand.u32 %v1544, 4294901760
    %1546 = vmatpush1.msra.mxu0 %v1545
    %1547 = vmatprep.subr.mxu0 0.0
    %v1548 = vand.u32 %v17, 4294901760
    %v1549 = vsub.f32 %v17, %v1548
    %v1550 = vand.u32 %v1549, 4294901760
    %1551 = vmatpush1.msra.mxu0 %v1550
    %1552 = vmatprep.subr.mxu0 0.0
    %1553 = vmatpush2.msra.mxu0 0.0
    %1554 = vmatprep.subr.mxu0 0.0
    %1555 = vmatpush2.msra.mxu0 0.0
    %1556 = vmatprep.subr.mxu0 0.0
    %1557 = vmatpush2.msra.mxu0 0.0
    %1558 = vmatprep.subr.mxu0 0.0
    %1559 = vmatpush2.msra.mxu0 0.0
    %1560 = vmatprep.subr.mxu0 0.0
    %1561 = vmatpush2.msra.mxu0 0.0
    %1562 = vmatprep.subr.mxu0 0.0
    %1563 = vmatpush2.msra.mxu0 0.0
    %1564 = vmatprep.subr.mxu0 0.0
    %1565 = vmatpush2.msra.mxu0 0.0
    %1566 = vmatprep.subr.mxu0 0.0
    %1567 = vmatpush2.msra.mxu0 0.0
    %1568 = vmatprep.subr.mxu0 0.0
    %1569 = vmatpush2.msra.mxu0 0.0
    %1570 = vmatprep.subr.mxu0 0.0
    %1571 = vmatpush2.msra.mxu0 0.0
    %1572 = vmatprep.subr.mxu0 0.0
    %1573 = vmatpush2.msra.mxu0 0.0
    %1574 = vmatprep.subr.mxu0 0.0
    %1575 = vmatpush2.msra.mxu0 0.0
    %1576 = vmatprep.subr.mxu0 0.0
    %1577 = vmatpush2.msra.mxu0 0.0
    %1578 = vmatprep.subr.mxu0 0.0
    %1579 = vmatpush2.msra.mxu0 0.0
    %1580 = vmatprep.subr.mxu0 0.0
    %1581 = vmatpush2.msra.mxu0 0.0
    %1582 = vmatprep.subr.mxu0 0.0
    %1583 = vmatpush2.msra.mxu0 0.0
    %1584 = vmatprep.mubr.f32.mxu0 0.0
    %v1585 = vand.u32 %v1131, 4294901760
    %1586 = vmatmul.mubr.f32.gmra.mxu0 %v1585
    %v1587 = vpop.f32.mrf.mxu0
    %v1588 = vadd.f32 %v1493, %v1587
    %v1589 = vpop.f32.mrf.mxu0
    %1590 = vdwg.mxu0
    %1591 = vmatprep.subr.mxu0 0.0
    %1592 = vmatpush1.msra.mxu0 0.0
    %1593 = vmatprep.subr.mxu0 0.0
    %1594 = vmatpush1.msra.mxu0 0.0
    %1595 = vmatprep.subr.mxu0 0.0
    %1596 = vmatpush1.msra.mxu0 0.0
    %1597 = vmatprep.subr.mxu0 0.0
    %1598 = vmatpush1.msra.mxu0 0.0
    %1599 = vmatprep.subr.mxu0 0.0
    %1600 = vmatpush1.msra.mxu0 0.0
    %1601 = vmatprep.subr.mxu0 0.0
    %1602 = vmatpush1.msra.mxu0 0.0
    %1603 = vmatprep.subr.mxu0 0.0
    %1604 = vmatpush1.msra.mxu0 0.0
    %1605 = vmatprep.subr.mxu0 0.0
    %1606 = vmatpush1.msra.mxu0 0.0
    %1607 = vmatprep.subr.mxu0 0.0
    %v1608 = vand.u32 %v24, 4294901760
    %1609 = vmatpush1.msra.mxu0 %v1608
    %1610 = vmatprep.subr.mxu0 0.0
    %v1611 = vand.u32 %v23, 4294901760
    %1612 = vmatpush1.msra.mxu0 %v1611
    %1613 = vmatprep.subr.mxu0 0.0
    %v1614 = vand.u32 %v22, 4294901760
    %1615 = vmatpush1.msra.mxu0 %v1614
    %1616 = vmatprep.subr.mxu0 0.0
    %v1617 = vand.u32 %v21, 4294901760
    %1618 = vmatpush1.msra.mxu0 %v1617
    %1619 = vmatprep.subr.mxu0 0.0
    %v1620 = vand.u32 %v20, 4294901760
    %1621 = vmatpush1.msra.mxu0 %v1620
    %1622 = vmatprep.subr.mxu0 0.0
    %v1623 = vand.u32 %v19, 4294901760
    %1624 = vmatpush1.msra.mxu0 %v1623
    %1625 = vmatprep.subr.mxu0 0.0
    %v1626 = vand.u32 %v18, 4294901760
    %1627 = vmatpush1.msra.mxu0 %v1626
    %1628 = vmatprep.subr.mxu0 0.0
    %v1629 = vand.u32 %v17, 4294901760
    %1630 = vmatpush1.msra.mxu0 %v1629
    %1631 = vmatprep.subr.mxu0 0.0
    %1632 = vmatpush2.msra.mxu0 0.0
    %1633 = vmatprep.subr.mxu0 0.0
    %1634 = vmatpush2.msra.mxu0 0.0
    %1635 = vmatprep.subr.mxu0 0.0
    %1636 = vmatpush2.msra.mxu0 0.0
    %1637 = vmatprep.subr.mxu0 0.0
    %1638 = vmatpush2.msra.mxu0 0.0
    %1639 = vmatprep.subr.mxu0 0.0
    %1640 = vmatpush2.msra.mxu0 0.0
    %1641 = vmatprep.subr.mxu0 0.0
    %1642 = vmatpush2.msra.mxu0 0.0
    %1643 = vmatprep.subr.mxu0 0.0
    %1644 = vmatpush2.msra.mxu0 0.0
    %1645 = vmatprep.subr.mxu0 0.0
    %1646 = vmatpush2.msra.mxu0 0.0
    %1647 = vmatprep.subr.mxu0 0.0
    %1648 = vmatpush2.msra.mxu0 0.0
    %1649 = vmatprep.subr.mxu0 0.0
    %1650 = vmatpush2.msra.mxu0 0.0
    %1651 = vmatprep.subr.mxu0 0.0
    %1652 = vmatpush2.msra.mxu0 0.0
    %1653 = vmatprep.subr.mxu0 0.0
    %1654 = vmatpush2.msra.mxu0 0.0
    %1655 = vmatprep.subr.mxu0 0.0
    %1656 = vmatpush2.msra.mxu0 0.0
    %1657 = vmatprep.subr.mxu0 0.0
    %1658 = vmatpush2.msra.mxu0 0.0
    %1659 = vmatprep.subr.mxu0 0.0
    %1660 = vmatpush2.msra.mxu0 0.0
    %1661 = vmatprep.subr.mxu0 0.0
    %1662 = vmatpush2.msra.mxu0 0.0
    %1663 = vmatprep.mubr.f32.mxu0 0.0
    %v1664 = vand.u32 %v1131, 4294901760
    %1665 = vmatmul.mubr.f32.gmra.mxu0 %v1664
    %v1666 = vpop.f32.mrf.mxu0
    %v1667 = vadd.f32 %v1588, %v1666
    %v1668 = vpop.f32.mrf.mxu0
    %1669 = vdwg.mxu0
    %1670 = vset.pattern.permute.xlu0 3
    %1671 = vperm.xlu0 %1670, %v28
    %v1672 = vpop.permute.xlu0 %1671
    %vm1673 = vcmp.eq.s32.totalorder %v30, %v1672
    %v1674 = vsel %vm1673, 1, 0
    %v1675 = vcvt.s32.f32 %v1674
    %v1677 = vsel %vm37, %v1675, 0
    %1679 = vmatprep.subr.mxu0 0.0
    %1680 = vmatpush1.msra.mxu0 0.0
    %1681 = vmatprep.subr.mxu0 0.0
    %1682 = vmatpush1.msra.mxu0 0.0
    %1683 = vmatprep.subr.mxu0 0.0
    %1684 = vmatpush1.msra.mxu0 0.0
    %1685 = vmatprep.subr.mxu0 0.0
    %1686 = vmatpush1.msra.mxu0 0.0
    %1687 = vmatprep.subr.mxu0 0.0
    %1688 = vmatpush1.msra.mxu0 0.0
    %1689 = vmatprep.subr.mxu0 0.0
    %1690 = vmatpush1.msra.mxu0 0.0
    %1691 = vmatprep.subr.mxu0 0.0
    %1692 = vmatpush1.msra.mxu0 0.0
    %1693 = vmatprep.subr.mxu0 0.0
    %1694 = vmatpush1.msra.mxu0 0.0
    %1695 = vmatprep.subr.mxu0 0.0
    %v1696 = vand.u32 %v24, 4294901760
    %1697 = vmatpush1.msra.mxu0 %v1696
    %1698 = vmatprep.subr.mxu0 0.0
    %v1699 = vand.u32 %v23, 4294901760
    %1700 = vmatpush1.msra.mxu0 %v1699
    %1701 = vmatprep.subr.mxu0 0.0
    %v1702 = vand.u32 %v22, 4294901760
    %1703 = vmatpush1.msra.mxu0 %v1702
    %1704 = vmatprep.subr.mxu0 0.0
    %v1705 = vand.u32 %v21, 4294901760
    %1706 = vmatpush1.msra.mxu0 %v1705
    %1707 = vmatprep.subr.mxu0 0.0
    %v1708 = vand.u32 %v20, 4294901760
    %1709 = vmatpush1.msra.mxu0 %v1708
    %1710 = vmatprep.subr.mxu0 0.0
    %v1711 = vand.u32 %v19, 4294901760
    %1712 = vmatpush1.msra.mxu0 %v1711
    %1713 = vmatprep.subr.mxu0 0.0
    %v1714 = vand.u32 %v18, 4294901760
    %1715 = vmatpush1.msra.mxu0 %v1714
    %1716 = vmatprep.subr.mxu0 0.0
    %v1717 = vand.u32 %v17, 4294901760
    %1718 = vmatpush1.msra.mxu0 %v1717
    %1719 = vmatprep.subr.mxu0 0.0
    %1720 = vmatpush2.msra.mxu0 0.0
    %1721 = vmatprep.subr.mxu0 0.0
    %1722 = vmatpush2.msra.mxu0 0.0
    %1723 = vmatprep.subr.mxu0 0.0
    %1724 = vmatpush2.msra.mxu0 0.0
    %1725 = vmatprep.subr.mxu0 0.0
    %1726 = vmatpush2.msra.mxu0 0.0
    %1727 = vmatprep.subr.mxu0 0.0
    %1728 = vmatpush2.msra.mxu0 0.0
    %1729 = vmatprep.subr.mxu0 0.0
    %1730 = vmatpush2.msra.mxu0 0.0
    %1731 = vmatprep.subr.mxu0 0.0
    %1732 = vmatpush2.msra.mxu0 0.0
    %1733 = vmatprep.subr.mxu0 0.0
    %1734 = vmatpush2.msra.mxu0 0.0
    %1735 = vmatprep.subr.mxu0 0.0
    %1736 = vmatpush2.msra.mxu0 0.0
    %1737 = vmatprep.subr.mxu0 0.0
    %1738 = vmatpush2.msra.mxu0 0.0
    %1739 = vmatprep.subr.mxu0 0.0
    %1740 = vmatpush2.msra.mxu0 0.0
    %1741 = vmatprep.subr.mxu0 0.0
    %1742 = vmatpush2.msra.mxu0 0.0
    %1743 = vmatprep.subr.mxu0 0.0
    %1744 = vmatpush2.msra.mxu0 0.0
    %1745 = vmatprep.subr.mxu0 0.0
    %1746 = vmatpush2.msra.mxu0 0.0
    %1747 = vmatprep.subr.mxu0 0.0
    %1748 = vmatpush2.msra.mxu0 0.0
    %1749 = vmatprep.subr.mxu0 0.0
    %1750 = vmatpush2.msra.mxu0 0.0
    %1751 = vmatprep.mubr.f32.mxu0 0.0
    %v1752 = vand.u32 %v1677, 4294901760
    %v1753 = vsub.f32 %v1677, %v1752
    %v1754 = vand.u32 %v1753, 4294901760
    %v1755 = vsub.f32 %v1753, %v1754
    %v1756 = vand.u32 %v1755, 4294901760
    %1757 = vmatmul.mubr.f32.gmra.mxu0 %v1756
    %v1758 = vpop.f32.mrf.mxu0
    %v1759 = vadd.f32 0.0, %v1758
    %v1760 = vpop.f32.mrf.mxu0
    %1761 = vdwg.mxu0
    %1762 = vmatprep.subr.mxu0 0.0
    %1763 = vmatpush1.msra.mxu0 0.0
    %1764 = vmatprep.subr.mxu0 0.0
    %1765 = vmatpush1.msra.mxu0 0.0
    %1766 = vmatprep.subr.mxu0 0.0
    %1767 = vmatpush1.msra.mxu0 0.0
    %1768 = vmatprep.subr.mxu0 0.0
    %1769 = vmatpush1.msra.mxu0 0.0
    %1770 = vmatprep.subr.mxu0 0.0
    %1771 = vmatpush1.msra.mxu0 0.0
    %1772 = vmatprep.subr.mxu0 0.0
    %1773 = vmatpush1.msra.mxu0 0.0
    %1774 = vmatprep.subr.mxu0 0.0
    %1775 = vmatpush1.msra.mxu0 0.0
    %1776 = vmatprep.subr.mxu0 0.0
    %1777 = vmatpush1.msra.mxu0 0.0
    %1778 = vmatprep.subr.mxu0 0.0
    %v1779 = vand.u32 %v24, 4294901760
    %v1780 = vsub.f32 %v24, %v1779
    %v1781 = vand.u32 %v1780, 4294901760
    %v1782 = vsub.f32 %v1780, %v1781
    %v1783 = vand.u32 %v1782, 4294901760
    %1784 = vmatpush1.msra.mxu0 %v1783
    %1785 = vmatprep.subr.mxu0 0.0
    %v1786 = vand.u32 %v23, 4294901760
    %v1787 = vsub.f32 %v23, %v1786
    %v1788 = vand.u32 %v1787, 4294901760
    %v1789 = vsub.f32 %v1787, %v1788
    %v1790 = vand.u32 %v1789, 4294901760
    %1791 = vmatpush1.msra.mxu0 %v1790
    %1792 = vmatprep.subr.mxu0 0.0
    %v1793 = vand.u32 %v22, 4294901760
    %v1794 = vsub.f32 %v22, %v1793
    %v1795 = vand.u32 %v1794, 4294901760
    %v1796 = vsub.f32 %v1794, %v1795
    %v1797 = vand.u32 %v1796, 4294901760
    %1798 = vmatpush1.msra.mxu0 %v1797
    %1799 = vmatprep.subr.mxu0 0.0
    %v1800 = vand.u32 %v21, 4294901760
    %v1801 = vsub.f32 %v21, %v1800
    %v1802 = vand.u32 %v1801, 4294901760
    %v1803 = vsub.f32 %v1801, %v1802
    %v1804 = vand.u32 %v1803, 4294901760
    %1805 = vmatpush1.msra.mxu0 %v1804
    %1806 = vmatprep.subr.mxu0 0.0
    %v1807 = vand.u32 %v20, 4294901760
    %v1808 = vsub.f32 %v20, %v1807
    %v1809 = vand.u32 %v1808, 4294901760
    %v1810 = vsub.f32 %v1808, %v1809
    %v1811 = vand.u32 %v1810, 4294901760
    %1812 = vmatpush1.msra.mxu0 %v1811
    %1813 = vmatprep.subr.mxu0 0.0
    %v1814 = vand.u32 %v19, 4294901760
    %v1815 = vsub.f32 %v19, %v1814
    %v1816 = vand.u32 %v1815, 4294901760
    %v1817 = vsub.f32 %v1815, %v1816
    %v1818 = vand.u32 %v1817, 4294901760
    %1819 = vmatpush1.msra.mxu0 %v1818
    %1820 = vmatprep.subr.mxu0 0.0
    %v1821 = vand.u32 %v18, 4294901760
    %v1822 = vsub.f32 %v18, %v1821
    %v1823 = vand.u32 %v1822, 4294901760
    %v1824 = vsub.f32 %v1822, %v1823
    %v1825 = vand.u32 %v1824, 4294901760
    %1826 = vmatpush1.msra.mxu0 %v1825
    %1827 = vmatprep.subr.mxu0 0.0
    %v1828 = vand.u32 %v17, 4294901760
    %v1829 = vsub.f32 %v17, %v1828
    %v1830 = vand.u32 %v1829, 4294901760
    %v1831 = vsub.f32 %v1829, %v1830
    %v1832 = vand.u32 %v1831, 4294901760
    %1833 = vmatpush1.msra.mxu0 %v1832
    %1834 = vmatprep.subr.mxu0 0.0
    %1835 = vmatpush2.msra.mxu0 0.0
    %1836 = vmatprep.subr.mxu0 0.0
    %1837 = vmatpush2.msra.mxu0 0.0
    %1838 = vmatprep.subr.mxu0 0.0
    %1839 = vmatpush2.msra.mxu0 0.0
    %1840 = vmatprep.subr.mxu0 0.0
    %1841 = vmatpush2.msra.mxu0 0.0
    %1842 = vmatprep.subr.mxu0 0.0
    %1843 = vmatpush2.msra.mxu0 0.0
    %1844 = vmatprep.subr.mxu0 0.0
    %1845 = vmatpush2.msra.mxu0 0.0
    %1846 = vmatprep.subr.mxu0 0.0
    %1847 = vmatpush2.msra.mxu0 0.0
    %1848 = vmatprep.subr.mxu0 0.0
    %1849 = vmatpush2.msra.mxu0 0.0
    %1850 = vmatprep.subr.mxu0 0.0
    %1851 = vmatpush2.msra.mxu0 0.0
    %1852 = vmatprep.subr.mxu0 0.0
    %1853 = vmatpush2.msra.mxu0 0.0
    %1854 = vmatprep.subr.mxu0 0.0
    %1855 = vmatpush2.msra.mxu0 0.0
    %1856 = vmatprep.subr.mxu0 0.0
    %1857 = vmatpush2.msra.mxu0 0.0
    %1858 = vmatprep.subr.mxu0 0.0
    %1859 = vmatpush2.msra.mxu0 0.0
    %1860 = vmatprep.subr.mxu0 0.0
    %1861 = vmatpush2.msra.mxu0 0.0
    %1862 = vmatprep.subr.mxu0 0.0
    %1863 = vmatpush2.msra.mxu0 0.0
    %1864 = vmatprep.subr.mxu0 0.0
    %1865 = vmatpush2.msra.mxu0 0.0
    %1866 = vmatprep.mubr.f32.mxu0 0.0
    %v1867 = vand.u32 %v1677, 4294901760
    %1868 = vmatmul.mubr.f32.gmra.mxu0 %v1867
    %v1869 = vpop.f32.mrf.mxu0
    %v1870 = vadd.f32 %v1759, %v1869
    %v1871 = vpop.f32.mrf.mxu0
    %1872 = vdwg.mxu0
    %1873 = vmatprep.subr.mxu0 0.0
    %1874 = vmatpush1.msra.mxu0 0.0
    %1875 = vmatprep.subr.mxu0 0.0
    %1876 = vmatpush1.msra.mxu0 0.0
    %1877 = vmatprep.subr.mxu0 0.0
    %1878 = vmatpush1.msra.mxu0 0.0
    %1879 = vmatprep.subr.mxu0 0.0
    %1880 = vmatpush1.msra.mxu0 0.0
    %1881 = vmatprep.subr.mxu0 0.0
    %1882 = vmatpush1.msra.mxu0 0.0
    %1883 = vmatprep.subr.mxu0 0.0
    %1884 = vmatpush1.msra.mxu0 0.0
    %1885 = vmatprep.subr.mxu0 0.0
    %1886 = vmatpush1.msra.mxu0 0.0
    %1887 = vmatprep.subr.mxu0 0.0
    %1888 = vmatpush1.msra.mxu0 0.0
    %1889 = vmatprep.subr.mxu0 0.0
    %v1890 = vand.u32 %v24, 4294901760
    %v1891 = vsub.f32 %v24, %v1890
    %1892 = vmatpush1.msra.mxu0 %v1891
    %1893 = vmatprep.subr.mxu0 0.0
    %v1894 = vand.u32 %v23, 4294901760
    %v1895 = vsub.f32 %v23, %v1894
    %1896 = vmatpush1.msra.mxu0 %v1895
    %1897 = vmatprep.subr.mxu0 0.0
    %v1898 = vand.u32 %v22, 4294901760
    %v1899 = vsub.f32 %v22, %v1898
    %1900 = vmatpush1.msra.mxu0 %v1899
    %1901 = vmatprep.subr.mxu0 0.0
    %v1902 = vand.u32 %v21, 4294901760
    %v1903 = vsub.f32 %v21, %v1902
    %1904 = vmatpush1.msra.mxu0 %v1903
    %1905 = vmatprep.subr.mxu0 0.0
    %v1906 = vand.u32 %v20, 4294901760
    %v1907 = vsub.f32 %v20, %v1906
    %1908 = vmatpush1.msra.mxu0 %v1907
    %1909 = vmatprep.subr.mxu0 0.0
    %v1910 = vand.u32 %v19, 4294901760
    %v1911 = vsub.f32 %v19, %v1910
    %1912 = vmatpush1.msra.mxu0 %v1911
    %1913 = vmatprep.subr.mxu0 0.0
    %v1914 = vand.u32 %v18, 4294901760
    %v1915 = vsub.f32 %v18, %v1914
    %1916 = vmatpush1.msra.mxu0 %v1915
    %1917 = vmatprep.subr.mxu0 0.0
    %v1918 = vand.u32 %v17, 4294901760
    %v1919 = vsub.f32 %v17, %v1918
    %1920 = vmatpush1.msra.mxu0 %v1919
    %1921 = vmatprep.subr.mxu0 0.0
    %1922 = vmatpush2.msra.mxu0 0.0
    %1923 = vmatprep.subr.mxu0 0.0
    %1924 = vmatpush2.msra.mxu0 0.0
    %1925 = vmatprep.subr.mxu0 0.0
    %1926 = vmatpush2.msra.mxu0 0.0
    %1927 = vmatprep.subr.mxu0 0.0
    %1928 = vmatpush2.msra.mxu0 0.0
    %1929 = vmatprep.subr.mxu0 0.0
    %1930 = vmatpush2.msra.mxu0 0.0
    %1931 = vmatprep.subr.mxu0 0.0
    %1932 = vmatpush2.msra.mxu0 0.0
    %1933 = vmatprep.subr.mxu0 0.0
    %1934 = vmatpush2.msra.mxu0 0.0
    %1935 = vmatprep.subr.mxu0 0.0
    %1936 = vmatpush2.msra.mxu0 0.0
    %1937 = vmatprep.subr.mxu0 0.0
    %1938 = vmatpush2.msra.mxu0 0.0
    %1939 = vmatprep.subr.mxu0 0.0
    %1940 = vmatpush2.msra.mxu0 0.0
    %1941 = vmatprep.subr.mxu0 0.0
    %1942 = vmatpush2.msra.mxu0 0.0
    %1943 = vmatprep.subr.mxu0 0.0
    %1944 = vmatpush2.msra.mxu0 0.0
    %1945 = vmatprep.subr.mxu0 0.0
    %1946 = vmatpush2.msra.mxu0 0.0
    %1947 = vmatprep.subr.mxu0 0.0
    %1948 = vmatpush2.msra.mxu0 0.0
    %1949 = vmatprep.subr.mxu0 0.0
    %1950 = vmatpush2.msra.mxu0 0.0
    %1951 = vmatprep.subr.mxu0 0.0
    %1952 = vmatpush2.msra.mxu0 0.0
    %1953 = vmatprep.mubr.f32.mxu0 0.0
    %v1954 = vand.u32 %v1677, 4294901760
    %v1955 = vsub.f32 %v1677, %v1954
    %1956 = vmatmul.mubr.f32.gmra.mxu0 %v1955
    %v1957 = vpop.f32.mrf.mxu0
    %v1958 = vadd.f32 %v1870, %v1957
    %v1959 = vpop.f32.mrf.mxu0
    %1960 = vdwg.mxu0
    %1961 = vmatprep.subr.mxu0 0.0
    %1962 = vmatpush1.msra.mxu0 0.0
    %1963 = vmatprep.subr.mxu0 0.0
    %1964 = vmatpush1.msra.mxu0 0.0
    %1965 = vmatprep.subr.mxu0 0.0
    %1966 = vmatpush1.msra.mxu0 0.0
    %1967 = vmatprep.subr.mxu0 0.0
    %1968 = vmatpush1.msra.mxu0 0.0
    %1969 = vmatprep.subr.mxu0 0.0
    %1970 = vmatpush1.msra.mxu0 0.0
    %1971 = vmatprep.subr.mxu0 0.0
    %1972 = vmatpush1.msra.mxu0 0.0
    %1973 = vmatprep.subr.mxu0 0.0
    %1974 = vmatpush1.msra.mxu0 0.0
    %1975 = vmatprep.subr.mxu0 0.0
    %1976 = vmatpush1.msra.mxu0 0.0
    %1977 = vmatprep.subr.mxu0 0.0
    %v1978 = vand.u32 %v24, 4294901760
    %1979 = vmatpush1.msra.mxu0 %v1978
    %1980 = vmatprep.subr.mxu0 0.0
    %v1981 = vand.u32 %v23, 4294901760
    %1982 = vmatpush1.msra.mxu0 %v1981
    %1983 = vmatprep.subr.mxu0 0.0
    %v1984 = vand.u32 %v22, 4294901760
    %1985 = vmatpush1.msra.mxu0 %v1984
    %1986 = vmatprep.subr.mxu0 0.0
    %v1987 = vand.u32 %v21, 4294901760
    %1988 = vmatpush1.msra.mxu0 %v1987
    %1989 = vmatprep.subr.mxu0 0.0
    %v1990 = vand.u32 %v20, 4294901760
    %1991 = vmatpush1.msra.mxu0 %v1990
    %1992 = vmatprep.subr.mxu0 0.0
    %v1993 = vand.u32 %v19, 4294901760
    %1994 = vmatpush1.msra.mxu0 %v1993
    %1995 = vmatprep.subr.mxu0 0.0
    %v1996 = vand.u32 %v18, 4294901760
    %1997 = vmatpush1.msra.mxu0 %v1996
    %1998 = vmatprep.subr.mxu0 0.0
    %v1999 = vand.u32 %v17, 4294901760
    %2000 = vmatpush1.msra.mxu0 %v1999
    %2001 = vmatprep.subr.mxu0 0.0
    %2002 = vmatpush2.msra.mxu0 0.0
    %2003 = vmatprep.subr.mxu0 0.0
    %2004 = vmatpush2.msra.mxu0 0.0
    %2005 = vmatprep.subr.mxu0 0.0
    %2006 = vmatpush2.msra.mxu0 0.0
    %2007 = vmatprep.subr.mxu0 0.0
    %2008 = vmatpush2.msra.mxu0 0.0
    %2009 = vmatprep.subr.mxu0 0.0
    %2010 = vmatpush2.msra.mxu0 0.0
    %2011 = vmatprep.subr.mxu0 0.0
    %2012 = vmatpush2.msra.mxu0 0.0
    %2013 = vmatprep.subr.mxu0 0.0
    %2014 = vmatpush2.msra.mxu0 0.0
    %2015 = vmatprep.subr.mxu0 0.0
    %2016 = vmatpush2.msra.mxu0 0.0
    %2017 = vmatprep.subr.mxu0 0.0
    %2018 = vmatpush2.msra.mxu0 0.0
    %2019 = vmatprep.subr.mxu0 0.0
    %2020 = vmatpush2.msra.mxu0 0.0
    %2021 = vmatprep.subr.mxu0 0.0
    %2022 = vmatpush2.msra.mxu0 0.0
    %2023 = vmatprep.subr.mxu0 0.0
    %2024 = vmatpush2.msra.mxu0 0.0
    %2025 = vmatprep.subr.mxu0 0.0
    %2026 = vmatpush2.msra.mxu0 0.0
    %2027 = vmatprep.subr.mxu0 0.0
    %2028 = vmatpush2.msra.mxu0 0.0
    %2029 = vmatprep.subr.mxu0 0.0
    %2030 = vmatpush2.msra.mxu0 0.0
    %2031 = vmatprep.subr.mxu0 0.0
    %2032 = vmatpush2.msra.mxu0 0.0
    %2033 = vmatprep.mubr.f32.mxu0 0.0
    %v2034 = vand.u32 %v1677, 4294901760
    %v2035 = vsub.f32 %v1677, %v2034
    %v2036 = vand.u32 %v2035, 4294901760
    %2037 = vmatmul.mubr.f32.gmra.mxu0 %v2036
    %v2038 = vpop.f32.mrf.mxu0
    %v2039 = vadd.f32 %v1958, %v2038
    %v2040 = vpop.f32.mrf.mxu0
    %2041 = vdwg.mxu0
    %2042 = vmatprep.subr.mxu0 0.0
    %2043 = vmatpush1.msra.mxu0 0.0
    %2044 = vmatprep.subr.mxu0 0.0
    %2045 = vmatpush1.msra.mxu0 0.0
    %2046 = vmatprep.subr.mxu0 0.0
    %2047 = vmatpush1.msra.mxu0 0.0
    %2048 = vmatprep.subr.mxu0 0.0
    %2049 = vmatpush1.msra.mxu0 0.0
    %2050 = vmatprep.subr.mxu0 0.0
    %2051 = vmatpush1.msra.mxu0 0.0
    %2052 = vmatprep.subr.mxu0 0.0
    %2053 = vmatpush1.msra.mxu0 0.0
    %2054 = vmatprep.subr.mxu0 0.0
    %2055 = vmatpush1.msra.mxu0 0.0
    %2056 = vmatprep.subr.mxu0 0.0
    %2057 = vmatpush1.msra.mxu0 0.0
    %2058 = vmatprep.subr.mxu0 0.0
    %v2059 = vand.u32 %v24, 4294901760
    %v2060 = vsub.f32 %v24, %v2059
    %v2061 = vand.u32 %v2060, 4294901760
    %2062 = vmatpush1.msra.mxu0 %v2061
    %2063 = vmatprep.subr.mxu0 0.0
    %v2064 = vand.u32 %v23, 4294901760
    %v2065 = vsub.f32 %v23, %v2064
    %v2066 = vand.u32 %v2065, 4294901760
    %2067 = vmatpush1.msra.mxu0 %v2066
    %2068 = vmatprep.subr.mxu0 0.0
    %v2069 = vand.u32 %v22, 4294901760
    %v2070 = vsub.f32 %v22, %v2069
    %v2071 = vand.u32 %v2070, 4294901760
    %2072 = vmatpush1.msra.mxu0 %v2071
    %2073 = vmatprep.subr.mxu0 0.0
    %v2074 = vand.u32 %v21, 4294901760
    %v2075 = vsub.f32 %v21, %v2074
    %v2076 = vand.u32 %v2075, 4294901760
    %2077 = vmatpush1.msra.mxu0 %v2076
    %2078 = vmatprep.subr.mxu0 0.0
    %v2079 = vand.u32 %v20, 4294901760
    %v2080 = vsub.f32 %v20, %v2079
    %v2081 = vand.u32 %v2080, 4294901760
    %2082 = vmatpush1.msra.mxu0 %v2081
    %2083 = vmatprep.subr.mxu0 0.0
    %v2084 = vand.u32 %v19, 4294901760
    %v2085 = vsub.f32 %v19, %v2084
    %v2086 = vand.u32 %v2085, 4294901760
    %2087 = vmatpush1.msra.mxu0 %v2086
    %2088 = vmatprep.subr.mxu0 0.0
    %v2089 = vand.u32 %v18, 4294901760
    %v2090 = vsub.f32 %v18, %v2089
    %v2091 = vand.u32 %v2090, 4294901760
    %2092 = vmatpush1.msra.mxu0 %v2091
    %2093 = vmatprep.subr.mxu0 0.0
    %v2094 = vand.u32 %v17, 4294901760
    %v2095 = vsub.f32 %v17, %v2094
    %v2096 = vand.u32 %v2095, 4294901760
    %2097 = vmatpush1.msra.mxu0 %v2096
    %2098 = vmatprep.subr.mxu0 0.0
    %2099 = vmatpush2.msra.mxu0 0.0
    %2100 = vmatprep.subr.mxu0 0.0
    %2101 = vmatpush2.msra.mxu0 0.0
    %2102 = vmatprep.subr.mxu0 0.0
    %2103 = vmatpush2.msra.mxu0 0.0
    %2104 = vmatprep.subr.mxu0 0.0
    %2105 = vmatpush2.msra.mxu0 0.0
    %2106 = vmatprep.subr.mxu0 0.0
    %2107 = vmatpush2.msra.mxu0 0.0
    %2108 = vmatprep.subr.mxu0 0.0
    %2109 = vmatpush2.msra.mxu0 0.0
    %2110 = vmatprep.subr.mxu0 0.0
    %2111 = vmatpush2.msra.mxu0 0.0
    %2112 = vmatprep.subr.mxu0 0.0
    %2113 = vmatpush2.msra.mxu0 0.0
    %2114 = vmatprep.subr.mxu0 0.0
    %2115 = vmatpush2.msra.mxu0 0.0
    %2116 = vmatprep.subr.mxu0 0.0
    %2117 = vmatpush2.msra.mxu0 0.0
    %2118 = vmatprep.subr.mxu0 0.0
    %2119 = vmatpush2.msra.mxu0 0.0
    %2120 = vmatprep.subr.mxu0 0.0
    %2121 = vmatpush2.msra.mxu0 0.0
    %2122 = vmatprep.subr.mxu0 0.0
    %2123 = vmatpush2.msra.mxu0 0.0
    %2124 = vmatprep.subr.mxu0 0.0
    %2125 = vmatpush2.msra.mxu0 0.0
    %2126 = vmatprep.subr.mxu0 0.0
    %2127 = vmatpush2.msra.mxu0 0.0
    %2128 = vmatprep.subr.mxu0 0.0
    %2129 = vmatpush2.msra.mxu0 0.0
    %2130 = vmatprep.mubr.f32.mxu0 0.0
    %v2131 = vand.u32 %v1677, 4294901760
    %2132 = vmatmul.mubr.f32.gmra.mxu0 %v2131
    %v2133 = vpop.f32.mrf.mxu0
    %v2134 = vadd.f32 %v2039, %v2133
    %v2135 = vpop.f32.mrf.mxu0
    %2136 = vdwg.mxu0
    %2137 = vmatprep.subr.mxu0 0.0
    %2138 = vmatpush1.msra.mxu0 0.0
    %2139 = vmatprep.subr.mxu0 0.0
    %2140 = vmatpush1.msra.mxu0 0.0
    %2141 = vmatprep.subr.mxu0 0.0
    %2142 = vmatpush1.msra.mxu0 0.0
    %2143 = vmatprep.subr.mxu0 0.0
    %2144 = vmatpush1.msra.mxu0 0.0
    %2145 = vmatprep.subr.mxu0 0.0
    %2146 = vmatpush1.msra.mxu0 0.0
    %2147 = vmatprep.subr.mxu0 0.0
    %2148 = vmatpush1.msra.mxu0 0.0
    %2149 = vmatprep.subr.mxu0 0.0
    %2150 = vmatpush1.msra.mxu0 0.0
    %2151 = vmatprep.subr.mxu0 0.0
    %2152 = vmatpush1.msra.mxu0 0.0
    %2153 = vmatprep.subr.mxu0 0.0
    %v2154 = vand.u32 %v24, 4294901760
    %2155 = vmatpush1.msra.mxu0 %v2154
    %2156 = vmatprep.subr.mxu0 0.0
    %v2157 = vand.u32 %v23, 4294901760
    %2158 = vmatpush1.msra.mxu0 %v2157
    %2159 = vmatprep.subr.mxu0 0.0
    %v2160 = vand.u32 %v22, 4294901760
    %2161 = vmatpush1.msra.mxu0 %v2160
    %2162 = vmatprep.subr.mxu0 0.0
    %v2163 = vand.u32 %v21, 4294901760
    %2164 = vmatpush1.msra.mxu0 %v2163
    %2165 = vmatprep.subr.mxu0 0.0
    %v2166 = vand.u32 %v20, 4294901760
    %2167 = vmatpush1.msra.mxu0 %v2166
    %2168 = vmatprep.subr.mxu0 0.0
    %v2169 = vand.u32 %v19, 4294901760
    %2170 = vmatpush1.msra.mxu0 %v2169
    %2171 = vmatprep.subr.mxu0 0.0
    %v2172 = vand.u32 %v18, 4294901760
    %2173 = vmatpush1.msra.mxu0 %v2172
    %2174 = vmatprep.subr.mxu0 0.0
    %v2175 = vand.u32 %v17, 4294901760
    %2176 = vmatpush1.msra.mxu0 %v2175
    %2177 = vmatprep.subr.mxu0 0.0
    %2178 = vmatpush2.msra.mxu0 0.0
    %2179 = vmatprep.subr.mxu0 0.0
    %2180 = vmatpush2.msra.mxu0 0.0
    %2181 = vmatprep.subr.mxu0 0.0
    %2182 = vmatpush2.msra.mxu0 0.0
    %2183 = vmatprep.subr.mxu0 0.0
    %2184 = vmatpush2.msra.mxu0 0.0
    %2185 = vmatprep.subr.mxu0 0.0
    %2186 = vmatpush2.msra.mxu0 0.0
    %2187 = vmatprep.subr.mxu0 0.0
    %2188 = vmatpush2.msra.mxu0 0.0
    %2189 = vmatprep.subr.mxu0 0.0
    %2190 = vmatpush2.msra.mxu0 0.0
    %2191 = vmatprep.subr.mxu0 0.0
    %2192 = vmatpush2.msra.mxu0 0.0
    %2193 = vmatprep.subr.mxu0 0.0
    %2194 = vmatpush2.msra.mxu0 0.0
    %2195 = vmatprep.subr.mxu0 0.0
    %2196 = vmatpush2.msra.mxu0 0.0
    %2197 = vmatprep.subr.mxu0 0.0
    %2198 = vmatpush2.msra.mxu0 0.0
    %2199 = vmatprep.subr.mxu0 0.0
    %2200 = vmatpush2.msra.mxu0 0.0
    %2201 = vmatprep.subr.mxu0 0.0
    %2202 = vmatpush2.msra.mxu0 0.0
    %2203 = vmatprep.subr.mxu0 0.0
    %2204 = vmatpush2.msra.mxu0 0.0
    %2205 = vmatprep.subr.mxu0 0.0
    %2206 = vmatpush2.msra.mxu0 0.0
    %2207 = vmatprep.subr.mxu0 0.0
    %2208 = vmatpush2.msra.mxu0 0.0
    %2209 = vmatprep.mubr.f32.mxu0 0.0
    %v2210 = vand.u32 %v1677, 4294901760
    %2211 = vmatmul.mubr.f32.gmra.mxu0 %v2210
    %v2212 = vpop.f32.mrf.mxu0
    %v2213 = vadd.f32 %v2134, %v2212
    %v2214 = vpop.f32.mrf.mxu0
    %2215 = vdwg.mxu0
    %2217 = vrot.lane.b32.xlu0 %v1121, 32
    %v2218 = vpop.permute.xlu0 %2217
    %2221 = vrot.lane.b32.xlu0 %v1667, 64
    %v2222 = vpop.permute.xlu0 %2221
    %2225 = vrot.lane.b32.xlu0 %v2213, 96
    %v2226 = vpop.permute.xlu0 %2225
    %vm2228 = vcmask 261120
    %v2229 = vsel %vm2228, %v575, %v2218
    %v2230 = vsel %vm37, %v2229, %v2222
    %vm2231 = vcmask 785408
    %v2232 = vsel %vm2231, %v2230, %v2226
    %v2233 = vld [vmem:[#allocation2] sm:$0xff]
    %v2234 = vadd.f32 %v2233, %v2232
    %2235 = vst [vmem:[#allocation2] sm:$0xff] %v2234
    // Predicated region
    $region14: #{tpu_custom_call.1} parent=1 // pred_check
      %p2236 = pneg %p12
    $region15: #{tpu_custom_call.1} parent=1 // pred_check_branch
      %2238 = sbr.rel (%p2236) target = $region17
    $region16: #{tpu_custom_call.1} parent=1 // pred_region
      %v2239 = vld [vmem:[#allocation2] sm:$0xff]
      %2240 = vst [vmem:[#allocation3] sm:$0xff] %v2239
    $region17: #{tpu_custom_call.1} parent=1 // pred_fallthru
      _
    // Predicated region
    $region18: #{tpu_custom_call.1} parent=1 // pred_check
      _
    $region19: #{tpu_custom_call.1} parent=1 // pred_check_branch
      %2242 = sbr.rel (0) target = $region21
    $region20: #{tpu_custom_call.1} parent=1 // pred_region
      %s2244 = ssub.s32 128, 128
      %2245 = vsyncadd [#allocation4], %s2244
      %s2247 = sshll.u32 [#allocation3], 4
      %s2248 = int_to_ptr.vmem [resolvable:$true] %s2247
      %2250 = dma.vmem_to_hbm [thread:$0]  %s2248, 128, %s2, [#allocation4]
    $region21: #{tpu_custom_call.1} parent=1 // pred_fallthru
      _
    // Predicated region
    $region22: #{tpu_custom_call.1} parent=1 // pred_check
      _
    $region23: #{tpu_custom_call.1} parent=1 // pred_check_branch
      %2252 = sbr.rel (0) target = $region25
    $region24: #{tpu_custom_call.1} parent=1 // pred_region
      %2253 = dma.done [#allocation4], 128
    $region25: #{tpu_custom_call.1} parent=1 // pred_fallthru
      _
    %2254 = vsyncpa [#allocation4], 1

// kernel: tpu_custom_call.1
$region0: #{tpu_custom_call.1}
  #allocation0 [shape = 'u32[]', space=smem, size = 0x4, offset = 0x4, fixed_abs, tag = 'smem constant byte address 0x4 - core index']
  #allocation1 [shape = 'u32[144,128]{1,0:T(1,128)}', space=vmem, size = 0x12000, scoped, tag = 'internal scratch']
  #allocation2 [shape = 'f32[8,128]{1,0:T(8,128)}', space=vmem, size = 0x1000, scoped, tag = 'scratch operand']
  %s0 = inlined_call_operand.vmem [shape: s32[8,4], index: 0, kind: input, shape index: {}]
  %s1 = inlined_call_operand.vmem [shape: f32[64,32], index: 1, kind: input, shape index: {}]
  %s2 = inlined_call_operand.hbm [shape: f32[8,128], index: 2, kind: output, shape index: {}]
  %s3 = sld [smem:[#allocation0]]
  $region26: #{tpu_custom_call.1} parent=0
    _
  %s5 = ssub.s32 1, %s3
  %s6 = scalar_select 0, %s5, %s3
  $region1: #{tpu_custom_call.1} parent=0
    #allocation3 [shape = 'u8[4096]{0}', space=vmem, size = 0x1000, scoped, tag = 'output window, operand 0, single buffered']
    #allocation4 [shape = 's32[1]{0}', space=sflag, size = 0x4, scoped, tag = 'scoped memory for tpu_custom_call.1']
    %7 = vsyncpa [#allocation4], 0
    // Predicated region
    $region2: #{tpu_custom_call.1} parent=1 // pred_check
      _
    $region3: #{tpu_custom_call.1} parent=1 // pred_check_branch
      %9 = sbr.rel (0) target = $region5
    $region4: #{tpu_custom_call.1} parent=1 // pred_region
      _
    $region5: #{tpu_custom_call.1} parent=1 // pred_fallthru
      _
    // Predicated region
    $region6: #{tpu_custom_call.1} parent=1 // pred_check
      _
    $region7: #{tpu_custom_call.1} parent=1 // pred_check_branch
      %11 = sbr.rel (0) target = $region9
    $region8: #{tpu_custom_call.1} parent=1 // pred_region
      _
    $region9: #{tpu_custom_call.1} parent=1 // pred_fallthru
      _
    %p12 = scmp.eq.s32.totalorder 0, 0
    // Predicated region
    $region10: #{tpu_custom_call.1} parent=1 // pred_check
      %p13 = pneg %p12
    $region11: #{tpu_custom_call.1} parent=1 // pred_check_branch
      %15 = sbr.rel (%p13) target = $region13
    $region12: #{tpu_custom_call.1} parent=1 // pred_region
      %16 = vst [vmem:[#allocation2] sm:$0xff] 0.0
    $region13: #{tpu_custom_call.1} parent=1 // pred_fallthru
      _
    %v17 = vld [vmem:[%s1] sm:$0xff]
    %v18 = vld [vmem:[%s1 + $0x8] sm:$0xff]
    %v19 = vld [vmem:[%s1 + $0x10] sm:$0xff]
    %v20 = vld [vmem:[%s1 + $0x18] sm:$0xff]
    %v21 = vld [vmem:[%s1 + $0x20] sm:$0xff]
    %v22 = vld [vmem:[%s1 + $0x28] sm:$0xff]
    %v23 = vld [vmem:[%s1 + $0x30] sm:$0xff]
    %v24 = vld [vmem:[%s1 + $0x38] sm:$0xff]
    %v25 = vld [vmem:[%s0] sm:$0xff]
    %s26 = smul.u32 0, 64
    %v27 = vstv %s26
    %v28 = vsub.s32 %v25, %v27
    %v29 = vlaneseq
    %v30 = vand.u32 %v29, 127
    %31 = vset.pattern.permute.xlu0 0
    %32 = vperm.xlu0 %31, %v28
    %v33 = vpop.permute.xlu0 %32
    %vm34 = vcmp.eq.s32.totalorder %v30, %v33
    %v35 = vsel %vm34, 1, 0
    %v36 = vcvt.s32.f32 %v35
    %vm37 = vcmask 523264
    %v39 = vsel %vm37, %v36, 0
    %41 = vmatprep.subr.mxu0 0.0
    %42 = vmatpush1.msra.mxu0 0.0
    %43 = vmatprep.subr.mxu0 0.0
    %44 = vmatpush1.msra.mxu0 0.0
    %45 = vmatprep.subr.mxu0 0.0
    %46 = vmatpush1.msra.mxu0 0.0
    %47 = vmatprep.subr.mxu0 0.0
    %48 = vmatpush1.msra.mxu0 0.0
    %49 = vmatprep.subr.mxu0 0.0
    %50 = vmatpush1.msra.mxu0 0.0
    %51 = vmatprep.subr.mxu0 0.0
    %52 = vmatpush1.msra.mxu0 0.0
    %53 = vmatprep.subr.mxu0 0.0
    %54 = vmatpush1.msra.mxu0 0.0
    %55 = vmatprep.subr.mxu0 0.0
    %56 = vmatpush1.msra.mxu0 0.0
    %57 = vmatprep.subr.mxu0 0.0
    %v58 = vand.u32 %v24, 4294901760
    %59 = vmatpush1.msra.mxu0 %v58
    %60 = vmatprep.subr.mxu0 0.0
    %v61 = vand.u32 %v23, 4294901760
    %62 = vmatpush1.msra.mxu0 %v61
    %63 = vmatprep.subr.mxu0 0.0
    %v64 = vand.u32 %v22, 4294901760
    %65 = vmatpush1.msra.mxu0 %v64
    %66 = vmatprep.subr.mxu0 0.0
    %v67 = vand.u32 %v21, 4294901760
    %68 = vmatpush1.msra.mxu0 %v67
    %69 = vmatprep.subr.mxu0 0.0
    %v70 = vand.u32 %v20, 4294901760
    %71 = vmatpush1.msra.mxu0 %v70
    %72 = vmatprep.subr.mxu0 0.0
    %v73 = vand.u32 %v19, 4294901760
    %74 = vmatpush1.msra.mxu0 %v73
    %75 = vmatprep.subr.mxu0 0.0
    %v76 = vand.u32 %v18, 4294901760
    %77 = vmatpush1.msra.mxu0 %v76
    %78 = vmatprep.subr.mxu0 0.0
    %v79 = vand.u32 %v17, 4294901760
    %80 = vmatpush1.msra.mxu0 %v79
    %81 = vmatprep.subr.mxu0 0.0
    %82 = vmatpush2.msra.mxu0 0.0
    %83 = vmatprep.subr.mxu0 0.0
    %84 = vmatpush2.msra.mxu0 0.0
    %85 = vmatprep.subr.mxu0 0.0
    %86 = vmatpush2.msra.mxu0 0.0
    %87 = vmatprep.subr.mxu0 0.0
    %88 = vmatpush2.msra.mxu0 0.0
    %89 = vmatprep.subr.mxu0 0.0
    %90 = vmatpush2.msra.mxu0 0.0
    %91 = vmatprep.subr.mxu0 0.0
    %92 = vmatpush2.msra.mxu0 0.0
    %93 = vmatprep.subr.mxu0 0.0
    %94 = vmatpush2.msra.mxu0 0.0
    %95 = vmatprep.subr.mxu0 0.0
    %96 = vmatpush2.msra.mxu0 0.0
    %97 = vmatprep.subr.mxu0 0.0
    %98 = vmatpush2.msra.mxu0 0.0
    %99 = vmatprep.subr.mxu0 0.0
    %100 = vmatpush2.msra.mxu0 0.0
    %101 = vmatprep.subr.mxu0 0.0
    %102 = vmatpush2.msra.mxu0 0.0
    %103 = vmatprep.subr.mxu0 0.0
    %104 = vmatpush2.msra.mxu0 0.0
    %105 = vmatprep.subr.mxu0 0.0
    %106 = vmatpush2.msra.mxu0 0.0
    %107 = vmatprep.subr.mxu0 0.0
    %108 = vmatpush2.msra.mxu0 0.0
    %109 = vmatprep.subr.mxu0 0.0
    %110 = vmatpush2.msra.mxu0 0.0
    %111 = vmatprep.subr.mxu0 0.0
    %112 = vmatpush2.msra.mxu0 0.0
    %113 = vmatprep.mubr.f32.mxu0 0.0
    %v114 = vand.u32 %v39, 4294901760
    %v115 = vsub.f32 %v39, %v114
    %v116 = vand.u32 %v115, 4294901760
    %v117 = vsub.f32 %v115, %v116
    %v118 = vand.u32 %v117, 4294901760
    %119 = vmatmul.mubr.f32.gmra.mxu0 %v118
    %v120 = vpop.f32.mrf.mxu0
    %v121 = vadd.f32 0.0, %v120
    %v122 = vpop.f32.mrf.mxu0
    %123 = vdwg.mxu0
    %124 = vmatprep.subr.mxu0 0.0
    %125 = vmatpush1.msra.mxu0 0.0
    %126 = vmatprep.subr.mxu0 0.0
    %127 = vmatpush1.msra.mxu0 0.0
    %128 = vmatprep.subr.mxu0 0.0
    %129 = vmatpush1.msra.mxu0 0.0
    %130 = vmatprep.subr.mxu0 0.0
    %131 = vmatpush1.msra.mxu0 0.0
    %132 = vmatprep.subr.mxu0 0.0
    %133 = vmatpush1.msra.mxu0 0.0
    %134 = vmatprep.subr.mxu0 0.0
    %135 = vmatpush1.msra.mxu0 0.0
    %136 = vmatprep.subr.mxu0 0.0
    %137 = vmatpush1.msra.mxu0 0.0
    %138 = vmatprep.subr.mxu0 0.0
    %139 = vmatpush1.msra.mxu0 0.0
    %140 = vmatprep.subr.mxu0 0.0
    %v141 = vand.u32 %v24, 4294901760
    %v142 = vsub.f32 %v24, %v141
    %v143 = vand.u32 %v142, 4294901760
    %v144 = vsub.f32 %v142, %v143
    %v145 = vand.u32 %v144, 4294901760
    %146 = vmatpush1.msra.mxu0 %v145
    %147 = vmatprep.subr.mxu0 0.0
    %v148 = vand.u32 %v23, 4294901760
    %v149 = vsub.f32 %v23, %v148
    %v150 = vand.u32 %v149, 4294901760
    %v151 = vsub.f32 %v149, %v150
    %v152 = vand.u32 %v151, 4294901760
    %153 = vmatpush1.msra.mxu0 %v152
    %154 = vmatprep.subr.mxu0 0.0
    %v155 = vand.u32 %v22, 4294901760
    %v156 = vsub.f32 %v22, %v155
    %v157 = vand.u32 %v156, 4294901760
    %v158 = vsub.f32 %v156, %v157
    %v159 = vand.u32 %v158, 4294901760
    %160 = vmatpush1.msra.mxu0 %v159
    %161 = vmatprep.subr.mxu0 0.0
    %v162 = vand.u32 %v21, 4294901760
    %v163 = vsub.f32 %v21, %v162
    %v164 = vand.u32 %v163, 4294901760
    %v165 = vsub.f32 %v163, %v164
    %v166 = vand.u32 %v165, 4294901760
    %167 = vmatpush1.msra.mxu0 %v166
    %168 = vmatprep.subr.mxu0 0.0
    %v169 = vand.u32 %v20, 4294901760
    %v170 = vsub.f32 %v20, %v169
    %v171 = vand.u32 %v170, 4294901760
    %v172 = vsub.f32 %v170, %v171
    %v173 = vand.u32 %v172, 4294901760
    %174 = vmatpush1.msra.mxu0 %v173
    %175 = vmatprep.subr.mxu0 0.0
    %v176 = vand.u32 %v19, 4294901760
    %v177 = vsub.f32 %v19, %v176
    %v178 = vand.u32 %v177, 4294901760
    %v179 = vsub.f32 %v177, %v178
    %v180 = vand.u32 %v179, 4294901760
    %181 = vmatpush1.msra.mxu0 %v180
    %182 = vmatprep.subr.mxu0 0.0
    %v183 = vand.u32 %v18, 4294901760
    %v184 = vsub.f32 %v18, %v183
    %v185 = vand.u32 %v184, 4294901760
    %v186 = vsub.f32 %v184, %v185
    %v187 = vand.u32 %v186, 4294901760
    %188 = vmatpush1.msra.mxu0 %v187
    %189 = vmatprep.subr.mxu0 0.0
    %v190 = vand.u32 %v17, 4294901760
    %v191 = vsub.f32 %v17, %v190
    %v192 = vand.u32 %v191, 4294901760
    %v193 = vsub.f32 %v191, %v192
    %v194 = vand.u32 %v193, 4294901760
    %195 = vmatpush1.msra.mxu0 %v194
    %196 = vmatprep.subr.mxu0 0.0
    %197 = vmatpush2.msra.mxu0 0.0
    %198 = vmatprep.subr.mxu0 0.0
    %199 = vmatpush2.msra.mxu0 0.0
    %200 = vmatprep.subr.mxu0 0.0
    %201 = vmatpush2.msra.mxu0 0.0
    %202 = vmatprep.subr.mxu0 0.0
    %203 = vmatpush2.msra.mxu0 0.0
    %204 = vmatprep.subr.mxu0 0.0
    %205 = vmatpush2.msra.mxu0 0.0
    %206 = vmatprep.subr.mxu0 0.0
    %207 = vmatpush2.msra.mxu0 0.0
    %208 = vmatprep.subr.mxu0 0.0
    %209 = vmatpush2.msra.mxu0 0.0
    %210 = vmatprep.subr.mxu0 0.0
    %211 = vmatpush2.msra.mxu0 0.0
    %212 = vmatprep.subr.mxu0 0.0
    %213 = vmatpush2.msra.mxu0 0.0
    %214 = vmatprep.subr.mxu0 0.0
    %215 = vmatpush2.msra.mxu0 0.0
    %216 = vmatprep.subr.mxu0 0.0
    %217 = vmatpush2.msra.mxu0 0.0
    %218 = vmatprep.subr.mxu0 0.0
    %219 = vmatpush2.msra.mxu0 0.0
    %220 = vmatprep.subr.mxu0 0.0
    %221 = vmatpush2.msra.mxu0 0.0
    %222 = vmatprep.subr.mxu0 0.0
    %223 = vmatpush2.msra.mxu0 0.0
    %224 = vmatprep.subr.mxu0 0.0
    %225 = vmatpush2.msra.mxu0 0.0
    %226 = vmatprep.subr.mxu0 0.0
    %227 = vmatpush2.msra.mxu0 0.0
    %228 = vmatprep.mubr.f32.mxu0 0.0
    %v229 = vand.u32 %v39, 4294901760
    %230 = vmatmul.mubr.f32.gmra.mxu0 %v229
    %v231 = vpop.f32.mrf.mxu0
    %v232 = vadd.f32 %v121, %v231
    %v233 = vpop.f32.mrf.mxu0
    %234 = vdwg.mxu0
    %235 = vmatprep.subr.mxu0 0.0
    %236 = vmatpush1.msra.mxu0 0.0
    %237 = vmatprep.subr.mxu0 0.0
    %238 = vmatpush1.msra.mxu0 0.0
    %239 = vmatprep.subr.mxu0 0.0
    %240 = vmatpush1.msra.mxu0 0.0
    %241 = vmatprep.subr.mxu0 0.0
    %242 = vmatpush1.msra.mxu0 0.0
    %243 = vmatprep.subr.mxu0 0.0
    %244 = vmatpush1.msra.mxu0 0.0
    %245 = vmatprep.subr.mxu0 0.0
    %246 = vmatpush1.msra.mxu0 0.0
    %247 = vmatprep.subr.mxu0 0.0
    %248 = vmatpush1.msra.mxu0 0.0
    %249 = vmatprep.subr.mxu0 0.0
    %250 = vmatpush1.msra.mxu0 0.0
    %251 = vmatprep.subr.mxu0 0.0
    %v252 = vand.u32 %v24, 4294901760
    %v253 = vsub.f32 %v24, %v252
    %254 = vmatpush1.msra.mxu0 %v253
    %255 = vmatprep.subr.mxu0 0.0
    %v256 = vand.u32 %v23, 4294901760
    %v257 = vsub.f32 %v23, %v256
    %258 = vmatpush1.msra.mxu0 %v257
    %259 = vmatprep.subr.mxu0 0.0
    %v260 = vand.u32 %v22, 4294901760
    %v261 = vsub.f32 %v22, %v260
    %262 = vmatpush1.msra.mxu0 %v261
    %263 = vmatprep.subr.mxu0 0.0
    %v264 = vand.u32 %v21, 4294901760
    %v265 = vsub.f32 %v21, %v264
    %266 = vmatpush1.msra.mxu0 %v265
    %267 = vmatprep.subr.mxu0 0.0
    %v268 = vand.u32 %v20, 4294901760
    %v269 = vsub.f32 %v20, %v268
    %270 = vmatpush1.msra.mxu0 %v269
    %271 = vmatprep.subr.mxu0 0.0
    %v272 = vand.u32 %v19, 4294901760
    %v273 = vsub.f32 %v19, %v272
    %274 = vmatpush1.msra.mxu0 %v273
    %275 = vmatprep.subr.mxu0 0.0
    %v276 = vand.u32 %v18, 4294901760
    %v277 = vsub.f32 %v18, %v276
    %278 = vmatpush1.msra.mxu0 %v277
    %279 = vmatprep.subr.mxu0 0.0
    %v280 = vand.u32 %v17, 4294901760
    %v281 = vsub.f32 %v17, %v280
    %282 = vmatpush1.msra.mxu0 %v281
    %283 = vmatprep.subr.mxu0 0.0
    %284 = vmatpush2.msra.mxu0 0.0
    %285 = vmatprep.subr.mxu0 0.0
    %286 = vmatpush2.msra.mxu0 0.0
    %287 = vmatprep.subr.mxu0 0.0
    %288 = vmatpush2.msra.mxu0 0.0
    %289 = vmatprep.subr.mxu0 0.0
    %290 = vmatpush2.msra.mxu0 0.0
    %291 = vmatprep.subr.mxu0 0.0
    %292 = vmatpush2.msra.mxu0 0.0
    %293 = vmatprep.subr.mxu0 0.0
    %294 = vmatpush2.msra.mxu0 0.0
    %295 = vmatprep.subr.mxu0 0.0
    %296 = vmatpush2.msra.mxu0 0.0
    %297 = vmatprep.subr.mxu0 0.0
    %298 = vmatpush2.msra.mxu0 0.0
    %299 = vmatprep.subr.mxu0 0.0
    %300 = vmatpush2.msra.mxu0 0.0
    %301 = vmatprep.subr.mxu0 0.0
    %302 = vmatpush2.msra.mxu0 0.0
    %303 = vmatprep.subr.mxu0 0.0
    %304 = vmatpush2.msra.mxu0 0.0
    %305 = vmatprep.subr.mxu0 0.0
    %306 = vmatpush2.msra.mxu0 0.0
    %307 = vmatprep.subr.mxu0 0.0
    %308 = vmatpush2.msra.mxu0 0.0
    %309 = vmatprep.subr.mxu0 0.0
    %310 = vmatpush2.msra.mxu0 0.0
    %311 = vmatprep.subr.mxu0 0.0
    %312 = vmatpush2.msra.mxu0 0.0
    %313 = vmatprep.subr.mxu0 0.0
    %314 = vmatpush2.msra.mxu0 0.0
    %315 = vmatprep.mubr.f32.mxu0 0.0
    %v316 = vand.u32 %v39, 4294901760
    %v317 = vsub.f32 %v39, %v316
    %318 = vmatmul.mubr.f32.gmra.mxu0 %v317
    %v319 = vpop.f32.mrf.mxu0
    %v320 = vadd.f32 %v232, %v319
    %v321 = vpop.f32.mrf.mxu0
    %322 = vdwg.mxu0
    %323 = vmatprep.subr.mxu0 0.0
    %324 = vmatpush1.msra.mxu0 0.0
    %325 = vmatprep.subr.mxu0 0.0
    %326 = vmatpush1.msra.mxu0 0.0
    %327 = vmatprep.subr.mxu0 0.0
    %328 = vmatpush1.msra.mxu0 0.0
    %329 = vmatprep.subr.mxu0 0.0
    %330 = vmatpush1.msra.mxu0 0.0
    %331 = vmatprep.subr.mxu0 0.0
    %332 = vmatpush1.msra.mxu0 0.0
    %333 = vmatprep.subr.mxu0 0.0
    %334 = vmatpush1.msra.mxu0 0.0
    %335 = vmatprep.subr.mxu0 0.0
    %336 = vmatpush1.msra.mxu0 0.0
    %337 = vmatprep.subr.mxu0 0.0
    %338 = vmatpush1.msra.mxu0 0.0
    %339 = vmatprep.subr.mxu0 0.0
    %v340 = vand.u32 %v24, 4294901760
    %341 = vmatpush1.msra.mxu0 %v340
    %342 = vmatprep.subr.mxu0 0.0
    %v343 = vand.u32 %v23, 4294901760
    %344 = vmatpush1.msra.mxu0 %v343
    %345 = vmatprep.subr.mxu0 0.0
    %v346 = vand.u32 %v22, 4294901760
    %347 = vmatpush1.msra.mxu0 %v346
    %348 = vmatprep.subr.mxu0 0.0
    %v349 = vand.u32 %v21, 4294901760
    %350 = vmatpush1.msra.mxu0 %v349
    %351 = vmatprep.subr.mxu0 0.0
    %v352 = vand.u32 %v20, 4294901760
    %353 = vmatpush1.msra.mxu0 %v352
    %354 = vmatprep.subr.mxu0 0.0
    %v355 = vand.u32 %v19, 4294901760
    %356 = vmatpush1.msra.mxu0 %v355
    %357 = vmatprep.subr.mxu0 0.0
    %v358 = vand.u32 %v18, 4294901760
    %359 = vmatpush1.msra.mxu0 %v358
    %360 = vmatprep.subr.mxu0 0.0
    %v361 = vand.u32 %v17, 4294901760
    %362 = vmatpush1.msra.mxu0 %v361
    %363 = vmatprep.subr.mxu0 0.0
    %364 = vmatpush2.msra.mxu0 0.0
    %365 = vmatprep.subr.mxu0 0.0
    %366 = vmatpush2.msra.mxu0 0.0
    %367 = vmatprep.subr.mxu0 0.0
    %368 = vmatpush2.msra.mxu0 0.0
    %369 = vmatprep.subr.mxu0 0.0
    %370 = vmatpush2.msra.mxu0 0.0
    %371 = vmatprep.subr.mxu0 0.0
    %372 = vmatpush2.msra.mxu0 0.0
    %373 = vmatprep.subr.mxu0 0.0
    %374 = vmatpush2.msra.mxu0 0.0
    %375 = vmatprep.subr.mxu0 0.0
    %376 = vmatpush2.msra.mxu0 0.0
    %377 = vmatprep.subr.mxu0 0.0
    %378 = vmatpush2.msra.mxu0 0.0
    %379 = vmatprep.subr.mxu0 0.0
    %380 = vmatpush2.msra.mxu0 0.0
    %381 = vmatprep.subr.mxu0 0.0
    %382 = vmatpush2.msra.mxu0 0.0
    %383 = vmatprep.subr.mxu0 0.0
    %384 = vmatpush2.msra.mxu0 0.0
    %385 = vmatprep.subr.mxu0 0.0
    %386 = vmatpush2.msra.mxu0 0.0
    %387 = vmatprep.subr.mxu0 0.0
    %388 = vmatpush2.msra.mxu0 0.0
    %389 = vmatprep.subr.mxu0 0.0
    %390 = vmatpush2.msra.mxu0 0.0
    %391 = vmatprep.subr.mxu0 0.0
    %392 = vmatpush2.msra.mxu0 0.0
    %393 = vmatprep.subr.mxu0 0.0
    %394 = vmatpush2.msra.mxu0 0.0
    %395 = vmatprep.mubr.f32.mxu0 0.0
    %v396 = vand.u32 %v39, 4294901760
    %v397 = vsub.f32 %v39, %v396
    %v398 = vand.u32 %v397, 4294901760
    %399 = vmatmul.mubr.f32.gmra.mxu0 %v398
    %v400 = vpop.f32.mrf.mxu0
    %v401 = vadd.f32 %v320, %v400
    %v402 = vpop.f32.mrf.mxu0
    %403 = vdwg.mxu0
    %404 = vmatprep.subr.mxu0 0.0
    %405 = vmatpush1.msra.mxu0 0.0
    %406 = vmatprep.subr.mxu0 0.0
    %407 = vmatpush1.msra.mxu0 0.0
    %408 = vmatprep.subr.mxu0 0.0
    %409 = vmatpush1.msra.mxu0 0.0
    %410 = vmatprep.subr.mxu0 0.0
    %411 = vmatpush1.msra.mxu0 0.0
    %412 = vmatprep.subr.mxu0 0.0
    %413 = vmatpush1.msra.mxu0 0.0
    %414 = vmatprep.subr.mxu0 0.0
    %415 = vmatpush1.msra.mxu0 0.0
    %416 = vmatprep.subr.mxu0 0.0
    %417 = vmatpush1.msra.mxu0 0.0
    %418 = vmatprep.subr.mxu0 0.0
    %419 = vmatpush1.msra.mxu0 0.0
    %420 = vmatprep.subr.mxu0 0.0
    %v421 = vand.u32 %v24, 4294901760
    %v422 = vsub.f32 %v24, %v421
    %v423 = vand.u32 %v422, 4294901760
    %424 = vmatpush1.msra.mxu0 %v423
    %425 = vmatprep.subr.mxu0 0.0
    %v426 = vand.u32 %v23, 4294901760
    %v427 = vsub.f32 %v23, %v426
    %v428 = vand.u32 %v427, 4294901760
    %429 = vmatpush1.msra.mxu0 %v428
    %430 = vmatprep.subr.mxu0 0.0
    %v431 = vand.u32 %v22, 4294901760
    %v432 = vsub.f32 %v22, %v431
    %v433 = vand.u32 %v432, 4294901760
    %434 = vmatpush1.msra.mxu0 %v433
    %435 = vmatprep.subr.mxu0 0.0
    %v436 = vand.u32 %v21, 4294901760
    %v437 = vsub.f32 %v21, %v436
    %v438 = vand.u32 %v437, 4294901760
    %439 = vmatpush1.msra.mxu0 %v438
    %440 = vmatprep.subr.mxu0 0.0
    %v441 = vand.u32 %v20, 4294901760
    %v442 = vsub.f32 %v20, %v441
    %v443 = vand.u32 %v442, 4294901760
    %444 = vmatpush1.msra.mxu0 %v443
    %445 = vmatprep.subr.mxu0 0.0
    %v446 = vand.u32 %v19, 4294901760
    %v447 = vsub.f32 %v19, %v446
    %v448 = vand.u32 %v447, 4294901760
    %449 = vmatpush1.msra.mxu0 %v448
    %450 = vmatprep.subr.mxu0 0.0
    %v451 = vand.u32 %v18, 4294901760
    %v452 = vsub.f32 %v18, %v451
    %v453 = vand.u32 %v452, 4294901760
    %454 = vmatpush1.msra.mxu0 %v453
    %455 = vmatprep.subr.mxu0 0.0
    %v456 = vand.u32 %v17, 4294901760
    %v457 = vsub.f32 %v17, %v456
    %v458 = vand.u32 %v457, 4294901760
    %459 = vmatpush1.msra.mxu0 %v458
    %460 = vmatprep.subr.mxu0 0.0
    %461 = vmatpush2.msra.mxu0 0.0
    %462 = vmatprep.subr.mxu0 0.0
    %463 = vmatpush2.msra.mxu0 0.0
    %464 = vmatprep.subr.mxu0 0.0
    %465 = vmatpush2.msra.mxu0 0.0
    %466 = vmatprep.subr.mxu0 0.0
    %467 = vmatpush2.msra.mxu0 0.0
    %468 = vmatprep.subr.mxu0 0.0
    %469 = vmatpush2.msra.mxu0 0.0
    %470 = vmatprep.subr.mxu0 0.0
    %471 = vmatpush2.msra.mxu0 0.0
    %472 = vmatprep.subr.mxu0 0.0
    %473 = vmatpush2.msra.mxu0 0.0
    %474 = vmatprep.subr.mxu0 0.0
    %475 = vmatpush2.msra.mxu0 0.0
    %476 = vmatprep.subr.mxu0 0.0
    %477 = vmatpush2.msra.mxu0 0.0
    %478 = vmatprep.subr.mxu0 0.0
    %479 = vmatpush2.msra.mxu0 0.0
    %480 = vmatprep.subr.mxu0 0.0
    %481 = vmatpush2.msra.mxu0 0.0
    %482 = vmatprep.subr.mxu0 0.0
    %483 = vmatpush2.msra.mxu0 0.0
    %484 = vmatprep.subr.mxu0 0.0
    %485 = vmatpush2.msra.mxu0 0.0
    %486 = vmatprep.subr.mxu0 0.0
    %487 = vmatpush2.msra.mxu0 0.0
    %488 = vmatprep.subr.mxu0 0.0
    %489 = vmatpush2.msra.mxu0 0.0
    %490 = vmatprep.subr.mxu0 0.0
    %491 = vmatpush2.msra.mxu0 0.0
    %492 = vmatprep.mubr.f32.mxu0 0.0
    %v493 = vand.u32 %v39, 4294901760
    %494 = vmatmul.mubr.f32.gmra.mxu0 %v493
    %v495 = vpop.f32.mrf.mxu0
    %v496 = vadd.f32 %v401, %v495
    %v497 = vpop.f32.mrf.mxu0
    %498 = vdwg.mxu0
    %499 = vmatprep.subr.mxu0 0.0
    %500 = vmatpush1.msra.mxu0 0.0
    %501 = vmatprep.subr.mxu0 0.0
    %502 = vmatpush1.msra.mxu0 0.0
    %503 = vmatprep.subr.mxu0 0.0
    %504 = vmatpush1.msra.mxu0 0.0
    %505 = vmatprep.subr.mxu0 0.0
    %506 = vmatpush1.msra.mxu0 0.0
    %507 = vmatprep.subr.mxu0 0.0
    %508 = vmatpush1.msra.mxu0 0.0
    %509 = vmatprep.subr.mxu0 0.0
    %510 = vmatpush1.msra.mxu0 0.0
    %511 = vmatprep.subr.mxu0 0.0
    %512 = vmatpush1.msra.mxu0 0.0
    %513 = vmatprep.subr.mxu0 0.0
    %514 = vmatpush1.msra.mxu0 0.0
    %515 = vmatprep.subr.mxu0 0.0
    %v516 = vand.u32 %v24, 4294901760
    %517 = vmatpush1.msra.mxu0 %v516
    %518 = vmatprep.subr.mxu0 0.0
    %v519 = vand.u32 %v23, 4294901760
    %520 = vmatpush1.msra.mxu0 %v519
    %521 = vmatprep.subr.mxu0 0.0
    %v522 = vand.u32 %v22, 4294901760
    %523 = vmatpush1.msra.mxu0 %v522
    %524 = vmatprep.subr.mxu0 0.0
    %v525 = vand.u32 %v21, 4294901760
    %526 = vmatpush1.msra.mxu0 %v525
    %527 = vmatprep.subr.mxu0 0.0
    %v528 = vand.u32 %v20, 4294901760
    %529 = vmatpush1.msra.mxu0 %v528
    %530 = vmatprep.subr.mxu0 0.0
    %v531 = vand.u32 %v19, 4294901760
    %532 = vmatpush1.msra.mxu0 %v531
    %533 = vmatprep.subr.mxu0 0.0
    %v534 = vand.u32 %v18, 4294901760
    %535 = vmatpush1.msra.mxu0 %v534
    %536 = vmatprep.subr.mxu0 0.0
    %v537 = vand.u32 %v17, 4294901760
    %538 = vmatpush1.msra.mxu0 %v537
    %539 = vmatprep.subr.mxu0 0.0
    %540 = vmatpush2.msra.mxu0 0.0
    %541 = vmatprep.subr.mxu0 0.0
    %542 = vmatpush2.msra.mxu0 0.0
    %543 = vmatprep.subr.mxu0 0.0
    %544 = vmatpush2.msra.mxu0 0.0
    %545 = vmatprep.subr.mxu0 0.0
    %546 = vmatpush2.msra.mxu0 0.0
    %547 = vmatprep.subr.mxu0 0.0
    %548 = vmatpush2.msra.mxu0 0.0
    %549 = vmatprep.subr.mxu0 0.0
    %550 = vmatpush2.msra.mxu0 0.0
    %551 = vmatprep.subr.mxu0 0.0
    %552 = vmatpush2.msra.mxu0 0.0
    %553 = vmatprep.subr.mxu0 0.0
    %554 = vmatpush2.msra.mxu0 0.0
    %555 = vmatprep.subr.mxu0 0.0
    %556 = vmatpush2.msra.mxu0 0.0
    %557 = vmatprep.subr.mxu0 0.0
    %558 = vmatpush2.msra.mxu0 0.0
    %559 = vmatprep.subr.mxu0 0.0
    %560 = vmatpush2.msra.mxu0 0.0
    %561 = vmatprep.subr.mxu0 0.0
    %562 = vmatpush2.msra.mxu0 0.0
    %563 = vmatprep.subr.mxu0 0.0
    %564 = vmatpush2.msra.mxu0 0.0
    %565 = vmatprep.subr.mxu0 0.0
    %566 = vmatpush2.msra.mxu0 0.0
    %567 = vmatprep.subr.mxu0 0.0
    %568 = vmatpush2.msra.mxu0 0.0
    %569 = vmatprep.subr.mxu0 0.0
    %570 = vmatpush2.msra.mxu0 0.0
    %571 = vmatprep.mubr.f32.mxu0 0.0
    %v572 = vand.u32 %v39, 4294901760
    %573 = vmatmul.mubr.f32.gmra.mxu0 %v572
    %v574 = vpop.f32.mrf.mxu0
    %v575 = vadd.f32 %v496, %v574
    %v576 = vpop.f32.mrf.mxu0
    %577 = vdwg.mxu0
    %578 = vset.pattern.permute.xlu0 1
    %579 = vperm.xlu0 %578, %v28
    %v580 = vpop.permute.xlu0 %579
    %vm581 = vcmp.eq.s32.totalorder %v30, %v580
    %v582 = vsel %vm581, 1, 0
    %v583 = vcvt.s32.f32 %v582
    %v585 = vsel %vm37, %v583, 0
    %587 = vmatprep.subr.mxu0 0.0
    %588 = vmatpush1.msra.mxu0 0.0
    %589 = vmatprep.subr.mxu0 0.0
    %590 = vmatpush1.msra.mxu0 0.0
    %591 = vmatprep.subr.mxu0 0.0
    %592 = vmatpush1.msra.mxu0 0.0
    %593 = vmatprep.subr.mxu0 0.0
    %594 = vmatpush1.msra.mxu0 0.0
    %595 = vmatprep.subr.mxu0 0.0
    %596 = vmatpush1.msra.mxu0 0.0
    %597 = vmatprep.subr.mxu0 0.0
    %598 = vmatpush1.msra.mxu0 0.0
    %599 = vmatprep.subr.mxu0 0.0
    %600 = vmatpush1.msra.mxu0 0.0
    %601 = vmatprep.subr.mxu0 0.0
    %602 = vmatpush1.msra.mxu0 0.0
    %603 = vmatprep.subr.mxu0 0.0
    %v604 = vand.u32 %v24, 4294901760
    %605 = vmatpush1.msra.mxu0 %v604
    %606 = vmatprep.subr.mxu0 0.0
    %v607 = vand.u32 %v23, 4294901760
    %608 = vmatpush1.msra.mxu0 %v607
    %609 = vmatprep.subr.mxu0 0.0
    %v610 = vand.u32 %v22, 4294901760
    %611 = vmatpush1.msra.mxu0 %v610
    %612 = vmatprep.subr.mxu0 0.0
    %v613 = vand.u32 %v21, 4294901760
    %614 = vmatpush1.msra.mxu0 %v613
    %615 = vmatprep.subr.mxu0 0.0
    %v616 = vand.u32 %v20, 4294901760
    %617 = vmatpush1.msra.mxu0 %v616
    %618 = vmatprep.subr.mxu0 0.0
    %v619 = vand.u32 %v19, 4294901760
    %620 = vmatpush1.msra.mxu0 %v619
    %621 = vmatprep.subr.mxu0 0.0
    %v622 = vand.u32 %v18, 4294901760
    %623 = vmatpush1.msra.mxu0 %v622
    %624 = vmatprep.subr.mxu0 0.0
    %v625 = vand.u32 %v17, 4294901760
    %626 = vmatpush1.msra.mxu0 %v625
    %627 = vmatprep.subr.mxu0 0.0
    %628 = vmatpush2.msra.mxu0 0.0
    %629 = vmatprep.subr.mxu0 0.0
    %630 = vmatpush2.msra.mxu0 0.0
    %631 = vmatprep.subr.mxu0 0.0
    %632 = vmatpush2.msra.mxu0 0.0
    %633 = vmatprep.subr.mxu0 0.0
    %634 = vmatpush2.msra.mxu0 0.0
    %635 = vmatprep.subr.mxu0 0.0
    %636 = vmatpush2.msra.mxu0 0.0
    %637 = vmatprep.subr.mxu0 0.0
    %638 = vmatpush2.msra.mxu0 0.0
    %639 = vmatprep.subr.mxu0 0.0
    %640 = vmatpush2.msra.mxu0 0.0
    %641 = vmatprep.subr.mxu0 0.0
    %642 = vmatpush2.msra.mxu0 0.0
    %643 = vmatprep.subr.mxu0 0.0
    %644 = vmatpush2.msra.mxu0 0.0
    %645 = vmatprep.subr.mxu0 0.0
    %646 = vmatpush2.msra.mxu0 0.0
    %647 = vmatprep.subr.mxu0 0.0
    %648 = vmatpush2.msra.mxu0 0.0
    %649 = vmatprep.subr.mxu0 0.0
    %650 = vmatpush2.msra.mxu0 0.0
    %651 = vmatprep.subr.mxu0 0.0
    %652 = vmatpush2.msra.mxu0 0.0
    %653 = vmatprep.subr.mxu0 0.0
    %654 = vmatpush2.msra.mxu0 0.0
    %655 = vmatprep.subr.mxu0 0.0
    %656 = vmatpush2.msra.mxu0 0.0
    %657 = vmatprep.subr.mxu0 0.0
    %658 = vmatpush2.msra.mxu0 0.0
    %659 = vmatprep.mubr.f32.mxu0 0.0
    %v660 = vand.u32 %v585, 4294901760
    %v661 = vsub.f32 %v585, %v660
    %v662 = vand.u32 %v661, 4294901760
    %v663 = vsub.f32 %v661, %v662
    %v664 = vand.u32 %v663, 4294901760
    %665 = vmatmul.mubr.f32.gmra.mxu0 %v664
    %v666 = vpop.f32.mrf.mxu0
    %v667 = vadd.f32 0.0, %v666
    %v668 = vpop.f32.mrf.mxu0
    %669 = vdwg.mxu0
    %670 = vmatprep.subr.mxu0 0.0
    %671 = vmatpush1.msra.mxu0 0.0
    %672 = vmatprep.subr.mxu0 0.0
    %673 = vmatpush1.msra.mxu0 0.0
    %674 = vmatprep.subr.mxu0 0.0
    %675 = vmatpush1.msra.mxu0 0.0
    %676 = vmatprep.subr.mxu0 0.0
    %677 = vmatpush1.msra.mxu0 0.0
    %678 = vmatprep.subr.mxu0 0.0
    %679 = vmatpush1.msra.mxu0 0.0
    %680 = vmatprep.subr.mxu0 0.0
    %681 = vmatpush1.msra.mxu0 0.0
    %682 = vmatprep.subr.mxu0 0.0
    %683 = vmatpush1.msra.mxu0 0.0
    %684 = vmatprep.subr.mxu0 0.0
    %685 = vmatpush1.msra.mxu0 0.0
    %686 = vmatprep.subr.mxu0 0.0
    %v687 = vand.u32 %v24, 4294901760
    %v688 = vsub.f32 %v24, %v687
    %v689 = vand.u32 %v688, 4294901760
    %v690 = vsub.f32 %v688, %v689
    %v691 = vand.u32 %v690, 4294901760
    %692 = vmatpush1.msra.mxu0 %v691
    %693 = vmatprep.subr.mxu0 0.0
    %v694 = vand.u32 %v23, 4294901760
    %v695 = vsub.f32 %v23, %v694
    %v696 = vand.u32 %v695, 4294901760
    %v697 = vsub.f32 %v695, %v696
    %v698 = vand.u32 %v697, 4294901760
    %699 = vmatpush1.msra.mxu0 %v698
    %700 = vmatprep.subr.mxu0 0.0
    %v701 = vand.u32 %v22, 4294901760
    %v702 = vsub.f32 %v22, %v701
    %v703 = vand.u32 %v702, 4294901760
    %v704 = vsub.f32 %v702, %v703
    %v705 = vand.u32 %v704, 4294901760
    %706 = vmatpush1.msra.mxu0 %v705
    %707 = vmatprep.subr.mxu0 0.0
    %v708 = vand.u32 %v21, 4294901760
    %v709 = vsub.f32 %v21, %v708
    %v710 = vand.u32 %v709, 4294901760
    %v711 = vsub.f32 %v709, %v710
    %v712 = vand.u32 %v711, 4294901760
    %713 = vmatpush1.msra.mxu0 %v712
    %714 = vmatprep.subr.mxu0 0.0
    %v715 = vand.u32 %v20, 4294901760
    %v716 = vsub.f32 %v20, %v715
    %v717 = vand.u32 %v716, 4294901760
    %v718 = vsub.f32 %v716, %v717
    %v719 = vand.u32 %v718, 4294901760
    %720 = vmatpush1.msra.mxu0 %v719
    %721 = vmatprep.subr.mxu0 0.0
    %v722 = vand.u32 %v19, 4294901760
    %v723 = vsub.f32 %v19, %v722
    %v724 = vand.u32 %v723, 4294901760
    %v725 = vsub.f32 %v723, %v724
    %v726 = vand.u32 %v725, 4294901760
    %727 = vmatpush1.msra.mxu0 %v726
    %728 = vmatprep.subr.mxu0 0.0
    %v729 = vand.u32 %v18, 4294901760
    %v730 = vsub.f32 %v18, %v729
    %v731 = vand.u32 %v730, 4294901760
    %v732 = vsub.f32 %v730, %v731
    %v733 = vand.u32 %v732, 4294901760
    %734 = vmatpush1.msra.mxu0 %v733
    %735 = vmatprep.subr.mxu0 0.0
    %v736 = vand.u32 %v17, 4294901760
    %v737 = vsub.f32 %v17, %v736
    %v738 = vand.u32 %v737, 4294901760
    %v739 = vsub.f32 %v737, %v738
    %v740 = vand.u32 %v739, 4294901760
    %741 = vmatpush1.msra.mxu0 %v740
    %742 = vmatprep.subr.mxu0 0.0
    %743 = vmatpush2.msra.mxu0 0.0
    %744 = vmatprep.subr.mxu0 0.0
    %745 = vmatpush2.msra.mxu0 0.0
    %746 = vmatprep.subr.mxu0 0.0
    %747 = vmatpush2.msra.mxu0 0.0
    %748 = vmatprep.subr.mxu0 0.0
    %749 = vmatpush2.msra.mxu0 0.0
    %750 = vmatprep.subr.mxu0 0.0
    %751 = vmatpush2.msra.mxu0 0.0
    %752 = vmatprep.subr.mxu0 0.0
    %753 = vmatpush2.msra.mxu0 0.0
    %754 = vmatprep.subr.mxu0 0.0
    %755 = vmatpush2.msra.mxu0 0.0
    %756 = vmatprep.subr.mxu0 0.0
    %757 = vmatpush2.msra.mxu0 0.0
    %758 = vmatprep.subr.mxu0 0.0
    %759 = vmatpush2.msra.mxu0 0.0
    %760 = vmatprep.subr.mxu0 0.0
    %761 = vmatpush2.msra.mxu0 0.0
    %762 = vmatprep.subr.mxu0 0.0
    %763 = vmatpush2.msra.mxu0 0.0
    %764 = vmatprep.subr.mxu0 0.0
    %765 = vmatpush2.msra.mxu0 0.0
    %766 = vmatprep.subr.mxu0 0.0
    %767 = vmatpush2.msra.mxu0 0.0
    %768 = vmatprep.subr.mxu0 0.0
    %769 = vmatpush2.msra.mxu0 0.0
    %770 = vmatprep.subr.mxu0 0.0
    %771 = vmatpush2.msra.mxu0 0.0
    %772 = vmatprep.subr.mxu0 0.0
    %773 = vmatpush2.msra.mxu0 0.0
    %774 = vmatprep.mubr.f32.mxu0 0.0
    %v775 = vand.u32 %v585, 4294901760
    %776 = vmatmul.mubr.f32.gmra.mxu0 %v775
    %v777 = vpop.f32.mrf.mxu0
    %v778 = vadd.f32 %v667, %v777
    %v779 = vpop.f32.mrf.mxu0
    %780 = vdwg.mxu0
    %781 = vmatprep.subr.mxu0 0.0
    %782 = vmatpush1.msra.mxu0 0.0
    %783 = vmatprep.subr.mxu0 0.0
    %784 = vmatpush1.msra.mxu0 0.0
    %785 = vmatprep.subr.mxu0 0.0
    %786 = vmatpush1.msra.mxu0 0.0
    %787 = vmatprep.subr.mxu0 0.0
    %788 = vmatpush1.msra.mxu0 0.0
    %789 = vmatprep.subr.mxu0 0.0
    %790 = vmatpush1.msra.mxu0 0.0
    %791 = vmatprep.subr.mxu0 0.0
    %792 = vmatpush1.msra.mxu0 0.0
    %793 = vmatprep.subr.mxu0 0.0
    %794 = vmatpush1.msra.mxu0 0.0
    %795 = vmatprep.subr.mxu0 0.0
    %796 = vmatpush1.msra.mxu0 0.0
    %797 = vmatprep.subr.mxu0 0.0
    %v798 = vand.u32 %v24, 4294901760
    %v799 = vsub.f32 %v24, %v798
    %800 = vmatpush1.msra.mxu0 %v799
    %801 = vmatprep.subr.mxu0 0.0
    %v802 = vand.u32 %v23, 4294901760
    %v803 = vsub.f32 %v23, %v802
    %804 = vmatpush1.msra.mxu0 %v803
    %805 = vmatprep.subr.mxu0 0.0
    %v806 = vand.u32 %v22, 4294901760
    %v807 = vsub.f32 %v22, %v806
    %808 = vmatpush1.msra.mxu0 %v807
    %809 = vmatprep.subr.mxu0 0.0
    %v810 = vand.u32 %v21, 4294901760
    %v811 = vsub.f32 %v21, %v810
    %812 = vmatpush1.msra.mxu0 %v811
    %813 = vmatprep.subr.mxu0 0.0
    %v814 = vand.u32 %v20, 4294901760
    %v815 = vsub.f32 %v20, %v814
    %816 = vmatpush1.msra.mxu0 %v815
    %817 = vmatprep.subr.mxu0 0.0
    %v818 = vand.u32 %v19, 4294901760
    %v819 = vsub.f32 %v19, %v818
    %820 = vmatpush1.msra.mxu0 %v819
    %821 = vmatprep.subr.mxu0 0.0
    %v822 = vand.u32 %v18, 4294901760
    %v823 = vsub.f32 %v18, %v822
    %824 = vmatpush1.msra.mxu0 %v823
    %825 = vmatprep.subr.mxu0 0.0
    %v826 = vand.u32 %v17, 4294901760
    %v827 = vsub.f32 %v17, %v826
    %828 = vmatpush1.msra.mxu0 %v827
    %829 = vmatprep.subr.mxu0 0.0
    %830 = vmatpush2.msra.mxu0 0.0
    %831 = vmatprep.subr.mxu0 0.0
    %832 = vmatpush2.msra.mxu0 0.0
    %833 = vmatprep.subr.mxu0 0.0
    %834 = vmatpush2.msra.mxu0 0.0
    %835 = vmatprep.subr.mxu0 0.0
    %836 = vmatpush2.msra.mxu0 0.0
    %837 = vmatprep.subr.mxu0 0.0
    %838 = vmatpush2.msra.mxu0 0.0
    %839 = vmatprep.subr.mxu0 0.0
    %840 = vmatpush2.msra.mxu0 0.0
    %841 = vmatprep.subr.mxu0 0.0
    %842 = vmatpush2.msra.mxu0 0.0
    %843 = vmatprep.subr.mxu0 0.0
    %844 = vmatpush2.msra.mxu0 0.0
    %845 = vmatprep.subr.mxu0 0.0
    %846 = vmatpush2.msra.mxu0 0.0
    %847 = vmatprep.subr.mxu0 0.0
    %848 = vmatpush2.msra.mxu0 0.0
    %849 = vmatprep.subr.mxu0 0.0
    %850 = vmatpush2.msra.mxu0 0.0
    %851 = vmatprep.subr.mxu0 0.0
    %852 = vmatpush2.msra.mxu0 0.0
    %853 = vmatprep.subr.mxu0 0.0
    %854 = vmatpush2.msra.mxu0 0.0
    %855 = vmatprep.subr.mxu0 0.0
    %856 = vmatpush2.msra.mxu0 0.0
    %857 = vmatprep.subr.mxu0 0.0
    %858 = vmatpush2.msra.mxu0 0.0
    %859 = vmatprep.subr.mxu0 0.0
    %860 = vmatpush2.msra.mxu0 0.0
    %861 = vmatprep.mubr.f32.mxu0 0.0
    %v862 = vand.u32 %v585, 4294901760
    %v863 = vsub.f32 %v585, %v862
    %864 = vmatmul.mubr.f32.gmra.mxu0 %v863
    %v865 = vpop.f32.mrf.mxu0
    %v866 = vadd.f32 %v778, %v865
    %v867 = vpop.f32.mrf.mxu0
    %868 = vdwg.mxu0
    %869 = vmatprep.subr.mxu0 0.0
    %870 = vmatpush1.msra.mxu0 0.0
    %871 = vmatprep.subr.mxu0 0.0
    %872 = vmatpush1.msra.mxu0 0.0
    %873 = vmatprep.subr.mxu0 0.0
    %874 = vmatpush1.msra.mxu0 0.0
    %875 = vmatprep.subr.mxu0 0.0
    %876 = vmatpush1.msra.mxu0 0.0
    %877 = vmatprep.subr.mxu0 0.0
    %878 = vmatpush1.msra.mxu0 0.0
    %879 = vmatprep.subr.mxu0 0.0
    %880 = vmatpush1.msra.mxu0 0.0
    %881 = vmatprep.subr.mxu0 0.0
    %882 = vmatpush1.msra.mxu0 0.0
    %883 = vmatprep.subr.mxu0 0.0
    %884 = vmatpush1.msra.mxu0 0.0
    %885 = vmatprep.subr.mxu0 0.0
    %v886 = vand.u32 %v24, 4294901760
    %887 = vmatpush1.msra.mxu0 %v886
    %888 = vmatprep.subr.mxu0 0.0
    %v889 = vand.u32 %v23, 4294901760
    %890 = vmatpush1.msra.mxu0 %v889
    %891 = vmatprep.subr.mxu0 0.0
    %v892 = vand.u32 %v22, 4294901760
    %893 = vmatpush1.msra.mxu0 %v892
    %894 = vmatprep.subr.mxu0 0.0
    %v895 = vand.u32 %v21, 4294901760
    %896 = vmatpush1.msra.mxu0 %v895
    %897 = vmatprep.subr.mxu0 0.0
    %v898 = vand.u32 %v20, 4294901760
    %899 = vmatpush1.msra.mxu0 %v898
    %900 = vmatprep.subr.mxu0 0.0
    %v901 = vand.u32 %v19, 4294901760
    %902 = vmatpush1.msra.mxu0 %v901
    %903 = vmatprep.subr.mxu0 0.0
    %v904 = vand.u32 %v18, 4294901760
    %905 = vmatpush1.msra.mxu0 %v904
    %906 = vmatprep.subr.mxu0 0.0
    %v907 = vand.u32 %v17, 4294901760
    %908 = vmatpush1.msra.mxu0 %v907
    %909 = vmatprep.subr.mxu0 0.0
    %910 = vmatpush2.msra.mxu0 0.0
    %911 = vmatprep.subr.mxu0 0.0
    %912 = vmatpush2.msra.mxu0 0.0
    %913 = vmatprep.subr.mxu0 0.0
    %914 = vmatpush2.msra.mxu0 0.0
    %915 = vmatprep.subr.mxu0 0.0
    %916 = vmatpush2.msra.mxu0 0.0
    %917 = vmatprep.subr.mxu0 0.0
    %918 = vmatpush2.msra.mxu0 0.0
    %919 = vmatprep.subr.mxu0 0.0
    %920 = vmatpush2.msra.mxu0 0.0
    %921 = vmatprep.subr.mxu0 0.0
    %922 = vmatpush2.msra.mxu0 0.0
    %923 = vmatprep.subr.mxu0 0.0
    %924 = vmatpush2.msra.mxu0 0.0
    %925 = vmatprep.subr.mxu0 0.0
    %926 = vmatpush2.msra.mxu0 0.0
    %927 = vmatprep.subr.mxu0 0.0
    %928 = vmatpush2.msra.mxu0 0.0
    %929 = vmatprep.subr.mxu0 0.0
    %930 = vmatpush2.msra.mxu0 0.0
    %931 = vmatprep.subr.mxu0 0.0
    %932 = vmatpush2.msra.mxu0 0.0
    %933 = vmatprep.subr.mxu0 0.0
    %934 = vmatpush2.msra.mxu0 0.0
    %935 = vmatprep.subr.mxu0 0.0
    %936 = vmatpush2.msra.mxu0 0.0
    %937 = vmatprep.subr.mxu0 0.0
    %938 = vmatpush2.msra.mxu0 0.0
    %939 = vmatprep.subr.mxu0 0.0
    %940 = vmatpush2.msra.mxu0 0.0
    %941 = vmatprep.mubr.f32.mxu0 0.0
    %v942 = vand.u32 %v585, 4294901760
    %v943 = vsub.f32 %v585, %v942
    %v944 = vand.u32 %v943, 4294901760
    %945 = vmatmul.mubr.f32.gmra.mxu0 %v944
    %v946 = vpop.f32.mrf.mxu0
    %v947 = vadd.f32 %v866, %v946
    %v948 = vpop.f32.mrf.mxu0
    %949 = vdwg.mxu0
    %950 = vmatprep.subr.mxu0 0.0
    %951 = vmatpush1.msra.mxu0 0.0
    %952 = vmatprep.subr.mxu0 0.0
    %953 = vmatpush1.msra.mxu0 0.0
    %954 = vmatprep.subr.mxu0 0.0
    %955 = vmatpush1.msra.mxu0 0.0
    %956 = vmatprep.subr.mxu0 0.0
    %957 = vmatpush1.msra.mxu0 0.0
    %958 = vmatprep.subr.mxu0 0.0
    %959 = vmatpush1.msra.mxu0 0.0
    %960 = vmatprep.subr.mxu0 0.0
    %961 = vmatpush1.msra.mxu0 0.0
    %962 = vmatprep.subr.mxu0 0.0
    %963 = vmatpush1.msra.mxu0 0.0
    %964 = vmatprep.subr.mxu0 0.0
    %965 = vmatpush1.msra.mxu0 0.0
    %966 = vmatprep.subr.mxu0 0.0
    %v967 = vand.u32 %v24, 4294901760
    %v968 = vsub.f32 %v24, %v967
    %v969 = vand.u32 %v968, 4294901760
    %970 = vmatpush1.msra.mxu0 %v969
    %971 = vmatprep.subr.mxu0 0.0
    %v972 = vand.u32 %v23, 4294901760
    %v973 = vsub.f32 %v23, %v972
    %v974 = vand.u32 %v973, 4294901760
    %975 = vmatpush1.msra.mxu0 %v974
    %976 = vmatprep.subr.mxu0 0.0
    %v977 = vand.u32 %v22, 4294901760
    %v978 = vsub.f32 %v22, %v977
    %v979 = vand.u32 %v978, 4294901760
    %980 = vmatpush1.msra.mxu0 %v979
    %981 = vmatprep.subr.mxu0 0.0
    %v982 = vand.u32 %v21, 4294901760
    %v983 = vsub.f32 %v21, %v982
    %v984 = vand.u32 %v983, 4294901760
    %985 = vmatpush1.msra.mxu0 %v984
    %986 = vmatprep.subr.mxu0 0.0
    %v987 = vand.u32 %v20, 4294901760
    %v988 = vsub.f32 %v20, %v987
    %v989 = vand.u32 %v988, 4294901760
    %990 = vmatpush1.msra.mxu0 %v989
    %991 = vmatprep.subr.mxu0 0.0
    %v992 = vand.u32 %v19, 4294901760
    %v993 = vsub.f32 %v19, %v992
    %v994 = vand.u32 %v993, 4294901760
    %995 = vmatpush1.msra.mxu0 %v994
    %996 = vmatprep.subr.mxu0 0.0
    %v997 = vand.u32 %v18, 4294901760
    %v998 = vsub.f32 %v18, %v997
    %v999 = vand.u32 %v998, 4294901760
    %1000 = vmatpush1.msra.mxu0 %v999
    %1001 = vmatprep.subr.mxu0 0.0
    %v1002 = vand.u32 %v17, 4294901760
    %v1003 = vsub.f32 %v17, %v1002
    %v1004 = vand.u32 %v1003, 4294901760
    %1005 = vmatpush1.msra.mxu0 %v1004
    %1006 = vmatprep.subr.mxu0 0.0
    %1007 = vmatpush2.msra.mxu0 0.0
    %1008 = vmatprep.subr.mxu0 0.0
    %1009 = vmatpush2.msra.mxu0 0.0
    %1010 = vmatprep.subr.mxu0 0.0
    %1011 = vmatpush2.msra.mxu0 0.0
    %1012 = vmatprep.subr.mxu0 0.0
    %1013 = vmatpush2.msra.mxu0 0.0
    %1014 = vmatprep.subr.mxu0 0.0
    %1015 = vmatpush2.msra.mxu0 0.0
    %1016 = vmatprep.subr.mxu0 0.0
    %1017 = vmatpush2.msra.mxu0 0.0
    %1018 = vmatprep.subr.mxu0 0.0
    %1019 = vmatpush2.msra.mxu0 0.0
    %1020 = vmatprep.subr.mxu0 0.0
    %1021 = vmatpush2.msra.mxu0 0.0
    %1022 = vmatprep.subr.mxu0 0.0
    %1023 = vmatpush2.msra.mxu0 0.0
    %1024 = vmatprep.subr.mxu0 0.0
    %1025 = vmatpush2.msra.mxu0 0.0
    %1026 = vmatprep.subr.mxu0 0.0
    %1027 = vmatpush2.msra.mxu0 0.0
    %1028 = vmatprep.subr.mxu0 0.0
    %1029 = vmatpush2.msra.mxu0 0.0
    %1030 = vmatprep.subr.mxu0 0.0
    %1031 = vmatpush2.msra.mxu0 0.0
    %1032 = vmatprep.subr.mxu0 0.0
    %1033 = vmatpush2.msra.mxu0 0.0
    %1034 = vmatprep.subr.mxu0 0.0
    %1035 = vmatpush2.msra.mxu0 0.0
    %1036 = vmatprep.subr.mxu0 0.0
    %1037 = vmatpush2.msra.mxu0 0.0
    %1038 = vmatprep.mubr.f32.mxu0 0.0
    %v1039 = vand.u32 %v585, 4294901760
    %1040 = vmatmul.mubr.f32.gmra.mxu0 %v1039
    %v1041 = vpop.f32.mrf.mxu0
    %v1042 = vadd.f32 %v947, %v1041
    %v1043 = vpop.f32.mrf.mxu0
    %1044 = vdwg.mxu0
    %1045 = vmatprep.subr.mxu0 0.0
    %1046 = vmatpush1.msra.mxu0 0.0
    %1047 = vmatprep.subr.mxu0 0.0
    %1048 = vmatpush1.msra.mxu0 0.0
    %1049 = vmatprep.subr.mxu0 0.0
    %1050 = vmatpush1.msra.mxu0 0.0
    %1051 = vmatprep.subr.mxu0 0.0
    %1052 = vmatpush1.msra.mxu0 0.0
    %1053 = vmatprep.subr.mxu0 0.0
    %1054 = vmatpush1.msra.mxu0 0.0
    %1055 = vmatprep.subr.mxu0 0.0
    %1056 = vmatpush1.msra.mxu0 0.0
    %1057 = vmatprep.subr.mxu0 0.0
    %1058 = vmatpush1.msra.mxu0 0.0
    %1059 = vmatprep.subr.mxu0 0.0
    %1060 = vmatpush1.msra.mxu0 0.0
    %1061 = vmatprep.subr.mxu0 0.0
    %v1062 = vand.u32 %v24, 4294901760
    %1063 = vmatpush1.msra.mxu0 %v1062
    %1064 = vmatprep.subr.mxu0 0.0
    %v1065 = vand.u32 %v23, 4294901760
    %1066 = vmatpush1.msra.mxu0 %v1065
    %1067 = vmatprep.subr.mxu0 0.0
    %v1068 = vand.u32 %v22, 4294901760
    %1069 = vmatpush1.msra.mxu0 %v1068
    %1070 = vmatprep.subr.mxu0 0.0
    %v1071 = vand.u32 %v21, 4294901760
    %1072 = vmatpush1.msra.mxu0 %v1071
    %1073 = vmatprep.subr.mxu0 0.0
    %v1074 = vand.u32 %v20, 4294901760
    %1075 = vmatpush1.msra.mxu0 %v1074
    %1076 = vmatprep.subr.mxu0 0.0
    %v1077 = vand.u32 %v19, 4294901760
    %1078 = vmatpush1.msra.mxu0 %v1077
    %1079 = vmatprep.subr.mxu0 0.0
    %v1080 = vand.u32 %v18, 4294901760
    %1081 = vmatpush1.msra.mxu0 %v1080
    %1082 = vmatprep.subr.mxu0 0.0
    %v1083 = vand.u32 %v17, 4294901760
    %1084 = vmatpush1.msra.mxu0 %v1083
    %1085 = vmatprep.subr.mxu0 0.0
    %1086 = vmatpush2.msra.mxu0 0.0
    %1087 = vmatprep.subr.mxu0 0.0
    %1088 = vmatpush2.msra.mxu0 0.0
    %1089 = vmatprep.subr.mxu0 0.0
    %1090 = vmatpush2.msra.mxu0 0.0
    %1091 = vmatprep.subr.mxu0 0.0
    %1092 = vmatpush2.msra.mxu0 0.0
    %1093 = vmatprep.subr.mxu0 0.0
    %1094 = vmatpush2.msra.mxu0 0.0
    %1095 = vmatprep.subr.mxu0 0.0
    %1096 = vmatpush2.msra.mxu0 0.0
    %1097 = vmatprep.subr.mxu0 0.0
    %1098 = vmatpush2.msra.mxu0 0.0
    %1099 = vmatprep.subr.mxu0 0.0
    %1100 = vmatpush2.msra.mxu0 0.0
    %1101 = vmatprep.subr.mxu0 0.0
    %1102 = vmatpush2.msra.mxu0 0.0
    %1103 = vmatprep.subr.mxu0 0.0
    %1104 = vmatpush2.msra.mxu0 0.0
    %1105 = vmatprep.subr.mxu0 0.0
    %1106 = vmatpush2.msra.mxu0 0.0
    %1107 = vmatprep.subr.mxu0 0.0
    %1108 = vmatpush2.msra.mxu0 0.0
    %1109 = vmatprep.subr.mxu0 0.0
    %1110 = vmatpush2.msra.mxu0 0.0
    %1111 = vmatprep.subr.mxu0 0.0
    %1112 = vmatpush2.msra.mxu0 0.0
    %1113 = vmatprep.subr.mxu0 0.0
    %1114 = vmatpush2.msra.mxu0 0.0
    %1115 = vmatprep.subr.mxu0 0.0
    %1116 = vmatpush2.msra.mxu0 0.0
    %1117 = vmatprep.mubr.f32.mxu0 0.0
    %v1118 = vand.u32 %v585, 4294901760
    %1119 = vmatmul.mubr.f32.gmra.mxu0 %v1118
    %v1120 = vpop.f32.mrf.mxu0
    %v1121 = vadd.f32 %v1042, %v1120
    %v1122 = vpop.f32.mrf.mxu0
    %1123 = vdwg.mxu0
    %1124 = vset.pattern.permute.xlu0 2
    %1125 = vperm.xlu0 %1124, %v28
    %v1126 = vpop.permute.xlu0 %1125
    %vm1127 = vcmp.eq.s32.totalorder %v30, %v1126
    %v1128 = vsel %vm1127, 1, 0
    %v1129 = vcvt.s32.f32 %v1128
    %v1131 = vsel %vm37, %v1129, 0
    %1133 = vmatprep.subr.mxu0 0.0
    %1134 = vmatpush1.msra.mxu0 0.0
    %1135 = vmatprep.subr.mxu0 0.0
    %1136 = vmatpush1.msra.mxu0 0.0
    %1137 = vmatprep.subr.mxu0 0.0
    %1138 = vmatpush1.msra.mxu0 0.0
    %1139 = vmatprep.subr.mxu0 0.0
    %1140 = vmatpush1.msra.mxu0 0.0
    %1141 = vmatprep.subr.mxu0 0.0
    %1142 = vmatpush1.msra.mxu0 0.0
    %1143 = vmatprep.subr.mxu0 0.0
    %1144 = vmatpush1.msra.mxu0 0.0
    %1145 = vmatprep.subr.mxu0 0.0
    %1146 = vmatpush1.msra.mxu0 0.0
    %1147 = vmatprep.subr.mxu0 0.0
    %1148 = vmatpush1.msra.mxu0 0.0
    %1149 = vmatprep.subr.mxu0 0.0
    %v1150 = vand.u32 %v24, 4294901760
    %1151 = vmatpush1.msra.mxu0 %v1150
    %1152 = vmatprep.subr.mxu0 0.0
    %v1153 = vand.u32 %v23, 4294901760
    %1154 = vmatpush1.msra.mxu0 %v1153
    %1155 = vmatprep.subr.mxu0 0.0
    %v1156 = vand.u32 %v22, 4294901760
    %1157 = vmatpush1.msra.mxu0 %v1156
    %1158 = vmatprep.subr.mxu0 0.0
    %v1159 = vand.u32 %v21, 4294901760
    %1160 = vmatpush1.msra.mxu0 %v1159
    %1161 = vmatprep.subr.mxu0 0.0
    %v1162 = vand.u32 %v20, 4294901760
    %1163 = vmatpush1.msra.mxu0 %v1162
    %1164 = vmatprep.subr.mxu0 0.0
    %v1165 = vand.u32 %v19, 4294901760
    %1166 = vmatpush1.msra.mxu0 %v1165
    %1167 = vmatprep.subr.mxu0 0.0
    %v1168 = vand.u32 %v18, 4294901760
    %1169 = vmatpush1.msra.mxu0 %v1168
    %1170 = vmatprep.subr.mxu0 0.0
    %v1171 = vand.u32 %v17, 4294901760
    %1172 = vmatpush1.msra.mxu0 %v1171
    %1173 = vmatprep.subr.mxu0 0.0
    %1174 = vmatpush2.msra.mxu0 0.0
    %1175 = vmatprep.subr.mxu0 0.0
    %1176 = vmatpush2.msra.mxu0 0.0
    %1177 = vmatprep.subr.mxu0 0.0
    %1178 = vmatpush2.msra.mxu0 0.0
    %1179 = vmatprep.subr.mxu0 0.0
    %1180 = vmatpush2.msra.mxu0 0.0
    %1181 = vmatprep.subr.mxu0 0.0
    %1182 = vmatpush2.msra.mxu0 0.0
    %1183 = vmatprep.subr.mxu0 0.0
    %1184 = vmatpush2.msra.mxu0 0.0
    %1185 = vmatprep.subr.mxu0 0.0
    %1186 = vmatpush2.msra.mxu0 0.0
    %1187 = vmatprep.subr.mxu0 0.0
    %1188 = vmatpush2.msra.mxu0 0.0
    %1189 = vmatprep.subr.mxu0 0.0
    %1190 = vmatpush2.msra.mxu0 0.0
    %1191 = vmatprep.subr.mxu0 0.0
    %1192 = vmatpush2.msra.mxu0 0.0
    %1193 = vmatprep.subr.mxu0 0.0
    %1194 = vmatpush2.msra.mxu0 0.0
    %1195 = vmatprep.subr.mxu0 0.0
    %1196 = vmatpush2.msra.mxu0 0.0
    %1197 = vmatprep.subr.mxu0 0.0
    %1198 = vmatpush2.msra.mxu0 0.0
    %1199 = vmatprep.subr.mxu0 0.0
    %1200 = vmatpush2.msra.mxu0 0.0
    %1201 = vmatprep.subr.mxu0 0.0
    %1202 = vmatpush2.msra.mxu0 0.0
    %1203 = vmatprep.subr.mxu0 0.0
    %1204 = vmatpush2.msra.mxu0 0.0
    %1205 = vmatprep.mubr.f32.mxu0 0.0
    %v1206 = vand.u32 %v1131, 4294901760
    %v1207 = vsub.f32 %v1131, %v1206
    %v1208 = vand.u32 %v1207, 4294901760
    %v1209 = vsub.f32 %v1207, %v1208
    %v1210 = vand.u32 %v1209, 4294901760
    %1211 = vmatmul.mubr.f32.gmra.mxu0 %v1210
    %v1212 = vpop.f32.mrf.mxu0
    %v1213 = vadd.f32 0.0, %v1212
    %v1214 = vpop.f32.mrf.mxu0
    %1215 = vdwg.mxu0
    %1216 = vmatprep.subr.mxu0 0.0
    %1217 = vmatpush1.msra.mxu0 0.0
    %1218 = vmatprep.subr.mxu0 0.0
    %1219 = vmatpush1.msra.mxu0 0.0
    %1220 = vmatprep.subr.mxu0 0.0
    %1221 = vmatpush1.msra.mxu0 0.0
    %1222 = vmatprep.subr.mxu0 0.0
    %1223 = vmatpush1.msra.mxu0 0.0
    %1224 = vmatprep.subr.mxu0 0.0
    %1225 = vmatpush1.msra.mxu0 0.0
    %1226 = vmatprep.subr.mxu0 0.0
    %1227 = vmatpush1.msra.mxu0 0.0
    %1228 = vmatprep.subr.mxu0 0.0
    %1229 = vmatpush1.msra.mxu0 0.0
    %1230 = vmatprep.subr.mxu0 0.0
    %1231 = vmatpush1.msra.mxu0 0.0
    %1232 = vmatprep.subr.mxu0 0.0
    %v1233 = vand.u32 %v24, 4294901760
    %v1234 = vsub.f32 %v24, %v1233
    %v1235 = vand.u32 %v1234, 4294901760
    %v1236 = vsub.f32 %v1234, %v1235
    %v1237 = vand.u32 %v1236, 4294901760
    %1238 = vmatpush1.msra.mxu0 %v1237
    %1239 = vmatprep.subr.mxu0 0.0
    %v1240 = vand.u32 %v23, 4294901760
    %v1241 = vsub.f32 %v23, %v1240
    %v1242 = vand.u32 %v1241, 4294901760
    %v1243 = vsub.f32 %v1241, %v1242
    %v1244 = vand.u32 %v1243, 4294901760
    %1245 = vmatpush1.msra.mxu0 %v1244
    %1246 = vmatprep.subr.mxu0 0.0
    %v1247 = vand.u32 %v22, 4294901760
    %v1248 = vsub.f32 %v22, %v1247
    %v1249 = vand.u32 %v1248, 4294901760
    %v1250 = vsub.f32 %v1248, %v1249
    %v1251 = vand.u32 %v1250, 4294901760
    %1252 = vmatpush1.msra.mxu0 %v1251
    %1253 = vmatprep.subr.mxu0 0.0
    %v1254 = vand.u32 %v21, 4294901760
    %v1255 = vsub.f32 %v21, %v1254
    %v1256 = vand.u32 %v1255, 4294901760
    %v1257 = vsub.f32 %v1255, %v1256
    %v1258 = vand.u32 %v1257, 4294901760
    %1259 = vmatpush1.msra.mxu0 %v1258
    %1260 = vmatprep.subr.mxu0 0.0
    %v1261 = vand.u32 %v20, 4294901760
    %v1262 = vsub.f32 %v20, %v1261
    %v1263 = vand.u32 %v1262, 4294901760
    %v1264 = vsub.f32 %v1262, %v1263
    %v1265 = vand.u32 %v1264, 4294901760
    %1266 = vmatpush1.msra.mxu0 %v1265
    %1267 = vmatprep.subr.mxu0 0.0
    %v1268 = vand.u32 %v19, 4294901760
    %v1269 = vsub.f32 %v19, %v1268
    %v1270 = vand.u32 %v1269, 4294901760
    %v1271 = vsub.f32 %v1269, %v1270
    %v1272 = vand.u32 %v1271, 4294901760
    %1273 = vmatpush1.msra.mxu0 %v1272
    %1274 = vmatprep.subr.mxu0 0.0
    %v1275 = vand.u32 %v18, 4294901760
    %v1276 = vsub.f32 %v18, %v1275
    %v1277 = vand.u32 %v1276, 4294901760
    %v1278 = vsub.f32 %v1276, %v1277
    %v1279 = vand.u32 %v1278, 4294901760
    %1280 = vmatpush1.msra.mxu0 %v1279
    %1281 = vmatprep.subr.mxu0 0.0
    %v1282 = vand.u32 %v17, 4294901760
    %v1283 = vsub.f32 %v17, %v1282
    %v1284 = vand.u32 %v1283, 4294901760
    %v1285 = vsub.f32 %v1283, %v1284
    %v1286 = vand.u32 %v1285, 4294901760
    %1287 = vmatpush1.msra.mxu0 %v1286
    %1288 = vmatprep.subr.mxu0 0.0
    %1289 = vmatpush2.msra.mxu0 0.0
    %1290 = vmatprep.subr.mxu0 0.0
    %1291 = vmatpush2.msra.mxu0 0.0
    %1292 = vmatprep.subr.mxu0 0.0
    %1293 = vmatpush2.msra.mxu0 0.0
    %1294 = vmatprep.subr.mxu0 0.0
    %1295 = vmatpush2.msra.mxu0 0.0
    %1296 = vmatprep.subr.mxu0 0.0
    %1297 = vmatpush2.msra.mxu0 0.0
    %1298 = vmatprep.subr.mxu0 0.0
    %1299 = vmatpush2.msra.mxu0 0.0
    %1300 = vmatprep.subr.mxu0 0.0
    %1301 = vmatpush2.msra.mxu0 0.0
    %1302 = vmatprep.subr.mxu0 0.0
    %1303 = vmatpush2.msra.mxu0 0.0
    %1304 = vmatprep.subr.mxu0 0.0
    %1305 = vmatpush2.msra.mxu0 0.0
    %1306 = vmatprep.subr.mxu0 0.0
    %1307 = vmatpush2.msra.mxu0 0.0
    %1308 = vmatprep.subr.mxu0 0.0
    %1309 = vmatpush2.msra.mxu0 0.0
    %1310 = vmatprep.subr.mxu0 0.0
    %1311 = vmatpush2.msra.mxu0 0.0
    %1312 = vmatprep.subr.mxu0 0.0
    %1313 = vmatpush2.msra.mxu0 0.0
    %1314 = vmatprep.subr.mxu0 0.0
    %1315 = vmatpush2.msra.mxu0 0.0
    %1316 = vmatprep.subr.mxu0 0.0
    %1317 = vmatpush2.msra.mxu0 0.0
    %1318 = vmatprep.subr.mxu0 0.0
    %1319 = vmatpush2.msra.mxu0 0.0
    %1320 = vmatprep.mubr.f32.mxu0 0.0
    %v1321 = vand.u32 %v1131, 4294901760
    %1322 = vmatmul.mubr.f32.gmra.mxu0 %v1321
    %v1323 = vpop.f32.mrf.mxu0
    %v1324 = vadd.f32 %v1213, %v1323
    %v1325 = vpop.f32.mrf.mxu0
    %1326 = vdwg.mxu0
    %1327 = vmatprep.subr.mxu0 0.0
    %1328 = vmatpush1.msra.mxu0 0.0
    %1329 = vmatprep.subr.mxu0 0.0
    %1330 = vmatpush1.msra.mxu0 0.0
    %1331 = vmatprep.subr.mxu0 0.0
    %1332 = vmatpush1.msra.mxu0 0.0
    %1333 = vmatprep.subr.mxu0 0.0
    %1334 = vmatpush1.msra.mxu0 0.0
    %1335 = vmatprep.subr.mxu0 0.0
    %1336 = vmatpush1.msra.mxu0 0.0
    %1337 = vmatprep.subr.mxu0 0.0
    %1338 = vmatpush1.msra.mxu0 0.0
    %1339 = vmatprep.subr.mxu0 0.0
    %1340 = vmatpush1.msra.mxu0 0.0
    %1341 = vmatprep.subr.mxu0 0.0
    %1342 = vmatpush1.msra.mxu0 0.0
    %1343 = vmatprep.subr.mxu0 0.0
    %v1344 = vand.u32 %v24, 4294901760
    %v1345 = vsub.f32 %v24, %v1344
    %1346 = vmatpush1.msra.mxu0 %v1345
    %1347 = vmatprep.subr.mxu0 0.0
    %v1348 = vand.u32 %v23, 4294901760
    %v1349 = vsub.f32 %v23, %v1348
    %1350 = vmatpush1.msra.mxu0 %v1349
    %1351 = vmatprep.subr.mxu0 0.0
    %v1352 = vand.u32 %v22, 4294901760
    %v1353 = vsub.f32 %v22, %v1352
    %1354 = vmatpush1.msra.mxu0 %v1353
    %1355 = vmatprep.subr.mxu0 0.0
    %v1356 = vand.u32 %v21, 4294901760
    %v1357 = vsub.f32 %v21, %v1356
    %1358 = vmatpush1.msra.mxu0 %v1357
    %1359 = vmatprep.subr.mxu0 0.0
    %v1360 = vand.u32 %v20, 4294901760
    %v1361 = vsub.f32 %v20, %v1360
    %1362 = vmatpush1.msra.mxu0 %v1361
    %1363 = vmatprep.subr.mxu0 0.0
    %v1364 = vand.u32 %v19, 4294901760
    %v1365 = vsub.f32 %v19, %v1364
    %1366 = vmatpush1.msra.mxu0 %v1365
    %1367 = vmatprep.subr.mxu0 0.0
    %v1368 = vand.u32 %v18, 4294901760
    %v1369 = vsub.f32 %v18, %v1368
    %1370 = vmatpush1.msra.mxu0 %v1369
    %1371 = vmatprep.subr.mxu0 0.0
    %v1372 = vand.u32 %v17, 4294901760
    %v1373 = vsub.f32 %v17, %v1372
    %1374 = vmatpush1.msra.mxu0 %v1373
    %1375 = vmatprep.subr.mxu0 0.0
    %1376 = vmatpush2.msra.mxu0 0.0
    %1377 = vmatprep.subr.mxu0 0.0
    %1378 = vmatpush2.msra.mxu0 0.0
    %1379 = vmatprep.subr.mxu0 0.0
    %1380 = vmatpush2.msra.mxu0 0.0
    %1381 = vmatprep.subr.mxu0 0.0
    %1382 = vmatpush2.msra.mxu0 0.0
    %1383 = vmatprep.subr.mxu0 0.0
    %1384 = vmatpush2.msra.mxu0 0.0
    %1385 = vmatprep.subr.mxu0 0.0
    %1386 = vmatpush2.msra.mxu0 0.0
    %1387 = vmatprep.subr.mxu0 0.0
    %1388 = vmatpush2.msra.mxu0 0.0
    %1389 = vmatprep.subr.mxu0 0.0
    %1390 = vmatpush2.msra.mxu0 0.0
    %1391 = vmatprep.subr.mxu0 0.0
    %1392 = vmatpush2.msra.mxu0 0.0
    %1393 = vmatprep.subr.mxu0 0.0
    %1394 = vmatpush2.msra.mxu0 0.0
    %1395 = vmatprep.subr.mxu0 0.0
    %1396 = vmatpush2.msra.mxu0 0.0
    %1397 = vmatprep.subr.mxu0 0.0
    %1398 = vmatpush2.msra.mxu0 0.0
    %1399 = vmatprep.subr.mxu0 0.0
    %1400 = vmatpush2.msra.mxu0 0.0
    %1401 = vmatprep.subr.mxu0 0.0
    %1402 = vmatpush2.msra.mxu0 0.0
    %1403 = vmatprep.subr.mxu0 0.0
    %1404 = vmatpush2.msra.mxu0 0.0
    %1405 = vmatprep.subr.mxu0 0.0
    %1406 = vmatpush2.msra.mxu0 0.0
    %1407 = vmatprep.mubr.f32.mxu0 0.0
    %v1408 = vand.u32 %v1131, 4294901760
    %v1409 = vsub.f32 %v1131, %v1408
    %1410 = vmatmul.mubr.f32.gmra.mxu0 %v1409
    %v1411 = vpop.f32.mrf.mxu0
    %v1412 = vadd.f32 %v1324, %v1411
    %v1413 = vpop.f32.mrf.mxu0
    %1414 = vdwg.mxu0
    %1415 = vmatprep.subr.mxu0 0.0
    %1416 = vmatpush1.msra.mxu0 0.0
    %1417 = vmatprep.subr.mxu0 0.0
    %1418 = vmatpush1.msra.mxu0 0.0
    %1419 = vmatprep.subr.mxu0 0.0
    %1420 = vmatpush1.msra.mxu0 0.0
    %1421 = vmatprep.subr.mxu0 0.0
    %1422 = vmatpush1.msra.mxu0 0.0
    %1423 = vmatprep.subr.mxu0 0.0
    %1424 = vmatpush1.msra.mxu0 0.0
    %1425 = vmatprep.subr.mxu0 0.0
    %1426 = vmatpush1.msra.mxu0 0.0
    %1427 = vmatprep.subr.mxu0 0.0
    %1428 = vmatpush1.msra.mxu0 0.0
    %1429 = vmatprep.subr.mxu0 0.0
    %1430 = vmatpush1.msra.mxu0 0.0
    %1431 = vmatprep.subr.mxu0 0.0
    %v1432 = vand.u32 %v24, 4294901760
    %1433 = vmatpush1.msra.mxu0 %v1432
    %1434 = vmatprep.subr.mxu0 0.0
    %v1435 = vand.u32 %v23, 4294901760
    %1436 = vmatpush1.msra.mxu0 %v1435
    %1437 = vmatprep.subr.mxu0 0.0
    %v1438 = vand.u32 %v22, 4294901760
    %1439 = vmatpush1.msra.mxu0 %v1438
    %1440 = vmatprep.subr.mxu0 0.0
    %v1441 = vand.u32 %v21, 4294901760
    %1442 = vmatpush1.msra.mxu0 %v1441
    %1443 = vmatprep.subr.mxu0 0.0
    %v1444 = vand.u32 %v20, 4294901760
    %1445 = vmatpush1.msra.mxu0 %v1444
    %1446 = vmatprep.subr.mxu0 0.0
    %v1447 = vand.u32 %v19, 4294901760
    %1448 = vmatpush1.msra.mxu0 %v1447
    %1449 = vmatprep.subr.mxu0 0.0
    %v1450 = vand.u32 %v18, 4294901760
    %1451 = vmatpush1.msra.mxu0 %v1450
    %1452 = vmatprep.subr.mxu0 0.0
    %v1453 = vand.u32 %v17, 4294901760
    %1454 = vmatpush1.msra.mxu0 %v1453
    %1455 = vmatprep.subr.mxu0 0.0
    %1456 = vmatpush2.msra.mxu0 0.0
    %1457 = vmatprep.subr.mxu0 0.0
    %1458 = vmatpush2.msra.mxu0 0.0
    %1459 = vmatprep.subr.mxu0 0.0
    %1460 = vmatpush2.msra.mxu0 0.0
    %1461 = vmatprep.subr.mxu0 0.0
    %1462 = vmatpush2.msra.mxu0 0.0
    %1463 = vmatprep.subr.mxu0 0.0
    %1464 = vmatpush2.msra.mxu0 0.0
    %1465 = vmatprep.subr.mxu0 0.0
    %1466 = vmatpush2.msra.mxu0 0.0
    %1467 = vmatprep.subr.mxu0 0.0
    %1468 = vmatpush2.msra.mxu0 0.0
    %1469 = vmatprep.subr.mxu0 0.0
    %1470 = vmatpush2.msra.mxu0 0.0
    %1471 = vmatprep.subr.mxu0 0.0
    %1472 = vmatpush2.msra.mxu0 0.0
    %1473 = vmatprep.subr.mxu0 0.0
    %1474 = vmatpush2.msra.mxu0 0.0
    %1475 = vmatprep.subr.mxu0 0.0
    %1476 = vmatpush2.msra.mxu0 0.0
    %1477 = vmatprep.subr.mxu0 0.0
    %1478 = vmatpush2.msra.mxu0 0.0
    %1479 = vmatprep.subr.mxu0 0.0
    %1480 = vmatpush2.msra.mxu0 0.0
    %1481 = vmatprep.subr.mxu0 0.0
    %1482 = vmatpush2.msra.mxu0 0.0
    %1483 = vmatprep.subr.mxu0 0.0
    %1484 = vmatpush2.msra.mxu0 0.0
    %1485 = vmatprep.subr.mxu0 0.0
    %1486 = vmatpush2.msra.mxu0 0.0
    %1487 = vmatprep.mubr.f32.mxu0 0.0
    %v1488 = vand.u32 %v1131, 4294901760
    %v1489 = vsub.f32 %v1131, %v1488
    %v1490 = vand.u32 %v1489, 4294901760
    %1491 = vmatmul.mubr.f32.gmra.mxu0 %v1490
    %v1492 = vpop.f32.mrf.mxu0
    %v1493 = vadd.f32 %v1412, %v1492
    %v1494 = vpop.f32.mrf.mxu0
    %1495 = vdwg.mxu0
    %1496 = vmatprep.subr.mxu0 0.0
    %1497 = vmatpush1.msra.mxu0 0.0
    %1498 = vmatprep.subr.mxu0 0.0
    %1499 = vmatpush1.msra.mxu0 0.0
    %1500 = vmatprep.subr.mxu0 0.0
    %1501 = vmatpush1.msra.mxu0 0.0
    %1502 = vmatprep.subr.mxu0 0.0
    %1503 = vmatpush1.msra.mxu0 0.0
    %1504 = vmatprep.subr.mxu0 0.0
    %1505 = vmatpush1.msra.mxu0 0.0
    %1506 = vmatprep.subr.mxu0 0.0
    %1507 = vmatpush1.msra.mxu0 0.0
    %1508 = vmatprep.subr.mxu0 0.0
    %1509 = vmatpush1.msra.mxu0 0.0
    %1510 = vmatprep.subr.mxu0 0.0
    %1511 = vmatpush1.msra.mxu0 0.0
    %1512 = vmatprep.subr.mxu0 0.0
    %v1513 = vand.u32 %v24, 4294901760
    %v1514 = vsub.f32 %v24, %v1513
    %v1515 = vand.u32 %v1514, 4294901760
    %1516 = vmatpush1.msra.mxu0 %v1515
    %1517 = vmatprep.subr.mxu0 0.0
    %v1518 = vand.u32 %v23, 4294901760
    %v1519 = vsub.f32 %v23, %v1518
    %v1520 = vand.u32 %v1519, 4294901760
    %1521 = vmatpush1.msra.mxu0 %v1520
    %1522 = vmatprep.subr.mxu0 0.0
    %v1523 = vand.u32 %v22, 4294901760
    %v1524 = vsub.f32 %v22, %v1523
    %v1525 = vand.u32 %v1524, 4294901760
    %1526 = vmatpush1.msra.mxu0 %v1525
    %1527 = vmatprep.subr.mxu0 0.0
    %v1528 = vand.u32 %v21, 4294901760
    %v1529 = vsub.f32 %v21, %v1528
    %v1530 = vand.u32 %v1529, 4294901760
    %1531 = vmatpush1.msra.mxu0 %v1530
    %1532 = vmatprep.subr.mxu0 0.0
    %v1533 = vand.u32 %v20, 4294901760
    %v1534 = vsub.f32 %v20, %v1533
    %v1535 = vand.u32 %v1534, 4294901760
    %1536 = vmatpush1.msra.mxu0 %v1535
    %1537 = vmatprep.subr.mxu0 0.0
    %v1538 = vand.u32 %v19, 4294901760
    %v1539 = vsub.f32 %v19, %v1538
    %v1540 = vand.u32 %v1539, 4294901760
    %1541 = vmatpush1.msra.mxu0 %v1540
    %1542 = vmatprep.subr.mxu0 0.0
    %v1543 = vand.u32 %v18, 4294901760
    %v1544 = vsub.f32 %v18, %v1543
    %v1545 = vand.u32 %v1544, 4294901760
    %1546 = vmatpush1.msra.mxu0 %v1545
    %1547 = vmatprep.subr.mxu0 0.0
    %v1548 = vand.u32 %v17, 4294901760
    %v1549 = vsub.f32 %v17, %v1548
    %v1550 = vand.u32 %v1549, 4294901760
    %1551 = vmatpush1.msra.mxu0 %v1550
    %1552 = vmatprep.subr.mxu0 0.0
    %1553 = vmatpush2.msra.mxu0 0.0
    %1554 = vmatprep.subr.mxu0 0.0
    %1555 = vmatpush2.msra.mxu0 0.0
    %1556 = vmatprep.subr.mxu0 0.0
    %1557 = vmatpush2.msra.mxu0 0.0
    %1558 = vmatprep.subr.mxu0 0.0
    %1559 = vmatpush2.msra.mxu0 0.0
    %1560 = vmatprep.subr.mxu0 0.0
    %1561 = vmatpush2.msra.mxu0 0.0
    %1562 = vmatprep.subr.mxu0 0.0
    %1563 = vmatpush2.msra.mxu0 0.0
    %1564 = vmatprep.subr.mxu0 0.0
    %1565 = vmatpush2.msra.mxu0 0.0
    %1566 = vmatprep.subr.mxu0 0.0
    %1567 = vmatpush2.msra.mxu0 0.0
    %1568 = vmatprep.subr.mxu0 0.0
    %1569 = vmatpush2.msra.mxu0 0.0
    %1570 = vmatprep.subr.mxu0 0.0
    %1571 = vmatpush2.msra.mxu0 0.0
    %1572 = vmatprep.subr.mxu0 0.0
    %1573 = vmatpush2.msra.mxu0 0.0
    %1574 = vmatprep.subr.mxu0 0.0
    %1575 = vmatpush2.msra.mxu0 0.0
    %1576 = vmatprep.subr.mxu0 0.0
    %1577 = vmatpush2.msra.mxu0 0.0
    %1578 = vmatprep.subr.mxu0 0.0
    %1579 = vmatpush2.msra.mxu0 0.0
    %1580 = vmatprep.subr.mxu0 0.0
    %1581 = vmatpush2.msra.mxu0 0.0
    %1582 = vmatprep.subr.mxu0 0.0
    %1583 = vmatpush2.msra.mxu0 0.0
    %1584 = vmatprep.mubr.f32.mxu0 0.0
    %v1585 = vand.u32 %v1131, 4294901760
    %1586 = vmatmul.mubr.f32.gmra.mxu0 %v1585
    %v1587 = vpop.f32.mrf.mxu0
    %v1588 = vadd.f32 %v1493, %v1587
    %v1589 = vpop.f32.mrf.mxu0
    %1590 = vdwg.mxu0
    %1591 = vmatprep.subr.mxu0 0.0
    %1592 = vmatpush1.msra.mxu0 0.0
    %1593 = vmatprep.subr.mxu0 0.0
    %1594 = vmatpush1.msra.mxu0 0.0
    %1595 = vmatprep.subr.mxu0 0.0
    %1596 = vmatpush1.msra.mxu0 0.0
    %1597 = vmatprep.subr.mxu0 0.0
    %1598 = vmatpush1.msra.mxu0 0.0
    %1599 = vmatprep.subr.mxu0 0.0
    %1600 = vmatpush1.msra.mxu0 0.0
    %1601 = vmatprep.subr.mxu0 0.0
    %1602 = vmatpush1.msra.mxu0 0.0
    %1603 = vmatprep.subr.mxu0 0.0
    %1604 = vmatpush1.msra.mxu0 0.0
    %1605 = vmatprep.subr.mxu0 0.0
    %1606 = vmatpush1.msra.mxu0 0.0
    %1607 = vmatprep.subr.mxu0 0.0
    %v1608 = vand.u32 %v24, 4294901760
    %1609 = vmatpush1.msra.mxu0 %v1608
    %1610 = vmatprep.subr.mxu0 0.0
    %v1611 = vand.u32 %v23, 4294901760
    %1612 = vmatpush1.msra.mxu0 %v1611
    %1613 = vmatprep.subr.mxu0 0.0
    %v1614 = vand.u32 %v22, 4294901760
    %1615 = vmatpush1.msra.mxu0 %v1614
    %1616 = vmatprep.subr.mxu0 0.0
    %v1617 = vand.u32 %v21, 4294901760
    %1618 = vmatpush1.msra.mxu0 %v1617
    %1619 = vmatprep.subr.mxu0 0.0
    %v1620 = vand.u32 %v20, 4294901760
    %1621 = vmatpush1.msra.mxu0 %v1620
    %1622 = vmatprep.subr.mxu0 0.0
    %v1623 = vand.u32 %v19, 4294901760
    %1624 = vmatpush1.msra.mxu0 %v1623
    %1625 = vmatprep.subr.mxu0 0.0
    %v1626 = vand.u32 %v18, 4294901760
    %1627 = vmatpush1.msra.mxu0 %v1626
    %1628 = vmatprep.subr.mxu0 0.0
    %v1629 = vand.u32 %v17, 4294901760
    %1630 = vmatpush1.msra.mxu0 %v1629
    %1631 = vmatprep.subr.mxu0 0.0
    %1632 = vmatpush2.msra.mxu0 0.0
    %1633 = vmatprep.subr.mxu0 0.0
    %1634 = vmatpush2.msra.mxu0 0.0
    %1635 = vmatprep.subr.mxu0 0.0
    %1636 = vmatpush2.msra.mxu0 0.0
    %1637 = vmatprep.subr.mxu0 0.0
    %1638 = vmatpush2.msra.mxu0 0.0
    %1639 = vmatprep.subr.mxu0 0.0
    %1640 = vmatpush2.msra.mxu0 0.0
    %1641 = vmatprep.subr.mxu0 0.0
    %1642 = vmatpush2.msra.mxu0 0.0
    %1643 = vmatprep.subr.mxu0 0.0
    %1644 = vmatpush2.msra.mxu0 0.0
    %1645 = vmatprep.subr.mxu0 0.0
    %1646 = vmatpush2.msra.mxu0 0.0
    %1647 = vmatprep.subr.mxu0 0.0
    %1648 = vmatpush2.msra.mxu0 0.0
    %1649 = vmatprep.subr.mxu0 0.0
    %1650 = vmatpush2.msra.mxu0 0.0
    %1651 = vmatprep.subr.mxu0 0.0
    %1652 = vmatpush2.msra.mxu0 0.0
    %1653 = vmatprep.subr.mxu0 0.0
    %1654 = vmatpush2.msra.mxu0 0.0
    %1655 = vmatprep.subr.mxu0 0.0
    %1656 = vmatpush2.msra.mxu0 0.0
    %1657 = vmatprep.subr.mxu0 0.0
    %1658 = vmatpush2.msra.mxu0 0.0
    %1659 = vmatprep.subr.mxu0 0.0
    %1660 = vmatpush2.msra.mxu0 0.0
    %1661 = vmatprep.subr.mxu0 0.0
    %1662 = vmatpush2.msra.mxu0 0.0
    %1663 = vmatprep.mubr.f32.mxu0 0.0
    %v1664 = vand.u32 %v1131, 4294901760
    %1665 = vmatmul.mubr.f32.gmra.mxu0 %v1664
    %v1666 = vpop.f32.mrf.mxu0
    %v1667 = vadd.f32 %v1588, %v1666
    %v1668 = vpop.f32.mrf.mxu0
    %1669 = vdwg.mxu0
    %1670 = vset.pattern.permute.xlu0 3
    %1671 = vperm.xlu0 %1670, %v28
    %v1672 = vpop.permute.xlu0 %1671
    %vm1673 = vcmp.eq.s32.totalorder %v30, %v1672
    %v1674 = vsel %vm1673, 1, 0
    %v1675 = vcvt.s32.f32 %v1674
    %v1677 = vsel %vm37, %v1675, 0
    %1679 = vmatprep.subr.mxu0 0.0
    %1680 = vmatpush1.msra.mxu0 0.0
    %1681 = vmatprep.subr.mxu0 0.0
    %1682 = vmatpush1.msra.mxu0 0.0
    %1683 = vmatprep.subr.mxu0 0.0
    %1684 = vmatpush1.msra.mxu0 0.0
    %1685 = vmatprep.subr.mxu0 0.0
    %1686 = vmatpush1.msra.mxu0 0.0
    %1687 = vmatprep.subr.mxu0 0.0
    %1688 = vmatpush1.msra.mxu0 0.0
    %1689 = vmatprep.subr.mxu0 0.0
    %1690 = vmatpush1.msra.mxu0 0.0
    %1691 = vmatprep.subr.mxu0 0.0
    %1692 = vmatpush1.msra.mxu0 0.0
    %1693 = vmatprep.subr.mxu0 0.0
    %1694 = vmatpush1.msra.mxu0 0.0
    %1695 = vmatprep.subr.mxu0 0.0
    %v1696 = vand.u32 %v24, 4294901760
    %1697 = vmatpush1.msra.mxu0 %v1696
    %1698 = vmatprep.subr.mxu0 0.0
    %v1699 = vand.u32 %v23, 4294901760
    %1700 = vmatpush1.msra.mxu0 %v1699
    %1701 = vmatprep.subr.mxu0 0.0
    %v1702 = vand.u32 %v22, 4294901760
    %1703 = vmatpush1.msra.mxu0 %v1702
    %1704 = vmatprep.subr.mxu0 0.0
    %v1705 = vand.u32 %v21, 4294901760
    %1706 = vmatpush1.msra.mxu0 %v1705
    %1707 = vmatprep.subr.mxu0 0.0
    %v1708 = vand.u32 %v20, 4294901760
    %1709 = vmatpush1.msra.mxu0 %v1708
    %1710 = vmatprep.subr.mxu0 0.0
    %v1711 = vand.u32 %v19, 4294901760
    %1712 = vmatpush1.msra.mxu0 %v1711
    %1713 = vmatprep.subr.mxu0 0.0
    %v1714 = vand.u32 %v18, 4294901760
    %1715 = vmatpush1.msra.mxu0 %v1714
    %1716 = vmatprep.subr.mxu0 0.0
    %v1717 = vand.u32 %v17, 4294901760
    %1718 = vmatpush1.msra.mxu0 %v1717
    %1719 = vmatprep.subr.mxu0 0.0
    %1720 = vmatpush2.msra.mxu0 0.0
    %1721 = vmatprep.subr.mxu0 0.0
    %1722 = vmatpush2.msra.mxu0 0.0
    %1723 = vmatprep.subr.mxu0 0.0
    %1724 = vmatpush2.msra.mxu0 0.0
    %1725 = vmatprep.subr.mxu0 0.0
    %1726 = vmatpush2.msra.mxu0 0.0
    %1727 = vmatprep.subr.mxu0 0.0
    %1728 = vmatpush2.msra.mxu0 0.0
    %1729 = vmatprep.subr.mxu0 0.0
    %1730 = vmatpush2.msra.mxu0 0.0
    %1731 = vmatprep.subr.mxu0 0.0
    %1732 = vmatpush2.msra.mxu0 0.0
    %1733 = vmatprep.subr.mxu0 0.0
    %1734 = vmatpush2.msra.mxu0 0.0
    %1735 = vmatprep.subr.mxu0 0.0
    %1736 = vmatpush2.msra.mxu0 0.0
    %1737 = vmatprep.subr.mxu0 0.0
    %1738 = vmatpush2.msra.mxu0 0.0
    %1739 = vmatprep.subr.mxu0 0.0
    %1740 = vmatpush2.msra.mxu0 0.0
    %1741 = vmatprep.subr.mxu0 0.0
    %1742 = vmatpush2.msra.mxu0 0.0
    %1743 = vmatprep.subr.mxu0 0.0
    %1744 = vmatpush2.msra.mxu0 0.0
    %1745 = vmatprep.subr.mxu0 0.0
    %1746 = vmatpush2.msra.mxu0 0.0
    %1747 = vmatprep.subr.mxu0 0.0
    %1748 = vmatpush2.msra.mxu0 0.0
    %1749 = vmatprep.subr.mxu0 0.0
    %1750 = vmatpush2.msra.mxu0 0.0
    %1751 = vmatprep.mubr.f32.mxu0 0.0
    %v1752 = vand.u32 %v1677, 4294901760
    %v1753 = vsub.f32 %v1677, %v1752
    %v1754 = vand.u32 %v1753, 4294901760
    %v1755 = vsub.f32 %v1753, %v1754
    %v1756 = vand.u32 %v1755, 4294901760
    %1757 = vmatmul.mubr.f32.gmra.mxu0 %v1756
    %v1758 = vpop.f32.mrf.mxu0
    %v1759 = vadd.f32 0.0, %v1758
    %v1760 = vpop.f32.mrf.mxu0
    %1761 = vdwg.mxu0
    %1762 = vmatprep.subr.mxu0 0.0
    %1763 = vmatpush1.msra.mxu0 0.0
    %1764 = vmatprep.subr.mxu0 0.0
    %1765 = vmatpush1.msra.mxu0 0.0
    %1766 = vmatprep.subr.mxu0 0.0
    %1767 = vmatpush1.msra.mxu0 0.0
    %1768 = vmatprep.subr.mxu0 0.0
    %1769 = vmatpush1.msra.mxu0 0.0
    %1770 = vmatprep.subr.mxu0 0.0
    %1771 = vmatpush1.msra.mxu0 0.0
    %1772 = vmatprep.subr.mxu0 0.0
    %1773 = vmatpush1.msra.mxu0 0.0
    %1774 = vmatprep.subr.mxu0 0.0
    %1775 = vmatpush1.msra.mxu0 0.0
    %1776 = vmatprep.subr.mxu0 0.0
    %1777 = vmatpush1.msra.mxu0 0.0
    %1778 = vmatprep.subr.mxu0 0.0
    %v1779 = vand.u32 %v24, 4294901760
    %v1780 = vsub.f32 %v24, %v1779
    %v1781 = vand.u32 %v1780, 4294901760
    %v1782 = vsub.f32 %v1780, %v1781
    %v1783 = vand.u32 %v1782, 4294901760
    %1784 = vmatpush1.msra.mxu0 %v1783
    %1785 = vmatprep.subr.mxu0 0.0
    %v1786 = vand.u32 %v23, 4294901760
    %v1787 = vsub.f32 %v23, %v1786
    %v1788 = vand.u32 %v1787, 4294901760
    %v1789 = vsub.f32 %v1787, %v1788
    %v1790 = vand.u32 %v1789, 4294901760
    %1791 = vmatpush1.msra.mxu0 %v1790
    %1792 = vmatprep.subr.mxu0 0.0
    %v1793 = vand.u32 %v22, 4294901760
    %v1794 = vsub.f32 %v22, %v1793
    %v1795 = vand.u32 %v1794, 4294901760
    %v1796 = vsub.f32 %v1794, %v1795
    %v1797 = vand.u32 %v1796, 4294901760
    %1798 = vmatpush1.msra.mxu0 %v1797
    %1799 = vmatprep.subr.mxu0 0.0
    %v1800 = vand.u32 %v21, 4294901760
    %v1801 = vsub.f32 %v21, %v1800
    %v1802 = vand.u32 %v1801, 4294901760
    %v1803 = vsub.f32 %v1801, %v1802
    %v1804 = vand.u32 %v1803, 4294901760
    %1805 = vmatpush1.msra.mxu0 %v1804
    %1806 = vmatprep.subr.mxu0 0.0
    %v1807 = vand.u32 %v20, 4294901760
    %v1808 = vsub.f32 %v20, %v1807
    %v1809 = vand.u32 %v1808, 4294901760
    %v1810 = vsub.f32 %v1808, %v1809
    %v1811 = vand.u32 %v1810, 4294901760
    %1812 = vmatpush1.msra.mxu0 %v1811
    %1813 = vmatprep.subr.mxu0 0.0
    %v1814 = vand.u32 %v19, 4294901760
    %v1815 = vsub.f32 %v19, %v1814
    %v1816 = vand.u32 %v1815, 4294901760
    %v1817 = vsub.f32 %v1815, %v1816
    %v1818 = vand.u32 %v1817, 4294901760
    %1819 = vmatpush1.msra.mxu0 %v1818
    %1820 = vmatprep.subr.mxu0 0.0
    %v1821 = vand.u32 %v18, 4294901760
    %v1822 = vsub.f32 %v18, %v1821
    %v1823 = vand.u32 %v1822, 4294901760
    %v1824 = vsub.f32 %v1822, %v1823
    %v1825 = vand.u32 %v1824, 4294901760
    %1826 = vmatpush1.msra.mxu0 %v1825
    %1827 = vmatprep.subr.mxu0 0.0
    %v1828 = vand.u32 %v17, 4294901760
    %v1829 = vsub.f32 %v17, %v1828
    %v1830 = vand.u32 %v1829, 4294901760
    %v1831 = vsub.f32 %v1829, %v1830
    %v1832 = vand.u32 %v1831, 4294901760
    %1833 = vmatpush1.msra.mxu0 %v1832
    %1834 = vmatprep.subr.mxu0 0.0
    %1835 = vmatpush2.msra.mxu0 0.0
    %1836 = vmatprep.subr.mxu0 0.0
    %1837 = vmatpush2.msra.mxu0 0.0
    %1838 = vmatprep.subr.mxu0 0.0
    %1839 = vmatpush2.msra.mxu0 0.0
    %1840 = vmatprep.subr.mxu0 0.0
    %1841 = vmatpush2.msra.mxu0 0.0
    %1842 = vmatprep.subr.mxu0 0.0
    %1843 = vmatpush2.msra.mxu0 0.0
    %1844 = vmatprep.subr.mxu0 0.0
    %1845 = vmatpush2.msra.mxu0 0.0
    %1846 = vmatprep.subr.mxu0 0.0
    %1847 = vmatpush2.msra.mxu0 0.0
    %1848 = vmatprep.subr.mxu0 0.0
    %1849 = vmatpush2.msra.mxu0 0.0
    %1850 = vmatprep.subr.mxu0 0.0
    %1851 = vmatpush2.msra.mxu0 0.0
    %1852 = vmatprep.subr.mxu0 0.0
    %1853 = vmatpush2.msra.mxu0 0.0
    %1854 = vmatprep.subr.mxu0 0.0
    %1855 = vmatpush2.msra.mxu0 0.0
    %1856 = vmatprep.subr.mxu0 0.0
    %1857 = vmatpush2.msra.mxu0 0.0
    %1858 = vmatprep.subr.mxu0 0.0
    %1859 = vmatpush2.msra.mxu0 0.0
    %1860 = vmatprep.subr.mxu0 0.0
    %1861 = vmatpush2.msra.mxu0 0.0
    %1862 = vmatprep.subr.mxu0 0.0
    %1863 = vmatpush2.msra.mxu0 0.0
    %1864 = vmatprep.subr.mxu0 0.0
    %1865 = vmatpush2.msra.mxu0 0.0
    %1866 = vmatprep.mubr.f32.mxu0 0.0
    %v1867 = vand.u32 %v1677, 4294901760
    %1868 = vmatmul.mubr.f32.gmra.mxu0 %v1867
    %v1869 = vpop.f32.mrf.mxu0
    %v1870 = vadd.f32 %v1759, %v1869
    %v1871 = vpop.f32.mrf.mxu0
    %1872 = vdwg.mxu0
    %1873 = vmatprep.subr.mxu0 0.0
    %1874 = vmatpush1.msra.mxu0 0.0
    %1875 = vmatprep.subr.mxu0 0.0
    %1876 = vmatpush1.msra.mxu0 0.0
    %1877 = vmatprep.subr.mxu0 0.0
    %1878 = vmatpush1.msra.mxu0 0.0
    %1879 = vmatprep.subr.mxu0 0.0
    %1880 = vmatpush1.msra.mxu0 0.0
    %1881 = vmatprep.subr.mxu0 0.0
    %1882 = vmatpush1.msra.mxu0 0.0
    %1883 = vmatprep.subr.mxu0 0.0
    %1884 = vmatpush1.msra.mxu0 0.0
    %1885 = vmatprep.subr.mxu0 0.0
    %1886 = vmatpush1.msra.mxu0 0.0
    %1887 = vmatprep.subr.mxu0 0.0
    %1888 = vmatpush1.msra.mxu0 0.0
    %1889 = vmatprep.subr.mxu0 0.0
    %v1890 = vand.u32 %v24, 4294901760
    %v1891 = vsub.f32 %v24, %v1890
    %1892 = vmatpush1.msra.mxu0 %v1891
    %1893 = vmatprep.subr.mxu0 0.0
    %v1894 = vand.u32 %v23, 4294901760
    %v1895 = vsub.f32 %v23, %v1894
    %1896 = vmatpush1.msra.mxu0 %v1895
    %1897 = vmatprep.subr.mxu0 0.0
    %v1898 = vand.u32 %v22, 4294901760
    %v1899 = vsub.f32 %v22, %v1898
    %1900 = vmatpush1.msra.mxu0 %v1899
    %1901 = vmatprep.subr.mxu0 0.0
    %v1902 = vand.u32 %v21, 4294901760
    %v1903 = vsub.f32 %v21, %v1902
    %1904 = vmatpush1.msra.mxu0 %v1903
    %1905 = vmatprep.subr.mxu0 0.0
    %v1906 = vand.u32 %v20, 4294901760
    %v1907 = vsub.f32 %v20, %v1906
    %1908 = vmatpush1.msra.mxu0 %v1907
    %1909 = vmatprep.subr.mxu0 0.0
    %v1910 = vand.u32 %v19, 4294901760
    %v1911 = vsub.f32 %v19, %v1910
    %1912 = vmatpush1.msra.mxu0 %v1911
    %1913 = vmatprep.subr.mxu0 0.0
    %v1914 = vand.u32 %v18, 4294901760
    %v1915 = vsub.f32 %v18, %v1914
    %1916 = vmatpush1.msra.mxu0 %v1915
    %1917 = vmatprep.subr.mxu0 0.0
    %v1918 = vand.u32 %v17, 4294901760
    %v1919 = vsub.f32 %v17, %v1918
    %1920 = vmatpush1.msra.mxu0 %v1919
    %1921 = vmatprep.subr.mxu0 0.0
    %1922 = vmatpush2.msra.mxu0 0.0
    %1923 = vmatprep.subr.mxu0 0.0
    %1924 = vmatpush2.msra.mxu0 0.0
    %1925 = vmatprep.subr.mxu0 0.0
    %1926 = vmatpush2.msra.mxu0 0.0
    %1927 = vmatprep.subr.mxu0 0.0
    %1928 = vmatpush2.msra.mxu0 0.0
    %1929 = vmatprep.subr.mxu0 0.0
    %1930 = vmatpush2.msra.mxu0 0.0
    %1931 = vmatprep.subr.mxu0 0.0
    %1932 = vmatpush2.msra.mxu0 0.0
    %1933 = vmatprep.subr.mxu0 0.0
    %1934 = vmatpush2.msra.mxu0 0.0
    %1935 = vmatprep.subr.mxu0 0.0
    %1936 = vmatpush2.msra.mxu0 0.0
    %1937 = vmatprep.subr.mxu0 0.0
    %1938 = vmatpush2.msra.mxu0 0.0
    %1939 = vmatprep.subr.mxu0 0.0
    %1940 = vmatpush2.msra.mxu0 0.0
    %1941 = vmatprep.subr.mxu0 0.0
    %1942 = vmatpush2.msra.mxu0 0.0
    %1943 = vmatprep.subr.mxu0 0.0
    %1944 = vmatpush2.msra.mxu0 0.0
    %1945 = vmatprep.subr.mxu0 0.0
    %1946 = vmatpush2.msra.mxu0 0.0
    %1947 = vmatprep.subr.mxu0 0.0
    %1948 = vmatpush2.msra.mxu0 0.0
    %1949 = vmatprep.subr.mxu0 0.0
    %1950 = vmatpush2.msra.mxu0 0.0
    %1951 = vmatprep.subr.mxu0 0.0
    %1952 = vmatpush2.msra.mxu0 0.0
    %1953 = vmatprep.mubr.f32.mxu0 0.0
    %v1954 = vand.u32 %v1677, 4294901760
    %v1955 = vsub.f32 %v1677, %v1954
    %1956 = vmatmul.mubr.f32.gmra.mxu0 %v1955
    %v1957 = vpop.f32.mrf.mxu0
    %v1958 = vadd.f32 %v1870, %v1957
    %v1959 = vpop.f32.mrf.mxu0
    %1960 = vdwg.mxu0
    %1961 = vmatprep.subr.mxu0 0.0
    %1962 = vmatpush1.msra.mxu0 0.0
    %1963 = vmatprep.subr.mxu0 0.0
    %1964 = vmatpush1.msra.mxu0 0.0
    %1965 = vmatprep.subr.mxu0 0.0
    %1966 = vmatpush1.msra.mxu0 0.0
    %1967 = vmatprep.subr.mxu0 0.0
    %1968 = vmatpush1.msra.mxu0 0.0
    %1969 = vmatprep.subr.mxu0 0.0
    %1970 = vmatpush1.msra.mxu0 0.0
    %1971 = vmatprep.subr.mxu0 0.0
    %1972 = vmatpush1.msra.mxu0 0.0
    %1973 = vmatprep.subr.mxu0 0.0
    %1974 = vmatpush1.msra.mxu0 0.0
    %1975 = vmatprep.subr.mxu0 0.0
    %1976 = vmatpush1.msra.mxu0 0.0
    %1977 = vmatprep.subr.mxu0 0.0
    %v1978 = vand.u32 %v24, 4294901760
    %1979 = vmatpush1.msra.mxu0 %v1978
    %1980 = vmatprep.subr.mxu0 0.0
    %v1981 = vand.u32 %v23, 4294901760
    %1982 = vmatpush1.msra.mxu0 %v1981
    %1983 = vmatprep.subr.mxu0 0.0
    %v1984 = vand.u32 %v22, 4294901760
    %1985 = vmatpush1.msra.mxu0 %v1984
    %1986 = vmatprep.subr.mxu0 0.0
    %v1987 = vand.u32 %v21, 4294901760
    %1988 = vmatpush1.msra.mxu0 %v1987
    %1989 = vmatprep.subr.mxu0 0.0
    %v1990 = vand.u32 %v20, 4294901760
    %1991 = vmatpush1.msra.mxu0 %v1990
    %1992 = vmatprep.subr.mxu0 0.0
    %v1993 = vand.u32 %v19, 4294901760
    %1994 = vmatpush1.msra.mxu0 %v1993
    %1995 = vmatprep.subr.mxu0 0.0
    %v1996 = vand.u32 %v18, 4294901760
    %1997 = vmatpush1.msra.mxu0 %v1996
    %1998 = vmatprep.subr.mxu0 0.0
    %v1999 = vand.u32 %v17, 4294901760
    %2000 = vmatpush1.msra.mxu0 %v1999
    %2001 = vmatprep.subr.mxu0 0.0
    %2002 = vmatpush2.msra.mxu0 0.0
    %2003 = vmatprep.subr.mxu0 0.0
    %2004 = vmatpush2.msra.mxu0 0.0
    %2005 = vmatprep.subr.mxu0 0.0
    %2006 = vmatpush2.msra.mxu0 0.0
    %2007 = vmatprep.subr.mxu0 0.0
    %2008 = vmatpush2.msra.mxu0 0.0
    %2009 = vmatprep.subr.mxu0 0.0
    %2010 = vmatpush2.msra.mxu0 0.0
    %2011 = vmatprep.subr.mxu0 0.0
    %2012 = vmatpush2.msra.mxu0 0.0
    %2013 = vmatprep.subr.mxu0 0.0
    %2014 = vmatpush2.msra.mxu0 0.0
    %2015 = vmatprep.subr.mxu0 0.0
    %2016 = vmatpush2.msra.mxu0 0.0
    %2017 = vmatprep.subr.mxu0 0.0
    %2018 = vmatpush2.msra.mxu0 0.0
    %2019 = vmatprep.subr.mxu0 0.0
    %2020 = vmatpush2.msra.mxu0 0.0
    %2021 = vmatprep.subr.mxu0 0.0
    %2022 = vmatpush2.msra.mxu0 0.0
    %2023 = vmatprep.subr.mxu0 0.0
    %2024 = vmatpush2.msra.mxu0 0.0
    %2025 = vmatprep.subr.mxu0 0.0
    %2026 = vmatpush2.msra.mxu0 0.0
    %2027 = vmatprep.subr.mxu0 0.0
    %2028 = vmatpush2.msra.mxu0 0.0
    %2029 = vmatprep.subr.mxu0 0.0
    %2030 = vmatpush2.msra.mxu0 0.0
    %2031 = vmatprep.subr.mxu0 0.0
    %2032 = vmatpush2.msra.mxu0 0.0
    %2033 = vmatprep.mubr.f32.mxu0 0.0
    %v2034 = vand.u32 %v1677, 4294901760
    %v2035 = vsub.f32 %v1677, %v2034
    %v2036 = vand.u32 %v2035, 4294901760
    %2037 = vmatmul.mubr.f32.gmra.mxu0 %v2036
    %v2038 = vpop.f32.mrf.mxu0
    %v2039 = vadd.f32 %v1958, %v2038
    %v2040 = vpop.f32.mrf.mxu0
    %2041 = vdwg.mxu0
    %2042 = vmatprep.subr.mxu0 0.0
    %2043 = vmatpush1.msra.mxu0 0.0
    %2044 = vmatprep.subr.mxu0 0.0
    %2045 = vmatpush1.msra.mxu0 0.0
    %2046 = vmatprep.subr.mxu0 0.0
    %2047 = vmatpush1.msra.mxu0 0.0
    %2048 = vmatprep.subr.mxu0 0.0
    %2049 = vmatpush1.msra.mxu0 0.0
    %2050 = vmatprep.subr.mxu0 0.0
    %2051 = vmatpush1.msra.mxu0 0.0
    %2052 = vmatprep.subr.mxu0 0.0
    %2053 = vmatpush1.msra.mxu0 0.0
    %2054 = vmatprep.subr.mxu0 0.0
    %2055 = vmatpush1.msra.mxu0 0.0
    %2056 = vmatprep.subr.mxu0 0.0
    %2057 = vmatpush1.msra.mxu0 0.0
    %2058 = vmatprep.subr.mxu0 0.0
    %v2059 = vand.u32 %v24, 4294901760
    %v2060 = vsub.f32 %v24, %v2059
    %v2061 = vand.u32 %v2060, 4294901760
    %2062 = vmatpush1.msra.mxu0 %v2061
    %2063 = vmatprep.subr.mxu0 0.0
    %v2064 = vand.u32 %v23, 4294901760
    %v2065 = vsub.f32 %v23, %v2064
    %v2066 = vand.u32 %v2065, 4294901760
    %2067 = vmatpush1.msra.mxu0 %v2066
    %2068 = vmatprep.subr.mxu0 0.0
    %v2069 = vand.u32 %v22, 4294901760
    %v2070 = vsub.f32 %v22, %v2069
    %v2071 = vand.u32 %v2070, 4294901760
    %2072 = vmatpush1.msra.mxu0 %v2071
    %2073 = vmatprep.subr.mxu0 0.0
    %v2074 = vand.u32 %v21, 4294901760
    %v2075 = vsub.f32 %v21, %v2074
    %v2076 = vand.u32 %v2075, 4294901760
    %2077 = vmatpush1.msra.mxu0 %v2076
    %2078 = vmatprep.subr.mxu0 0.0
    %v2079 = vand.u32 %v20, 4294901760
    %v2080 = vsub.f32 %v20, %v2079
    %v2081 = vand.u32 %v2080, 4294901760
    %2082 = vmatpush1.msra.mxu0 %v2081
    %2083 = vmatprep.subr.mxu0 0.0
    %v2084 = vand.u32 %v19, 4294901760
    %v2085 = vsub.f32 %v19, %v2084
    %v2086 = vand.u32 %v2085, 4294901760
    %2087 = vmatpush1.msra.mxu0 %v2086
    %2088 = vmatprep.subr.mxu0 0.0
    %v2089 = vand.u32 %v18, 4294901760
    %v2090 = vsub.f32 %v18, %v2089
    %v2091 = vand.u32 %v2090, 4294901760
    %2092 = vmatpush1.msra.mxu0 %v2091
    %2093 = vmatprep.subr.mxu0 0.0
    %v2094 = vand.u32 %v17, 4294901760
    %v2095 = vsub.f32 %v17, %v2094
    %v2096 = vand.u32 %v2095, 4294901760
    %2097 = vmatpush1.msra.mxu0 %v2096
    %2098 = vmatprep.subr.mxu0 0.0
    %2099 = vmatpush2.msra.mxu0 0.0
    %2100 = vmatprep.subr.mxu0 0.0
    %2101 = vmatpush2.msra.mxu0 0.0
    %2102 = vmatprep.subr.mxu0 0.0
    %2103 = vmatpush2.msra.mxu0 0.0
    %2104 = vmatprep.subr.mxu0 0.0
    %2105 = vmatpush2.msra.mxu0 0.0
    %2106 = vmatprep.subr.mxu0 0.0
    %2107 = vmatpush2.msra.mxu0 0.0
    %2108 = vmatprep.subr.mxu0 0.0
    %2109 = vmatpush2.msra.mxu0 0.0
    %2110 = vmatprep.subr.mxu0 0.0
    %2111 = vmatpush2.msra.mxu0 0.0
    %2112 = vmatprep.subr.mxu0 0.0
    %2113 = vmatpush2.msra.mxu0 0.0
    %2114 = vmatprep.subr.mxu0 0.0
    %2115 = vmatpush2.msra.mxu0 0.0
    %2116 = vmatprep.subr.mxu0 0.0
    %2117 = vmatpush2.msra.mxu0 0.0
    %2118 = vmatprep.subr.mxu0 0.0
    %2119 = vmatpush2.msra.mxu0 0.0
    %2120 = vmatprep.subr.mxu0 0.0
    %2121 = vmatpush2.msra.mxu0 0.0
    %2122 = vmatprep.subr.mxu0 0.0
    %2123 = vmatpush2.msra.mxu0 0.0
    %2124 = vmatprep.subr.mxu0 0.0
    %2125 = vmatpush2.msra.mxu0 0.0
    %2126 = vmatprep.subr.mxu0 0.0
    %2127 = vmatpush2.msra.mxu0 0.0
    %2128 = vmatprep.subr.mxu0 0.0
    %2129 = vmatpush2.msra.mxu0 0.0
    %2130 = vmatprep.mubr.f32.mxu0 0.0
    %v2131 = vand.u32 %v1677, 4294901760
    %2132 = vmatmul.mubr.f32.gmra.mxu0 %v2131
    %v2133 = vpop.f32.mrf.mxu0
    %v2134 = vadd.f32 %v2039, %v2133
    %v2135 = vpop.f32.mrf.mxu0
    %2136 = vdwg.mxu0
    %2137 = vmatprep.subr.mxu0 0.0
    %2138 = vmatpush1.msra.mxu0 0.0
    %2139 = vmatprep.subr.mxu0 0.0
    %2140 = vmatpush1.msra.mxu0 0.0
    %2141 = vmatprep.subr.mxu0 0.0
    %2142 = vmatpush1.msra.mxu0 0.0
    %2143 = vmatprep.subr.mxu0 0.0
    %2144 = vmatpush1.msra.mxu0 0.0
    %2145 = vmatprep.subr.mxu0 0.0
    %2146 = vmatpush1.msra.mxu0 0.0
    %2147 = vmatprep.subr.mxu0 0.0
    %2148 = vmatpush1.msra.mxu0 0.0
    %2149 = vmatprep.subr.mxu0 0.0
    %2150 = vmatpush1.msra.mxu0 0.0
    %2151 = vmatprep.subr.mxu0 0.0
    %2152 = vmatpush1.msra.mxu0 0.0
    %2153 = vmatprep.subr.mxu0 0.0
    %v2154 = vand.u32 %v24, 4294901760
    %2155 = vmatpush1.msra.mxu0 %v2154
    %2156 = vmatprep.subr.mxu0 0.0
    %v2157 = vand.u32 %v23, 4294901760
    %2158 = vmatpush1.msra.mxu0 %v2157
    %2159 = vmatprep.subr.mxu0 0.0
    %v2160 = vand.u32 %v22, 4294901760
    %2161 = vmatpush1.msra.mxu0 %v2160
    %2162 = vmatprep.subr.mxu0 0.0
    %v2163 = vand.u32 %v21, 4294901760
    %2164 = vmatpush1.msra.mxu0 %v2163
    %2165 = vmatprep.subr.mxu0 0.0
    %v2166 = vand.u32 %v20, 4294901760
    %2167 = vmatpush1.msra.mxu0 %v2166
    %2168 = vmatprep.subr.mxu0 0.0
    %v2169 = vand.u32 %v19, 4294901760
    %2170 = vmatpush1.msra.mxu0 %v2169
    %2171 = vmatprep.subr.mxu0 0.0
    %v2172 = vand.u32 %v18, 4294901760
    %2173 = vmatpush1.msra.mxu0 %v2172
    %2174 = vmatprep.subr.mxu0 0.0
    %v2175 = vand.u32 %v17, 4294901760
    %2176 = vmatpush1.msra.mxu0 %v2175
    %2177 = vmatprep.subr.mxu0 0.0
    %2178 = vmatpush2.msra.mxu0 0.0
    %2179 = vmatprep.subr.mxu0 0.0
    %2180 = vmatpush2.msra.mxu0 0.0
    %2181 = vmatprep.subr.mxu0 0.0
    %2182 = vmatpush2.msra.mxu0 0.0
    %2183 = vmatprep.subr.mxu0 0.0
    %2184 = vmatpush2.msra.mxu0 0.0
    %2185 = vmatprep.subr.mxu0 0.0
    %2186 = vmatpush2.msra.mxu0 0.0
    %2187 = vmatprep.subr.mxu0 0.0
    %2188 = vmatpush2.msra.mxu0 0.0
    %2189 = vmatprep.subr.mxu0 0.0
    %2190 = vmatpush2.msra.mxu0 0.0
    %2191 = vmatprep.subr.mxu0 0.0
    %2192 = vmatpush2.msra.mxu0 0.0
    %2193 = vmatprep.subr.mxu0 0.0
    %2194 = vmatpush2.msra.mxu0 0.0
    %2195 = vmatprep.subr.mxu0 0.0
    %2196 = vmatpush2.msra.mxu0 0.0
    %2197 = vmatprep.subr.mxu0 0.0
    %2198 = vmatpush2.msra.mxu0 0.0
    %2199 = vmatprep.subr.mxu0 0.0
    %2200 = vmatpush2.msra.mxu0 0.0
    %2201 = vmatprep.subr.mxu0 0.0
    %2202 = vmatpush2.msra.mxu0 0.0
    %2203 = vmatprep.subr.mxu0 0.0
    %2204 = vmatpush2.msra.mxu0 0.0
    %2205 = vmatprep.subr.mxu0 0.0
    %2206 = vmatpush2.msra.mxu0 0.0
    %2207 = vmatprep.subr.mxu0 0.0
    %2208 = vmatpush2.msra.mxu0 0.0
    %2209 = vmatprep.mubr.f32.mxu0 0.0
    %v2210 = vand.u32 %v1677, 4294901760
    %2211 = vmatmul.mubr.f32.gmra.mxu0 %v2210
    %v2212 = vpop.f32.mrf.mxu0
    %v2213 = vadd.f32 %v2134, %v2212
    %v2214 = vpop.f32.mrf.mxu0
    %2215 = vdwg.mxu0
    %2217 = vrot.lane.b32.xlu0 %v1121, 32
    %v2218 = vpop.permute.xlu0 %2217
    %2221 = vrot.lane.b32.xlu0 %v1667, 64
    %v2222 = vpop.permute.xlu0 %2221
    %2225 = vrot.lane.b32.xlu0 %v2213, 96
    %v2226 = vpop.permute.xlu0 %2225
    %vm2228 = vcmask 261120
    %v2229 = vsel %vm2228, %v575, %v2218
    %v2230 = vsel %vm37, %v2229, %v2222
    %vm2231 = vcmask 785408
    %v2232 = vsel %vm2231, %v2230, %v2226
    %v2233 = vld [vmem:[#allocation2] sm:$0xff]
    %v2234 = vadd.f32 %v2233, %v2232
    %2235 = vst [vmem:[#allocation2] sm:$0xff] %v2234
    // Predicated region
    $region14: #{tpu_custom_call.1} parent=1 // pred_check
      %p2236 = pneg %p12
    $region15: #{tpu_custom_call.1} parent=1 // pred_check_branch
      %2238 = sbr.rel (%p2236) target = $region17
    $region16: #{tpu_custom_call.1} parent=1 // pred_region
      %v2239 = vld [vmem:[#allocation2] sm:$0xff]
      %2240 = vst [vmem:[#allocation3] sm:$0xff] %v2239
    $region17: #{tpu_custom_call.1} parent=1 // pred_fallthru
      _
    // Predicated region
    $region18: #{tpu_custom_call.1} parent=1 // pred_check
      _
    $region19: #{tpu_custom_call.1} parent=1 // pred_check_branch
      %2242 = sbr.rel (0) target = $region21
    $region20: #{tpu_custom_call.1} parent=1 // pred_region
      %s2244 = ssub.s32 128, 128
      %2245 = vsyncadd [#allocation4], %s2244
      %s2247 = sshll.u32 [#allocation3], 4
      %s2248 = int_to_ptr.vmem [resolvable:$true] %s2247
      %2250 = dma.vmem_to_hbm [thread:$0]  %s2248, 128, %s2, [#allocation4]
    $region21: #{tpu_custom_call.1} parent=1 // pred_fallthru
      _
    // Predicated region
    $region22: #{tpu_custom_call.1} parent=1 // pred_check
      _
    $region23: #{tpu_custom_call.1} parent=1 // pred_check_branch
      %2252 = sbr.rel (0) target = $region25
    $region24: #{tpu_custom_call.1} parent=1 // pred_region
      %2253 = dma.done [#allocation4], 128
    $region25: #{tpu_custom_call.1} parent=1 // pred_fallthru
      _
    %2254 = vsyncpa [#allocation4], 1

</llo_original>
